<compile_context>
chip_gen: v6e
topology: v6e:2x2x1
jax: 0.10.0
libtpu: 0.0.40
codegen_flags: <defaults>
</compile_context>

<pallas_src>
import math
from functools import partial

import numpy as np
import jax
import jax.numpy as jnp
from jax import lax
from jax.experimental import pallas as pl
from jax.experimental.pallas import tpu as pltpu

_F32 = jnp.float32
_BF16 = jnp.bfloat16
ROTATE = 10.0      # max rotation degrees
PATCH_SIZE = 16    # crop size (scaled down from 128 for small test shapes)

# static encoder config: (name, cin, cout, stride) -- stride MUST stay a Python int
_LAYERS = (("conv1", 3, 8, 2), ("layer1", 8, 8, 1), ("layer2", 8, 16, 2),
           ("layer3", 16, 16, 2), ("layer4", 16, 32, 1))


# ----------------------------- helpers -----------------------------

def _round_up(x, m):
    return ((x + m - 1) // m) * m


def _pad_to(x, axis, target):
    pad = target - x.shape[axis]
    if pad == 0:
        return x
    widths = [(0, 0)] * x.ndim
    widths[axis] = (0, pad)
    return jnp.pad(x, widths)


def _pick_tm(mp):
    # largest tile that divides Mp and yields >=2 grid steps (dual-TC on v7x)
    for t in (256, 128, 64, 32, 16, 8):
        if mp % t == 0 and mp // t >= 2:
            return t
    return mp


# ----------------------------- Pallas kernels -----------------------------

def _conv_gemm_kernel(a_ref, w_ref, s_ref, b_ref, o_ref):
    # im2col GEMM (bf16 operands, f32 accumulation) + fused BN(eval) scale/bias + ReLU,
    # stored as bf16 (activations carried in bf16 between layers).
    acc = jnp.dot(a_ref[...], w_ref[...], preferred_element_type=jnp.float32)
    o_ref[...] = jnp.maximum(acc * s_ref[...] + b_ref[...], 0.0).astype(o_ref.dtype)


def _grid_sample_kernel(samp_ref, img_ref, o_ref, *, C, Hin):
    # Separable bilinear sampling for one batch element / one output tile.
    #   samp_ref: [8, TO]  rows = (iy0, wy0, wy1, ix0, wx0, wx1, 0, 0)
    #   img_ref : [C*Hin, Win] f32
    #   o_ref   : [C, TO] f32
    s = samp_ref[...]
    TO = s.shape[1]
    Win = img_ref.shape[1]
    iy0 = s[0:1, :].astype(jnp.int32)
    wy0 = s[1:2, :]
    wy1 = s[2:3, :]
    ix0 = s[3:4, :].astype(jnp.int32)
    wx0 = s[4:5, :]
    wx1 = s[5:6, :]

    # Column one-hot RX [Win, TO]: OOB corners never match the iota -> zeros padding.
    iota_x = lax.broadcasted_iota(jnp.int32, (Win, TO), 0)
    rx = jnp.where(iota_x == ix0, wx0, 0.0) + jnp.where(iota_x == ix0 + 1, wx1, 0.0)
    # Row one-hot RY [Hin, TO].
    iota_y = lax.broadcasted_iota(jnp.int32, (Hin, TO), 0)
    ry = jnp.where(iota_y == iy0, wy0, 0.0) + jnp.where(iota_y == iy0 + 1, wy1, 0.0)

    # x-contraction on the MXU, y-contraction as a small VPU reduction.
    tmp = jnp.dot(img_ref[...], rx, preferred_element_type=jnp.float32)   # [C*Hin, TO]
    tmp = tmp.reshape(C, Hin, TO)
    o_ref[...] = jnp.sum(tmp * ry[None, :, :], axis=1)                    # [C, TO]


# ----------------------------- conv + bn + relu -----------------------------

def conv_bn_relu(x, w, s, b, oc, stride, pad):
    """NHWC conv2d(k=3) + folded BN(eval) + relu via tiled bf16 im2col GEMM in Pallas.

    x: [B, H, W, Cin] bf16 (NHWC); w: [9*Cin, oc] bf16; s, b: [1, oc] f32.
    Returns [B, OH, OW, oc] bf16.
    """
    B, H, W, Cin = x.shape
    KH = KW = 3
    xp = jnp.pad(x, ((0, 0), (pad, pad), (pad, pad), (0, 0)))
    Hp_, Wp_ = xp.shape[1], xp.shape[2]
    OH = (Hp_ - KH) // stride + 1
    OW = (Wp_ - KW) // stride + 1

    taps = []
    for i in range(KH):
        for j in range(KW):
            taps.append(xp[:, i:i + stride * (OH - 1) + 1:stride,
                               j:j + stride * (OW - 1) + 1:stride, :])
    # bf16 before concat; K stays unpadded (full-dim block in the kernel).
    patches = jnp.concatenate(taps, axis=-1).reshape(B * OH * OW, KH * KW * Cin)
    # TODO(synk): fold im2col fully into the kernel (9 shifted accumulating dots from the
    # NHWC VMEM block) to remove the 9x bf16 patch materialization entirely.

    M, K = patches.shape
    Mp = _round_up(M, 8)
    a = _pad_to(patches, 0, Mp)
    TM = _pick_tm(Mp)

    out = pl.pallas_call(
        _conv_gemm_kernel,
        out_shape=jax.ShapeDtypeStruct((Mp, oc), _BF16),
        grid=(Mp // TM,),
        in_specs=[
            pl.BlockSpec((TM, K), lambda i: (i, 0)),
            pl.BlockSpec((K, oc), lambda i: (0, 0)),
            pl.BlockSpec((1, oc), lambda i: (0, 0)),
            pl.BlockSpec((1, oc), lambda i: (0, 0)),
        ],
        out_specs=pl.BlockSpec((TM, oc), lambda i: (i, 0)),
        compiler_params=pltpu.CompilerParams(
            dimension_semantics=("parallel",)),
    )(a, w, s, b)
    if Mp != M:
        out = out[:M]
    return out.reshape(B, OH, OW, oc)       # stays NHWC bf16, no transpose / no re-pad


# ----------------------------- affine_grid / grid_sample -----------------------------

def affine_grid(theta, Ho, Wo):
    """F.affine_grid(theta, (B,C,Ho,Wo), align_corners=False)."""
    bx = (2.0 * jnp.arange(Wo, dtype=_F32) + 1.0) / Wo - 1.0
    by = (2.0 * jnp.arange(Ho, dtype=_F32) + 1.0) / Ho - 1.0
    gx = (theta[:, 0, 0][:, None, None] * bx[None, None, :]
          + theta[:, 0, 1][:, None, None] * by[None, :, None]
          + theta[:, 0, 2][:, None, None])
    gy = (theta[:, 1, 0][:, None, None] * bx[None, None, :]
          + theta[:, 1, 1][:, None, None] * by[None, :, None]
          + theta[:, 1, 2][:, None, None])
    return jnp.stack([gx, gy], axis=-1)                  # [B, Ho, Wo, 2]


def grid_sample(x, grid):
    """F.grid_sample(bilinear, zeros padding, align_corners=False) via a separable
    Pallas sampling kernel.  x: [B, C, Hin, Win]; grid: [B, Ho, Wo, 2] -> [B, C, Ho, Wo]."""
    B, C, Hin, Win = x.shape
    Ho, Wo = grid.shape[1], grid.shape[2]
    O = Ho * Wo

    gx = grid[..., 0].reshape(B, O)
    gy = grid[..., 1].reshape(B, O)
    ix = ((gx + 1.0) * Win - 1.0) / 2.0
    iy = ((gy + 1.0) * Hin - 1.0) / 2.0
    ix0 = jnp.floor(ix)
    iy0 = jnp.floor(iy)
    wx1 = ix - ix0
    wx0 = 1.0 - wx1
    wy1 = iy - iy0
    wy0 = 1.0 - wy1
    zeros = jnp.zeros_like(ix0)
    # One lane-dense packed (8, O) block per batch element (was 2 half-empty (4, O) blocks).
    samp = jnp.stack([iy0, wy0, wy1, ix0, wx0, wx1, zeros, zeros], axis=1).astype(_F32)

    TO = min(1024, _round_up(O, 128))
    Op = _round_up(O, TO)
    samp = _pad_to(samp, 2, Op)                          # padded cols have zero weights
    img = x.reshape(B, C * Hin, Win).astype(_F32)

    out = pl.pallas_call(
        partial(_grid_sample_kernel, C=C, Hin=Hin),
        out_shape=jax.ShapeDtypeStruct((B, C, Op), _F32),
        grid=(B, Op // TO),
        in_specs=[
            pl.BlockSpec((None, 8, TO), lambda b, t: (b, 0, t)),
            pl.BlockSpec((None, C * Hin, Win), lambda b, t: (b, 0, 0)),
        ],
        out_specs=pl.BlockSpec((None, C, TO), lambda b, t: (b, 0, t)),
        compiler_params=pltpu.CompilerParams(
            dimension_semantics=("parallel", "parallel"),
            vmem_limit_bytes=16 * 1024 * 1024),
    )(samp, img)
    # TODO(synk): the crop grid_sample is axis-aligned and could use a fully separable
    # (two tiny matmuls) window sampler over only the crop region at real resolutions.
    return out[:, :, :O].reshape(B, C, Ho, Wo)


# ----------------------------- synthetic encoder -----------------------------

def init_params(key):
    def bn_fold(ocn, idx):
        gamma = 1.0 + 0.05 * jnp.arange(ocn, dtype=_F32)
        beta = 0.01 * jnp.arange(ocn, dtype=_F32)
        mean = 0.02 * jnp.sin(jnp.arange(ocn, dtype=_F32) + idx)
        var = jnp.ones((ocn,), _F32)
        scale = gamma / jnp.sqrt(var + 1e-5)
        bias = beta - mean * scale
        return scale, bias

    ks = jax.random.split(key, len(_LAYERS))
    params = {}
    for i, (name, ic, ocn, _stride) in enumerate(_LAYERS):
        w = jax.random.normal(ks[i], (ocn, ic, 3, 3), _F32) / np.sqrt(ic * 9.0)
        # [OC, Cin, KH, KW] -> [KH*KW*Cin, OC] matching NHWC im2col tap-major column order
        wmat = w.transpose(2, 3, 1, 0).reshape(9 * ic, ocn)
        scale, bias = bn_fold(ocn, i)
        params[name] = dict(
            w=wmat.astype(_BF16),                        # unpadded K x oc, bf16
            scale=scale.reshape(1, ocn),
            bias=bias.reshape(1, ocn),
        )
    return params


def encoder_features(params, im_q_nchw):
    x = jnp.transpose(im_q_nchw, (0, 2, 3, 1)).astype(_BF16)   # NHWC + bf16 once at entry
    for name, _ic, ocn, stride in _LAYERS:                     # stride is a static Python int
        p = params[name]
        x = conv_bn_relu(x, p["w"], p["scale"], p["bias"], oc=ocn, stride=stride, pad=1)
        if name == "conv1":
            B, H, W, C = x.shape
            x = x.reshape(B, H // 2, 2, W // 2, 2, C).max(axis=(2, 4))   # maxpool /2
    feat4 = x.astype(_F32)                                # uselayer=4   [B,Hf,Wf,C4]
    feat_avg = jnp.mean(feat4, axis=(1, 2))               # uselayer='avgpool' [B,C4]
    return feat_avg, feat4


# ----------------------------- MoCo_Cycle forward -----------------------------

def self_attention(params, im_q):
    B, C, H, W = im_q.shape
    feat_q1, feat_q2 = encoder_features(params, im_q)
    f1n = feat_q1 / jnp.maximum(
        jnp.sqrt(jnp.sum(feat_q1 ** 2, axis=-1, keepdims=True)), 1e-12)
    f2n = feat_q2 / jnp.maximum(
        jnp.sqrt(jnp.sum(feat_q2 ** 2, axis=-1, keepdims=True)), 1e-12)
    # einsum('bc,bchw->bhw') as a VPU reduction (M=1 MXU matmul would be >95% padding)
    raw_sim = jnp.sum(f1n[:, None, None, :] * f2n, axis=-1)   # [B, Hf, Wf]
    sim = raw_sim - jnp.min(raw_sim)                          # global min/max, as in reference
    sim = sim / jnp.maximum(jnp.max(sim), 1e-12)              # eps guard vs constant raw_sim
    Hf, Wf = sim.shape[1], sim.shape[2]
    # F.interpolate(..., mode='nearest') to (H, W)
    hi = (jnp.arange(H) * Hf) // H
    wi = (jnp.arange(W) * Wf) // W
    att = sim[:, hi][:, :, wi]
    return att[:, None]                                       # [B, 1, H, W]


def att_rotate_crop_with_gt(first_frame, att_map, max_degree, crop_size, key):
    B, C, H, W = first_frame.shape
    H0, W0 = crop_size

    # meshgrid (torch.meshgrid 'ij'): channel 0 = h/H, channel 1 = w/W
    gh = jnp.arange(H, dtype=_F32) / H
    gw = jnp.arange(W, dtype=_F32) / W
    mg = jnp.stack([jnp.broadcast_to(gh[:, None], (H, W)),
                    jnp.broadcast_to(gw[None, :], (H, W))], axis=0)
    meshgrids = jnp.broadcast_to(mg[None], (B, 2, H, W))

    kf, kr = jax.random.split(key)

    # ---- batch_flip_att ----
    is_flip = jax.random.uniform(kf, (B, 1, 1, 1)) > 0.5
    first_frame = jnp.where(is_flip, first_frame[..., ::-1], first_frame)
    meshgrids = jnp.where(is_flip, meshgrids[..., ::-1], meshgrids)
    att_map = jnp.where(is_flip, att_map[..., ::-1], att_map)

    # ---- batch_random_rotate_att ----
    max_angle = max_degree * math.pi / 180.0
    angle = (jax.random.uniform(kr, (B,)) * 2.0 - 1.0) * max_angle
    zero1 = jnp.zeros_like(angle)
    theta_rot = jnp.stack([
        jnp.stack([jnp.cos(angle), -jnp.sin(angle), zero1], axis=1),
        jnp.stack([jnp.sin(angle), jnp.cos(angle), zero1], axis=1)], axis=1)   # [B,2,3]
    grid_rot = affine_grid(theta_rot, H, W)
    stacked = jnp.concatenate([first_frame, meshgrids, att_map], axis=1)       # [B,C+3,H,W]
    rot = grid_sample(stacked, grid_rot)
    rot_img, rot_grids, rot_att = rot[:, :C], rot[:, C:C + 2], rot[:, C + 2:C + 3]

    # ---- batch_random_crop_att ----
    max_h = jnp.max(rot_att[:, 0], axis=-1)                  # [B, H]
    ind_h = jnp.argmax(max_h, axis=-1)
    max_w = jnp.max(rot_att[:, 0], axis=-2)                  # [B, W]
    ind_w = jnp.argmax(max_w, axis=-1)
    ind_h = jnp.clip(ind_h, H0 // 2, H - (H0 - H0 // 2)).reshape(B, 1)
    ind_w = jnp.clip(ind_w, W0 // 2, W - (W0 - W0 // 2)).reshape(B, 1)
    x1 = (ind_w - W0 // 2).astype(_F32)
    y1 = (ind_h - H0 // 2).astype(_F32)
    x2 = x1 + W0
    y2 = y1 + H0
    zero2 = jnp.zeros_like(x1)
    theta_crop = jnp.concatenate([
        (x2 - x1) / (W - 1), zero2, (x1 + x2 - W + 1) / (W - 1),
        zero2, (y2 - y1) / (H - 1), (y1 + y2 - H + 1) / (H - 1)], axis=1).reshape(B, 2, 3)
    grid_crop = affine_grid(theta_crop, H0, W0)
    stacked2 = jnp.concatenate([rot_img, rot_grids], axis=1)  # [B,C+2,H,W]
    cropped = grid_sample(stacked2, grid_crop)
    crop, crop_grids = cropped[:, :C], cropped[:, C:]

    scale = jnp.array([H, W], dtype=_F32).reshape(1, 2, 1, 1)
    crop_gt = (crop_grids * scale).transpose(0, 2, 3, 1)[..., ::-1]   # [B,H0,W0,2]
    return crop, crop_gt


def moco_cycle_forward(params, im_q, key):
    att_map = self_attention(params, im_q)
    return att_rotate_crop_with_gt(im_q, att_map, ROTATE,
                                   (PATCH_SIZE, PATCH_SIZE), key)


# ----------------------------- main -----------------------------

if __name__ == "__main__":
    key = jax.random.PRNGKey(0)
    kx, kp, ka = jax.random.split(key, 3)
    im_q = jax.random.normal(kx, (2, 3, 32, 32), _F32)   # [B, C, H, W]
    params = init_params(kp)

    fwd = jax.jit(moco_cycle_forward)
    crop, crop_gt = fwd(params, im_q, ka)
    jax.block_until_ready((crop, crop_gt))

    assert crop.shape == (2, 3, PATCH_SIZE, PATCH_SIZE)
    assert crop_gt.shape == (2, PATCH_SIZE, PATCH_SIZE, 2)
    assert bool(jnp.all(jnp.isfinite(crop))) and bool(jnp.all(jnp.isfinite(crop_gt)))
    print("KERNEL_OK")
</pallas_src>

<mosaic_0001>
module attributes {stable_mosaic.version = 11 : i64} {
  func.func @_conv_gemm_kernel(%arg0: i32, %arg1: memref<256x27xbf16, #tpu.memory_space<vmem>>, %arg2: memref<27x8xbf16, #tpu.memory_space<vmem>>, %arg3: memref<1x8xf32, #tpu.memory_space<vmem>>, %arg4: memref<1x8xf32, #tpu.memory_space<vmem>>, %arg5: memref<256x8xbf16, #tpu.memory_space<vmem>>) attributes {dimension_semantics = [#tpu.dimension_semantics<parallel>], iteration_bounds = array<i64: 2>, scalar_prefetch = 0 : i64, scratch_operands = 0 : i64, tpu.core_type = #tpu.core_type<tc>, window_params = [{transform_indices = @transform_0, window_bounds = array<i64: 256, 27>}, {pipeline_mode = #tpu.pipeline_mode<synchronous>, transform_indices = @transform_1, window_bounds = array<i64: 27, 8>}, {pipeline_mode = #tpu.pipeline_mode<synchronous>, transform_indices = @transform_2, window_bounds = array<i64: 1, 8>}, {pipeline_mode = #tpu.pipeline_mode<synchronous>, transform_indices = @transform_3, window_bounds = array<i64: 1, 8>}, {transform_indices = @transform_4, window_bounds = array<i64: 256, 8>}]} {
    %c0 = arith.constant 0 : index
    %c0_0 = arith.constant 0 : index
    %0 = vector.load %arg1[%c0, %c0_0] : memref<256x27xbf16, #tpu.memory_space<vmem>>, vector<256x27xbf16>
    %c0_1 = arith.constant 0 : index
    %c0_2 = arith.constant 0 : index
    %1 = vector.load %arg2[%c0_1, %c0_2] : memref<27x8xbf16, #tpu.memory_space<vmem>>, vector<27x8xbf16>
    %cst = arith.constant dense<0.000000e+00> : vector<256x8xf32>
    %2 = tpu.matmul %0, %1, %cst {dimension_numbers = #tpu.dot_dimension_numbers<[1], [0], [0], [1], [0, 0, 1, 1], [], []>} : vector<256x27xbf16>, vector<27x8xbf16>, vector<256x8xf32> -> vector<256x8xf32>
    %c0_3 = arith.constant 0 : index
    %c0_4 = arith.constant 0 : index
    %3 = vector.load %arg3[%c0_3, %c0_4] : memref<1x8xf32, #tpu.memory_space<vmem>>, vector<1x8xf32>
    %4 = vector.broadcast %3 : vector<1x8xf32> to vector<256x8xf32>
    %5 = arith.mulf %2, %4 : vector<256x8xf32>
    %c0_5 = arith.constant 0 : index
    %c0_6 = arith.constant 0 : index
    %6 = vector.load %arg4[%c0_5, %c0_6] : memref<1x8xf32, #tpu.memory_space<vmem>>, vector<1x8xf32>
    %7 = vector.broadcast %6 : vector<1x8xf32> to vector<256x8xf32>
    %8 = arith.addf %5, %7 : vector<256x8xf32>
    %cst_7 = arith.constant 0.000000e+00 : f32
    %9 = vector.broadcast %cst_7 : f32 to vector<256x8xf32>
    %10 = arith.maximumf %8, %9 : vector<256x8xf32>
    %11 = arith.truncf %10 : vector<256x8xf32> to vector<256x8xbf16>
    %c0_8 = arith.constant 0 : index
    %c0_9 = arith.constant 0 : index
    %12 = vector.load %arg5[%c0_8, %c0_9] : memref<256x8xbf16, #tpu.memory_space<vmem>>, vector<256x8xbf16>
    tpu.vector_store %arg5[%c0_8, %c0_9], %11 {strides = array<i32>} : memref<256x8xbf16, #tpu.memory_space<vmem>>, vector<256x8xbf16>,
    return
  }
  func.func @transform_0(%arg0: i32) -> (i32, i32) {
    %c0_i32 = arith.constant 0 : i32
    %c0_i32_0 = arith.constant 0 : i32
    return %arg0, %c0_i32 : i32, i32
  }
  func.func @transform_1(%arg0: i32) -> (i32, i32) {
    %c0_i32 = arith.constant 0 : i32
    %c0_i32_0 = arith.constant 0 : i32
    %c0_i32_1 = arith.constant 0 : i32
    return %c0_i32, %c0_i32_0 : i32, i32
  }
  func.func @transform_2(%arg0: i32) -> (i32, i32) {
    %c0_i32 = arith.constant 0 : i32
    %c0_i32_0 = arith.constant 0 : i32
    %c0_i32_1 = arith.constant 0 : i32
    return %c0_i32, %c0_i32_0 : i32, i32
  }
  func.func @transform_3(%arg0: i32) -> (i32, i32) {
    %c0_i32 = arith.constant 0 : i32
    %c0_i32_0 = arith.constant 0 : i32
    %c0_i32_1 = arith.constant 0 : i32
    return %c0_i32, %c0_i32_0 : i32, i32
  }
  func.func @transform_4(%arg0: i32) -> (i32, i32) {
    %c0_i32 = arith.constant 0 : i32
    %c0_i32_0 = arith.constant 0 : i32
    return %arg0, %c0_i32 : i32, i32
  }
}

module attributes {stable_mosaic.version = 11 : i64} {
  func.func @_conv_gemm_kernel(%arg0: i32, %arg1: memref<64x72xbf16, #tpu.memory_space<vmem>>, %arg2: memref<72x8xbf16, #tpu.memory_space<vmem>>, %arg3: memref<1x8xf32, #tpu.memory_space<vmem>>, %arg4: memref<1x8xf32, #tpu.memory_space<vmem>>, %arg5: memref<64x8xbf16, #tpu.memory_space<vmem>>) attributes {dimension_semantics = [#tpu.dimension_semantics<parallel>], iteration_bounds = array<i64: 2>, scalar_prefetch = 0 : i64, scratch_operands = 0 : i64, tpu.core_type = #tpu.core_type<tc>, window_params = [{transform_indices = @transform_0, window_bounds = array<i64: 64, 72>}, {pipeline_mode = #tpu.pipeline_mode<synchronous>, transform_indices = @transform_1, window_bounds = array<i64: 72, 8>}, {pipeline_mode = #tpu.pipeline_mode<synchronous>, transform_indices = @transform_2, window_bounds = array<i64: 1, 8>}, {pipeline_mode = #tpu.pipeline_mode<synchronous>, transform_indices = @transform_3, window_bounds = array<i64: 1, 8>}, {transform_indices = @transform_4, window_bounds = array<i64: 64, 8>}]} {
    %c0 = arith.constant 0 : index
    %c0_0 = arith.constant 0 : index
    %0 = vector.load %arg1[%c0, %c0_0] : memref<64x72xbf16, #tpu.memory_space<vmem>>, vector<64x72xbf16>
    %c0_1 = arith.constant 0 : index
    %c0_2 = arith.constant 0 : index
    %1 = vector.load %arg2[%c0_1, %c0_2] : memref<72x8xbf16, #tpu.memory_space<vmem>>, vector<72x8xbf16>
    %cst = arith.constant dense<0.000000e+00> : vector<64x8xf32>
    %2 = tpu.matmul %0, %1, %cst {dimension_numbers = #tpu.dot_dimension_numbers<[1], [0], [0], [1], [0, 0, 1, 1], [], []>} : vector<64x72xbf16>, vector<72x8xbf16>, vector<64x8xf32> -> vector<64x8xf32>
    %c0_3 = arith.constant 0 : index
    %c0_4 = arith.constant 0 : index
    %3 = vector.load %arg3[%c0_3, %c0_4] : memref<1x8xf32, #tpu.memory_space<vmem>>, vector<1x8xf32>
    %4 = vector.broadcast %3 : vector<1x8xf32> to vector<64x8xf32>
    %5 = arith.mulf %2, %4 : vector<64x8xf32>
    %c0_5 = arith.constant 0 : index
    %c0_6 = arith.constant 0 : index
    %6 = vector.load %arg4[%c0_5, %c0_6] : memref<1x8xf32, #tpu.memory_space<vmem>>, vector<1x8xf32>
    %7 = vector.broadcast %6 : vector<1x8xf32> to vector<64x8xf32>
    %8 = arith.addf %5, %7 : vector<64x8xf32>
    %cst_7 = arith.constant 0.000000e+00 : f32
    %9 = vector.broadcast %cst_7 : f32 to vector<64x8xf32>
    %10 = arith.maximumf %8, %9 : vector<64x8xf32>
    %11 = arith.truncf %10 : vector<64x8xf32> to vector<64x8xbf16>
    %c0_8 = arith.constant 0 : index
    %c0_9 = arith.constant 0 : index
    %12 = vector.load %arg5[%c0_8, %c0_9] : memref<64x8xbf16, #tpu.memory_space<vmem>>, vector<64x8xbf16>
    tpu.vector_store %arg5[%c0_8, %c0_9], %11 {strides = array<i32>} : memref<64x8xbf16, #tpu.memory_space<vmem>>, vector<64x8xbf16>,
    return
  }
  func.func @transform_0(%arg0: i32) -> (i32, i32) {
    %c0_i32 = arith.constant 0 : i32
    %c0_i32_0 = arith.constant 0 : i32
    return %arg0, %c0_i32 : i32, i32
  }
  func.func @transform_1(%arg0: i32) -> (i32, i32) {
    %c0_i32 = arith.constant 0 : i32
    %c0_i32_0 = arith.constant 0 : i32
    %c0_i32_1 = arith.constant 0 : i32
    return %c0_i32, %c0_i32_0 : i32, i32
  }
  func.func @transform_2(%arg0: i32) -> (i32, i32) {
    %c0_i32 = arith.constant 0 : i32
    %c0_i32_0 = arith.constant 0 : i32
    %c0_i32_1 = arith.constant 0 : i32
    return %c0_i32, %c0_i32_0 : i32, i32
  }
  func.func @transform_3(%arg0: i32) -> (i32, i32) {
    %c0_i32 = arith.constant 0 : i32
    %c0_i32_0 = arith.constant 0 : i32
    %c0_i32_1 = arith.constant 0 : i32
    return %c0_i32, %c0_i32_0 : i32, i32
  }
  func.func @transform_4(%arg0: i32) -> (i32, i32) {
    %c0_i32 = arith.constant 0 : i32
    %c0_i32_0 = arith.constant 0 : i32
    return %arg0, %c0_i32 : i32, i32
  }
}

module attributes {stable_mosaic.version = 11 : i64} {
  func.func @_conv_gemm_kernel(%arg0: i32, %arg1: memref<16x72xbf16, #tpu.memory_space<vmem>>, %arg2: memref<72x16xbf16, #tpu.memory_space<vmem>>, %arg3: memref<1x16xf32, #tpu.memory_space<vmem>>, %arg4: memref<1x16xf32, #tpu.memory_space<vmem>>, %arg5: memref<16x16xbf16, #tpu.memory_space<vmem>>) attributes {dimension_semantics = [#tpu.dimension_semantics<parallel>], iteration_bounds = array<i64: 2>, scalar_prefetch = 0 : i64, scratch_operands = 0 : i64, tpu.core_type = #tpu.core_type<tc>, window_params = [{transform_indices = @transform_0, window_bounds = array<i64: 16, 72>}, {pipeline_mode = #tpu.pipeline_mode<synchronous>, transform_indices = @transform_1, window_bounds = array<i64: 72, 16>}, {pipeline_mode = #tpu.pipeline_mode<synchronous>, transform_indices = @transform_2, window_bounds = array<i64: 1, 16>}, {pipeline_mode = #tpu.pipeline_mode<synchronous>, transform_indices = @transform_3, window_bounds = array<i64: 1, 16>}, {transform_indices = @transform_4, window_bounds = array<i64: 16, 16>}]} {
    %c0 = arith.constant 0 : index
    %c0_0 = arith.constant 0 : index
    %0 = vector.load %arg1[%c0, %c0_0] : memref<16x72xbf16, #tpu.memory_space<vmem>>, vector<16x72xbf16>
    %c0_1 = arith.constant 0 : index
    %c0_2 = arith.constant 0 : index
    %1 = vector.load %arg2[%c0_1, %c0_2] : memref<72x16xbf16, #tpu.memory_space<vmem>>, vector<72x16xbf16>
    %cst = arith.constant dense<0.000000e+00> : vector<16x16xf32>
    %2 = tpu.matmul %0, %1, %cst {dimension_numbers = #tpu.dot_dimension_numbers<[1], [0], [0], [1], [0, 0, 1, 1], [], []>} : vector<16x72xbf16>, vector<72x16xbf16>, vector<16x16xf32> -> vector<16x16xf32>
    %c0_3 = arith.constant 0 : index
    %c0_4 = arith.constant 0 : index
    %3 = vector.load %arg3[%c0_3, %c0_4] : memref<1x16xf32, #tpu.memory_space<vmem>>, vector<1x16xf32>
    %4 = vector.broadcast %3 : vector<1x16xf32> to vector<16x16xf32>
    %5 = arith.mulf %2, %4 : vector<16x16xf32>
    %c0_5 = arith.constant 0 : index
    %c0_6 = arith.constant 0 : index
    %6 = vector.load %arg4[%c0_5, %c0_6] : memref<1x16xf32, #tpu.memory_space<vmem>>, vector<1x16xf32>
    %7 = vector.broadcast %6 : vector<1x16xf32> to vector<16x16xf32>
    %8 = arith.addf %5, %7 : vector<16x16xf32>
    %cst_7 = arith.constant 0.000000e+00 : f32
    %9 = vector.broadcast %cst_7 : f32 to vector<16x16xf32>
    %10 = arith.maximumf %8, %9 : vector<16x16xf32>
    %11 = arith.truncf %10 : vector<16x16xf32> to vector<16x16xbf16>
    %c0_8 = arith.constant 0 : index
    %c0_9 = arith.constant 0 : index
    %12 = vector.load %arg5[%c0_8, %c0_9] : memref<16x16xbf16, #tpu.memory_space<vmem>>, vector<16x16xbf16>
    tpu.vector_store %arg5[%c0_8, %c0_9], %11 {strides = array<i32>} : memref<16x16xbf16, #tpu.memory_space<vmem>>, vector<16x16xbf16>,
    return
  }
  func.func @transform_0(%arg0: i32) -> (i32, i32) {
    %c0_i32 = arith.constant 0 : i32
    %c0_i32_0 = arith.constant 0 : i32
    return %arg0, %c0_i32 : i32, i32
  }
  func.func @transform_1(%arg0: i32) -> (i32, i32) {
    %c0_i32 = arith.constant 0 : i32
    %c0_i32_0 = arith.constant 0 : i32
    %c0_i32_1 = arith.constant 0 : i32
    return %c0_i32, %c0_i32_0 : i32, i32
  }
  func.func @transform_2(%arg0: i32) -> (i32, i32) {
    %c0_i32 = arith.constant 0 : i32
    %c0_i32_0 = arith.constant 0 : i32
    %c0_i32_1 = arith.constant 0 : i32
    return %c0_i32, %c0_i32_0 : i32, i32
  }
  func.func @transform_3(%arg0: i32) -> (i32, i32) {
    %c0_i32 = arith.constant 0 : i32
    %c0_i32_0 = arith.constant 0 : i32
    %c0_i32_1 = arith.constant 0 : i32
    return %c0_i32, %c0_i32_0 : i32, i32
  }
  func.func @transform_4(%arg0: i32) -> (i32, i32) {
    %c0_i32 = arith.constant 0 : i32
    %c0_i32_0 = arith.constant 0 : i32
    return %arg0, %c0_i32 : i32, i32
  }
}

module attributes {stable_mosaic.version = 11 : i64} {
  func.func @_conv_gemm_kernel(%arg0: i32, %arg1: memref<8x144xbf16, #tpu.memory_space<vmem>>, %arg2: memref<144x16xbf16, #tpu.memory_space<vmem>>, %arg3: memref<1x16xf32, #tpu.memory_space<vmem>>, %arg4: memref<1x16xf32, #tpu.memory_space<vmem>>, %arg5: memref<8x16xbf16, #tpu.memory_space<vmem>>) attributes {dimension_semantics = [#tpu.dimension_semantics<parallel>], iteration_bounds = array<i64: 1>, scalar_prefetch = 0 : i64, scratch_operands = 0 : i64, tpu.core_type = #tpu.core_type<tc>, window_params = [{transform_indices = @transform_0, window_bounds = array<i64: 8, 144>}, {pipeline_mode = #tpu.pipeline_mode<synchronous>, transform_indices = @transform_1, window_bounds = array<i64: 144, 16>}, {pipeline_mode = #tpu.pipeline_mode<synchronous>, transform_indices = @transform_2, window_bounds = array<i64: 1, 16>}, {pipeline_mode = #tpu.pipeline_mode<synchronous>, transform_indices = @transform_3, window_bounds = array<i64: 1, 16>}, {transform_indices = @transform_4, window_bounds = array<i64: 8, 16>}]} {
    %c0 = arith.constant 0 : index
    %c0_0 = arith.constant 0 : index
    %0 = vector.load %arg1[%c0, %c0_0] : memref<8x144xbf16, #tpu.memory_space<vmem>>, vector<8x144xbf16>
    %c0_1 = arith.constant 0 : index
    %c0_2 = arith.constant 0 : index
    %1 = vector.load %arg2[%c0_1, %c0_2] : memref<144x16xbf16, #tpu.memory_space<vmem>>, vector<144x16xbf16>
    %cst = arith.constant dense<0.000000e+00> : vector<8x16xf32>
    %2 = tpu.matmul %0, %1, %cst {dimension_numbers = #tpu.dot_dimension_numbers<[1], [0], [0], [1], [0, 0, 1, 1], [], []>} : vector<8x144xbf16>, vector<144x16xbf16>, vector<8x16xf32> -> vector<8x16xf32>
    %c0_3 = arith.constant 0 : index
    %c0_4 = arith.constant 0 : index
    %3 = vector.load %arg3[%c0_3, %c0_4] : memref<1x16xf32, #tpu.memory_space<vmem>>, vector<1x16xf32>
    %4 = vector.broadcast %3 : vector<1x16xf32> to vector<8x16xf32>
    %5 = arith.mulf %2, %4 : vector<8x16xf32>
    %c0_5 = arith.constant 0 : index
    %c0_6 = arith.constant 0 : index
    %6 = vector.load %arg4[%c0_5, %c0_6] : memref<1x16xf32, #tpu.memory_space<vmem>>, vector<1x16xf32>
    %7 = vector.broadcast %6 : vector<1x16xf32> to vector<8x16xf32>
    %8 = arith.addf %5, %7 : vector<8x16xf32>
    %cst_7 = arith.constant 0.000000e+00 : f32
    %9 = vector.broadcast %cst_7 : f32 to vector<8x16xf32>
    %10 = arith.maximumf %8, %9 : vector<8x16xf32>
    %11 = arith.truncf %10 : vector<8x16xf32> to vector<8x16xbf16>
    %c0_8 = arith.constant 0 : index
    %c0_9 = arith.constant 0 : index
    %12 = vector.load %arg5[%c0_8, %c0_9] : memref<8x16xbf16, #tpu.memory_space<vmem>>, vector<8x16xbf16>
    tpu.vector_store %arg5[%c0_8, %c0_9], %11 {strides = array<i32>} : memref<8x16xbf16, #tpu.memory_space<vmem>>, vector<8x16xbf16>,
    return
  }
  func.func @transform_0(%arg0: i32) -> (i32, i32) {
    %c0_i32 = arith.constant 0 : i32
    %c0_i32_0 = arith.constant 0 : i32
    return %arg0, %c0_i32 : i32, i32
  }
  func.func @transform_1(%arg0: i32) -> (i32, i32) {
    %c0_i32 = arith.constant 0 : i32
    %c0_i32_0 = arith.constant 0 : i32
    %c0_i32_1 = arith.constant 0 : i32
    return %c0_i32, %c0_i32_0 : i32, i32
  }
  func.func @transform_2(%arg0: i32) -> (i32, i32) {
    %c0_i32 = arith.constant 0 : i32
    %c0_i32_0 = arith.constant 0 : i32
    %c0_i32_1 = arith.constant 0 : i32
    return %c0_i32, %c0_i32_0 : i32, i32
  }
  func.func @transform_3(%arg0: i32) -> (i32, i32) {
    %c0_i32 = arith.constant 0 : i32
    %c0_i32_0 = arith.constant 0 : i32
    %c0_i32_1 = arith.constant 0 : i32
    return %c0_i32, %c0_i32_0 : i32, i32
  }
  func.func @transform_4(%arg0: i32) -> (i32, i32) {
    %c0_i32 = arith.constant 0 : i32
    %c0_i32_0 = arith.constant 0 : i32
    return %arg0, %c0_i32 : i32, i32
  }
}

module attributes {stable_mosaic.version = 11 : i64} {
  func.func @_conv_gemm_kernel(%arg0: i32, %arg1: memref<8x144xbf16, #tpu.memory_space<vmem>>, %arg2: memref<144x32xbf16, #tpu.memory_space<vmem>>, %arg3: memref<1x32xf32, #tpu.memory_space<vmem>>, %arg4: memref<1x32xf32, #tpu.memory_space<vmem>>, %arg5: memref<8x32xbf16, #tpu.memory_space<vmem>>) attributes {dimension_semantics = [#tpu.dimension_semantics<parallel>], iteration_bounds = array<i64: 1>, scalar_prefetch = 0 : i64, scratch_operands = 0 : i64, tpu.core_type = #tpu.core_type<tc>, window_params = [{transform_indices = @transform_0, window_bounds = array<i64: 8, 144>}, {pipeline_mode = #tpu.pipeline_mode<synchronous>, transform_indices = @transform_1, window_bounds = array<i64: 144, 32>}, {pipeline_mode = #tpu.pipeline_mode<synchronous>, transform_indices = @transform_2, window_bounds = array<i64: 1, 32>}, {pipeline_mode = #tpu.pipeline_mode<synchronous>, transform_indices = @transform_3, window_bounds = array<i64: 1, 32>}, {transform_indices = @transform_4, window_bounds = array<i64: 8, 32>}]} {
    %c0 = arith.constant 0 : index
    %c0_0 = arith.constant 0 : index
    %0 = vector.load %arg1[%c0, %c0_0] : memref<8x144xbf16, #tpu.memory_space<vmem>>, vector<8x144xbf16>
    %c0_1 = arith.constant 0 : index
    %c0_2 = arith.constant 0 : index
    %1 = vector.load %arg2[%c0_1, %c0_2] : memref<144x32xbf16, #tpu.memory_space<vmem>>, vector<144x32xbf16>
    %cst = arith.constant dense<0.000000e+00> : vector<8x32xf32>
    %2 = tpu.matmul %0, %1, %cst {dimension_numbers = #tpu.dot_dimension_numbers<[1], [0], [0], [1], [0, 0, 1, 1], [], []>} : vector<8x144xbf16>, vector<144x32xbf16>, vector<8x32xf32> -> vector<8x32xf32>
    %c0_3 = arith.constant 0 : index
    %c0_4 = arith.constant 0 : index
    %3 = vector.load %arg3[%c0_3, %c0_4] : memref<1x32xf32, #tpu.memory_space<vmem>>, vector<1x32xf32>
    %4 = vector.broadcast %3 : vector<1x32xf32> to vector<8x32xf32>
    %5 = arith.mulf %2, %4 : vector<8x32xf32>
    %c0_5 = arith.constant 0 : index
    %c0_6 = arith.constant 0 : index
    %6 = vector.load %arg4[%c0_5, %c0_6] : memref<1x32xf32, #tpu.memory_space<vmem>>, vector<1x32xf32>
    %7 = vector.broadcast %6 : vector<1x32xf32> to vector<8x32xf32>
    %8 = arith.addf %5, %7 : vector<8x32xf32>
    %cst_7 = arith.constant 0.000000e+00 : f32
    %9 = vector.broadcast %cst_7 : f32 to vector<8x32xf32>
    %10 = arith.maximumf %8, %9 : vector<8x32xf32>
    %11 = arith.truncf %10 : vector<8x32xf32> to vector<8x32xbf16>
    %c0_8 = arith.constant 0 : index
    %c0_9 = arith.constant 0 : index
    %12 = vector.load %arg5[%c0_8, %c0_9] : memref<8x32xbf16, #tpu.memory_space<vmem>>, vector<8x32xbf16>
    tpu.vector_store %arg5[%c0_8, %c0_9], %11 {strides = array<i32>} : memref<8x32xbf16, #tpu.memory_space<vmem>>, vector<8x32xbf16>,
    return
  }
  func.func @transform_0(%arg0: i32) -> (i32, i32) {
    %c0_i32 = arith.constant 0 : i32
    %c0_i32_0 = arith.constant 0 : i32
    return %arg0, %c0_i32 : i32, i32
  }
  func.func @transform_1(%arg0: i32) -> (i32, i32) {
    %c0_i32 = arith.constant 0 : i32
    %c0_i32_0 = arith.constant 0 : i32
    %c0_i32_1 = arith.constant 0 : i32
    return %c0_i32, %c0_i32_0 : i32, i32
  }
  func.func @transform_2(%arg0: i32) -> (i32, i32) {
    %c0_i32 = arith.constant 0 : i32
    %c0_i32_0 = arith.constant 0 : i32
    %c0_i32_1 = arith.constant 0 : i32
    return %c0_i32, %c0_i32_0 : i32, i32
  }
  func.func @transform_3(%arg0: i32) -> (i32, i32) {
    %c0_i32 = arith.constant 0 : i32
    %c0_i32_0 = arith.constant 0 : i32
    %c0_i32_1 = arith.constant 0 : i32
    return %c0_i32, %c0_i32_0 : i32, i32
  }
  func.func @transform_4(%arg0: i32) -> (i32, i32) {
    %c0_i32 = arith.constant 0 : i32
    %c0_i32_0 = arith.constant 0 : i32
    return %arg0, %c0_i32 : i32, i32
  }
}

module attributes {stable_mosaic.version = 11 : i64} {
  func.func @_grid_sample_kernel(%arg0: i32, %arg1: i32, %arg2: memref<1x8x1024xf32, #tpu.memory_space<vmem>>, %arg3: memref<1x192x32xf32, #tpu.memory_space<vmem>>, %arg4: memref<1x6x1024xf32, #tpu.memory_space<vmem>>) attributes {dimension_semantics = [#tpu.dimension_semantics<parallel>, #tpu.dimension_semantics<parallel>], iteration_bounds = array<i64: 2, 1>, scalar_prefetch = 0 : i64, scratch_operands = 0 : i64, tpu.core_type = #tpu.core_type<tc>, window_params = [{transform_indices = @transform_0, window_bounds = array<i64: 1, 8, 1024>}, {transform_indices = @transform_1, window_bounds = array<i64: 1, 192, 32>}, {transform_indices = @transform_2, window_bounds = array<i64: 1, 6, 1024>}]} {
    %c0 = arith.constant 0 : index
    %c0_0 = arith.constant 0 : index
    %c0_1 = arith.constant 0 : index
    %0 = vector.load %arg2[%c0, %c0_0, %c0_1] : memref<1x8x1024xf32, #tpu.memory_space<vmem>>, vector<1x8x1024xf32>
    %1 = vector.shape_cast %0 : vector<1x8x1024xf32> to vector<8x1024xf32>
    %2 = vector.extract_strided_slice %1 {offsets = [0, 0], sizes = [1, 1024], strides = [1, 1]} : vector<8x1024xf32> to vector<1x1024xf32>
    %3 = arith.fptosi %2 : vector<1x1024xf32> to vector<1x1024xi32>
    %4 = vector.extract_strided_slice %1 {offsets = [1, 0], sizes = [1, 1024], strides = [1, 1]} : vector<8x1024xf32> to vector<1x1024xf32>
    %5 = vector.extract_strided_slice %1 {offsets = [2, 0], sizes = [1, 1024], strides = [1, 1]} : vector<8x1024xf32> to vector<1x1024xf32>
    %6 = vector.extract_strided_slice %1 {offsets = [3, 0], sizes = [1, 1024], strides = [1, 1]} : vector<8x1024xf32> to vector<1x1024xf32>
    %7 = arith.fptosi %6 : vector<1x1024xf32> to vector<1x1024xi32>
    %8 = vector.extract_strided_slice %1 {offsets = [4, 0], sizes = [1, 1024], strides = [1, 1]} : vector<8x1024xf32> to vector<1x1024xf32>
    %9 = vector.extract_strided_slice %1 {offsets = [5, 0], sizes = [1, 1024], strides = [1, 1]} : vector<8x1024xf32> to vector<1x1024xf32>
    %10 = tpu.iota {dimensions = array<i32: 0>} : vector<32x1024xi32>
    %11 = vector.broadcast %7 : vector<1x1024xi32> to vector<32x1024xi32>
    %12 = arith.cmpi eq, %10, %11 : vector<32x1024xi32>
    %cst = arith.constant 0.000000e+00 : f32
    %13 = vector.shape_cast %8 : vector<1x1024xf32> to vector<1x1024xf32>
    %14 = vector.broadcast %13 : vector<1x1024xf32> to vector<32x1024xf32>
    %15 = vector.broadcast %cst : f32 to vector<32x1024xf32>
    %16 = arith.select %12, %14, %15 : vector<32x1024xi1>, vector<32x1024xf32>
    %c1_i32 = arith.constant 1 : i32
    %17 = vector.broadcast %c1_i32 : i32 to vector<1x1024xi32>
    %18 = arith.addi %7, %17 : vector<1x1024xi32>
    %19 = vector.broadcast %18 : vector<1x1024xi32> to vector<32x1024xi32>
    %20 = arith.cmpi eq, %10, %19 : vector<32x1024xi32>
    %cst_2 = arith.constant 0.000000e+00 : f32
    %21 = vector.shape_cast %9 : vector<1x1024xf32> to vector<1x1024xf32>
    %22 = vector.broadcast %21 : vector<1x1024xf32> to vector<32x1024xf32>
    %23 = vector.broadcast %cst_2 : f32 to vector<32x1024xf32>
    %24 = arith.select %20, %22, %23 : vector<32x1024xi1>, vector<32x1024xf32>
    %25 = arith.addf %16, %24 : vector<32x1024xf32>
    %26 = tpu.iota {dimensions = array<i32: 0>} : vector<32x1024xi32>
    %27 = vector.broadcast %3 : vector<1x1024xi32> to vector<32x1024xi32>
    %28 = arith.cmpi eq, %26, %27 : vector<32x1024xi32>
    %cst_3 = arith.constant 0.000000e+00 : f32
    %29 = vector.shape_cast %4 : vector<1x1024xf32> to vector<1x1024xf32>
    %30 = vector.broadcast %29 : vector<1x1024xf32> to vector<32x1024xf32>
    %31 = vector.broadcast %cst_3 : f32 to vector<32x1024xf32>
    %32 = arith.select %28, %30, %31 : vector<32x1024xi1>, vector<32x1024xf32>
    %c1_i32_4 = arith.constant 1 : i32
    %33 = vector.broadcast %c1_i32_4 : i32 to vector<1x1024xi32>
    %34 = arith.addi %3, %33 : vector<1x1024xi32>
    %35 = vector.broadcast %34 : vector<1x1024xi32> to vector<32x1024xi32>
    %36 = arith.cmpi eq, %26, %35 : vector<32x1024xi32>
    %cst_5 = arith.constant 0.000000e+00 : f32
    %37 = vector.shape_cast %5 : vector<1x1024xf32> to vector<1x1024xf32>
    %38 = vector.broadcast %37 : vector<1x1024xf32> to vector<32x1024xf32>
    %39 = vector.broadcast %cst_5 : f32 to vector<32x1024xf32>
    %40 = arith.select %36, %38, %39 : vector<32x1024xi1>, vector<32x1024xf32>
    %41 = arith.addf %32, %40 : vector<32x1024xf32>
    %c0_6 = arith.constant 0 : index
    %c0_7 = arith.constant 0 : index
    %c0_8 = arith.constant 0 : index
    %42 = vector.load %arg3[%c0_6, %c0_7, %c0_8] : memref<1x192x32xf32, #tpu.memory_space<vmem>>, vector<1x192x32xf32>
    %43 = vector.shape_cast %42 : vector<1x192x32xf32> to vector<192x32xf32>
    %cst_9 = arith.constant dense<0.000000e+00> : vector<192x1024xf32>
    %44 = tpu.matmul %43, %25, %cst_9 {dimension_numbers = #tpu.dot_dimension_numbers<[1], [0], [0], [1], [0, 0, 1, 1], [], []>} : vector<192x32xf32>, vector<32x1024xf32>, vector<192x1024xf32> -> vector<192x1024xf32>
    %45 = vector.shape_cast %44 : vector<192x1024xf32> to vector<6x32x1024xf32>
    %46 = vector.shape_cast %41 : vector<32x1024xf32> to vector<1x32x1024xf32>
    %47 = vector.broadcast %46 : vector<1x32x1024xf32> to vector<6x32x1024xf32>
    %48 = arith.mulf %45, %47 : vector<6x32x1024xf32>
    %cst_10 = arith.constant dense<0.000000e+00> : vector<6x1024xf32>
    %49 = vector.multi_reduction <add>, %48, %cst_10 [1] : vector<6x32x1024xf32> to vector<6x1024xf32>
    %c0_11 = arith.constant 0 : index
    %c0_12 = arith.constant 0 : index
    %c0_13 = arith.constant 0 : index
    %50 = vector.load %arg4[%c0_11, %c0_12, %c0_13] : memref<1x6x1024xf32, #tpu.memory_space<vmem>>, vector<1x6x1024xf32>
    %51 = vector.shape_cast %50 : vector<1x6x1024xf32> to vector<6x1024xf32>
    %52 = vector.shape_cast %49 : vector<6x1024xf32> to vector<1x6x1024xf32>
    tpu.vector_store %arg4[%c0_11, %c0_12, %c0_13], %52 {strides = array<i32>} : memref<1x6x1024xf32, #tpu.memory_space<vmem>>, vector<1x6x1024xf32>,
    return
  }
  func.func @transform_0(%arg0: i32, %arg1: i32) -> (i32, i32, i32) {
    %c0_i32 = arith.constant 0 : i32
    %c0_i32_0 = arith.constant 0 : i32
    return %arg0, %c0_i32, %arg1 : i32, i32, i32
  }
  func.func @transform_1(%arg0: i32, %arg1: i32) -> (i32, i32, i32) {
    %c0_i32 = arith.constant 0 : i32
    %c0_i32_0 = arith.constant 0 : i32
    %c0_i32_1 = arith.constant 0 : i32
    return %arg0, %c0_i32, %c0_i32_0 : i32, i32, i32
  }
  func.func @transform_2(%arg0: i32, %arg1: i32) -> (i32, i32, i32) {
    %c0_i32 = arith.constant 0 : i32
    %c0_i32_0 = arith.constant 0 : i32
    return %arg0, %c0_i32, %arg1 : i32, i32, i32
  }
}

module attributes {stable_mosaic.version = 11 : i64} {
  func.func @_grid_sample_kernel(%arg0: i32, %arg1: i32, %arg2: memref<1x8x256xf32, #tpu.memory_space<vmem>>, %arg3: memref<1x160x32xf32, #tpu.memory_space<vmem>>, %arg4: memref<1x5x256xf32, #tpu.memory_space<vmem>>) attributes {dimension_semantics = [#tpu.dimension_semantics<parallel>, #tpu.dimension_semantics<parallel>], iteration_bounds = array<i64: 2, 1>, scalar_prefetch = 0 : i64, scratch_operands = 0 : i64, tpu.core_type = #tpu.core_type<tc>, window_params = [{transform_indices = @transform_0, window_bounds = array<i64: 1, 8, 256>}, {transform_indices = @transform_1, window_bounds = array<i64: 1, 160, 32>}, {transform_indices = @transform_2, window_bounds = array<i64: 1, 5, 256>}]} {
    %c0 = arith.constant 0 : index
    %c0_0 = arith.constant 0 : index
    %c0_1 = arith.constant 0 : index
    %0 = vector.load %arg2[%c0, %c0_0, %c0_1] : memref<1x8x256xf32, #tpu.memory_space<vmem>>, vector<1x8x256xf32>
    %1 = vector.shape_cast %0 : vector<1x8x256xf32> to vector<8x256xf32>
    %2 = vector.extract_strided_slice %1 {offsets = [0, 0], sizes = [1, 256], strides = [1, 1]} : vector<8x256xf32> to vector<1x256xf32>
    %3 = arith.fptosi %2 : vector<1x256xf32> to vector<1x256xi32>
    %4 = vector.extract_strided_slice %1 {offsets = [1, 0], sizes = [1, 256], strides = [1, 1]} : vector<8x256xf32> to vector<1x256xf32>
    %5 = vector.extract_strided_slice %1 {offsets = [2, 0], sizes = [1, 256], strides = [1, 1]} : vector<8x256xf32> to vector<1x256xf32>
    %6 = vector.extract_strided_slice %1 {offsets = [3, 0], sizes = [1, 256], strides = [1, 1]} : vector<8x256xf32> to vector<1x256xf32>
    %7 = arith.fptosi %6 : vector<1x256xf32> to vector<1x256xi32>
    %8 = vector.extract_strided_slice %1 {offsets = [4, 0], sizes = [1, 256], strides = [1, 1]} : vector<8x256xf32> to vector<1x256xf32>
    %9 = vector.extract_strided_slice %1 {offsets = [5, 0], sizes = [1, 256], strides = [1, 1]} : vector<8x256xf32> to vector<1x256xf32>
    %10 = tpu.iota {dimensions = array<i32: 0>} : vector<32x256xi32>
    %11 = vector.broadcast %7 : vector<1x256xi32> to vector<32x256xi32>
    %12 = arith.cmpi eq, %10, %11 : vector<32x256xi32>
    %cst = arith.constant 0.000000e+00 : f32
    %13 = vector.shape_cast %8 : vector<1x256xf32> to vector<1x256xf32>
    %14 = vector.broadcast %13 : vector<1x256xf32> to vector<32x256xf32>
    %15 = vector.broadcast %cst : f32 to vector<32x256xf32>
    %16 = arith.select %12, %14, %15 : vector<32x256xi1>, vector<32x256xf32>
    %c1_i32 = arith.constant 1 : i32
    %17 = vector.broadcast %c1_i32 : i32 to vector<1x256xi32>
    %18 = arith.addi %7, %17 : vector<1x256xi32>
    %19 = vector.broadcast %18 : vector<1x256xi32> to vector<32x256xi32>
    %20 = arith.cmpi eq, %10, %19 : vector<32x256xi32>
    %cst_2 = arith.constant 0.000000e+00 : f32
    %21 = vector.shape_cast %9 : vector<1x256xf32> to vector<1x256xf32>
    %22 = vector.broadcast %21 : vector<1x256xf32> to vector<32x256xf32>
    %23 = vector.broadcast %cst_2 : f32 to vector<32x256xf32>
    %24 = arith.select %20, %22, %23 : vector<32x256xi1>, vector<32x256xf32>
    %25 = arith.addf %16, %24 : vector<32x256xf32>
    %26 = tpu.iota {dimensions = array<i32: 0>} : vector<32x256xi32>
    %27 = vector.broadcast %3 : vector<1x256xi32> to vector<32x256xi32>
    %28 = arith.cmpi eq, %26, %27 : vector<32x256xi32>
    %cst_3 = arith.constant 0.000000e+00 : f32
    %29 = vector.shape_cast %4 : vector<1x256xf32> to vector<1x256xf32>
    %30 = vector.broadcast %29 : vector<1x256xf32> to vector<32x256xf32>
    %31 = vector.broadcast %cst_3 : f32 to vector<32x256xf32>
    %32 = arith.select %28, %30, %31 : vector<32x256xi1>, vector<32x256xf32>
    %c1_i32_4 = arith.constant 1 : i32
    %33 = vector.broadcast %c1_i32_4 : i32 to vector<1x256xi32>
    %34 = arith.addi %3, %33 : vector<1x256xi32>
    %35 = vector.broadcast %34 : vector<1x256xi32> to vector<32x256xi32>
    %36 = arith.cmpi eq, %26, %35 : vector<32x256xi32>
    %cst_5 = arith.constant 0.000000e+00 : f32
    %37 = vector.shape_cast %5 : vector<1x256xf32> to vector<1x256xf32>
    %38 = vector.broadcast %37 : vector<1x256xf32> to vector<32x256xf32>
    %39 = vector.broadcast %cst_5 : f32 to vector<32x256xf32>
    %40 = arith.select %36, %38, %39 : vector<32x256xi1>, vector<32x256xf32>
    %41 = arith.addf %32, %40 : vector<32x256xf32>
    %c0_6 = arith.constant 0 : index
    %c0_7 = arith.constant 0 : index
    %c0_8 = arith.constant 0 : index
    %42 = vector.load %arg3[%c0_6, %c0_7, %c0_8] : memref<1x160x32xf32, #tpu.memory_space<vmem>>, vector<1x160x32xf32>
    %43 = vector.shape_cast %42 : vector<1x160x32xf32> to vector<160x32xf32>
    %cst_9 = arith.constant dense<0.000000e+00> : vector<160x256xf32>
    %44 = tpu.matmul %43, %25, %cst_9 {dimension_numbers = #tpu.dot_dimension_numbers<[1], [0], [0], [1], [0, 0, 1, 1], [], []>} : vector<160x32xf32>, vector<32x256xf32>, vector<160x256xf32> -> vector<160x256xf32>
    %45 = vector.shape_cast %44 : vector<160x256xf32> to vector<5x32x256xf32>
    %46 = vector.shape_cast %41 : vector<32x256xf32> to vector<1x32x256xf32>
    %47 = vector.broadcast %46 : vector<1x32x256xf32> to vector<5x32x256xf32>
    %48 = arith.mulf %45, %47 : vector<5x32x256xf32>
    %cst_10 = arith.constant dense<0.000000e+00> : vector<5x256xf32>
    %49 = vector.multi_reduction <add>, %48, %cst_10 [1] : vector<5x32x256xf32> to vector<5x256xf32>
    %c0_11 = arith.constant 0 : index
    %c0_12 = arith.constant 0 : index
    %c0_13 = arith.constant 0 : index
    %50 = vector.load %arg4[%c0_11, %c0_12, %c0_13] : memref<1x5x256xf32, #tpu.memory_space<vmem>>, vector<1x5x256xf32>
    %51 = vector.shape_cast %50 : vector<1x5x256xf32> to vector<5x256xf32>
    %52 = vector.shape_cast %49 : vector<5x256xf32> to vector<1x5x256xf32>
    tpu.vector_store %arg4[%c0_11, %c0_12, %c0_13], %52 {strides = array<i32>} : memref<1x5x256xf32, #tpu.memory_space<vmem>>, vector<1x5x256xf32>,
    return
  }
  func.func @transform_0(%arg0: i32, %arg1: i32) -> (i32, i32, i32) {
    %c0_i32 = arith.constant 0 : i32
    %c0_i32_0 = arith.constant 0 : i32
    return %arg0, %c0_i32, %arg1 : i32, i32, i32
  }
  func.func @transform_1(%arg0: i32, %arg1: i32) -> (i32, i32, i32) {
    %c0_i32 = arith.constant 0 : i32
    %c0_i32_0 = arith.constant 0 : i32
    %c0_i32_1 = arith.constant 0 : i32
    return %arg0, %c0_i32, %c0_i32_0 : i32, i32, i32
  }
  func.func @transform_2(%arg0: i32, %arg1: i32) -> (i32, i32, i32) {
    %c0_i32 = arith.constant 0 : i32
    %c0_i32_0 = arith.constant 0 : i32
    return %arg0, %c0_i32, %arg1 : i32, i32, i32
  }
}

</mosaic_0001>

<llo_original>
// kernel: moco_cycle_forward.7
$region0: #{moco_cycle_forward.7}
  #allocation0 [shape = 'u32[]', space=smem, size = 0x4, offset = 0x4, fixed_abs, tag = 'smem constant byte address 0x4 - core index']
  #allocation1 [shape = 'u32[144,128]{1,0:T(1,128)}', space=vmem, size = 0x12000, scoped, tag = 'internal scratch']
  %s0 = inlined_call_operand.vmem [shape: bf16[512,27], index: 0, kind: input, shape index: {}]
  %s1 = inlined_call_operand.vmem [shape: bf16[27,8], index: 1, kind: input, shape index: {}]
  %s2 = inlined_call_operand.vmem [shape: f32[1,8], index: 2, kind: input, shape index: {}]
  %s3 = inlined_call_operand.vmem [shape: f32[1,8], index: 3, kind: input, shape index: {}]
  %s4 = inlined_call_operand.vmem [shape: bf16[512,8], index: 4, kind: output, shape index: {}]
  %s5 = sld [smem:[#allocation0]]
  $region49: #{moco_cycle_forward.7} parent=0
    _
  %s7 = ssub.s32 1, %s5
  %s8 = scalar_select 0, %s7, %s5
  loop: start=0, step=1, limit=4
  $region2: #{moco_cycle_forward.7} parent=0 // loop_pre_header
    _
  $region3: #{moco_cycle_forward.7} parent=0 // loop_header
    %s10 = sphi 0, %s14
    %p11 = scmp.ge.s32.totalorder %s10, 4
    %s20 = sphi 0, %s22
    %s23 = sphi 0, %s20
    %s24 = sphi 0, %s23
    %s40 = sphi 0, %s24
    %s44 = sphi 0, %s44
    %s46 = sphi 0, %s44
    %s47 = sphi 0, %s46
    %s61 = sphi 0, %s47
    %s65 = sphi 0, %s65
    %s67 = sphi 0, %s65
    %s68 = sphi 0, %s67
    %s82 = sphi 0, %s68
    %s86 = sphi 0, %s86
    %s88 = sphi 0, %s86
    %s89 = sphi 0, %s88
    %s103 = sphi 0, %s89
    %s109 = sphi 0, %s111
    %s112 = sphi 0, %s109
    %s113 = sphi 0, %s112
    %s129 = sphi 0, %s113
  $region4: #{moco_cycle_forward.7} parent=0 // loop_header_branch
    %13 = sbr.rel (%p11) target = $region8
  $region5: #{moco_cycle_forward.7} parent=0 // loop_body
    %s15 = ssub.s32 %s10, 1
    %s16 = ssub.s32 %s10, 2
    %s17 = sadd.s32 %s10, 1
    %s18 = ssub.s32 %s10, %s17
    %p19 = scmp.eq.s32.totalorder %s18, 0
    %s21 = sadd.s32 %s20, 1
    %s22 = scalar_select %p19, %s20, %s21
    %p25 = pneg %p19
    %p26 = scmp.eq.s32.totalorder %s10, 1
    %p27 = por %p25, %p26
    %p28 = scmp.ne.s32.totalorder %s20, %s23
    %p29 = scmp.eq.s32.totalorder %s10, 0
    %p30 = por %p28, %p29
    %p31 = scmp.ne.s32.totalorder %s20, %s23
    %p32 = scmp.eq.s32.totalorder %s15, 1
    %p33 = por %p31, %p32
    %p34 = scmp.ne.s32.totalorder %s23, %s24
    %p35 = scmp.eq.s32.totalorder %s15, 0
    %p36 = por %p34, %p35
    %p37 = scmp.ne.s32.totalorder %s23, %s24
    %p38 = scmp.eq.s32.totalorder %s16, 1
    %p39 = por %p37, %p38
    %p41 = scmp.ne.s32.totalorder %s24, %s40
    %p42 = scmp.eq.s32.totalorder %s16, 0
    %p43 = por %p41, %p42
    %s45 = sadd.s32 %s44, 1
    %p48 = scmp.eq.s32.totalorder %s10, 1
    %p49 = scmp.ne.s32.totalorder %s44, %s46
    %p50 = scmp.eq.s32.totalorder %s10, 0
    %p51 = por %p49, %p50
    %p52 = scmp.ne.s32.totalorder %s44, %s46
    %p53 = scmp.eq.s32.totalorder %s15, 1
    %p54 = por %p52, %p53
    %p55 = scmp.ne.s32.totalorder %s46, %s47
    %p56 = scmp.eq.s32.totalorder %s15, 0
    %p57 = por %p55, %p56
    %p58 = scmp.ne.s32.totalorder %s46, %s47
    %p59 = scmp.eq.s32.totalorder %s16, 1
    %p60 = por %p58, %p59
    %p62 = scmp.ne.s32.totalorder %s47, %s61
    %p63 = scmp.eq.s32.totalorder %s16, 0
    %p64 = por %p62, %p63
    %s66 = sadd.s32 %s65, 1
    %p69 = scmp.eq.s32.totalorder %s10, 1
    %p70 = scmp.ne.s32.totalorder %s65, %s67
    %p71 = scmp.eq.s32.totalorder %s10, 0
    %p72 = por %p70, %p71
    %p73 = scmp.ne.s32.totalorder %s65, %s67
    %p74 = scmp.eq.s32.totalorder %s15, 1
    %p75 = por %p73, %p74
    %p76 = scmp.ne.s32.totalorder %s67, %s68
    %p77 = scmp.eq.s32.totalorder %s15, 0
    %p78 = por %p76, %p77
    %p79 = scmp.ne.s32.totalorder %s67, %s68
    %p80 = scmp.eq.s32.totalorder %s16, 1
    %p81 = por %p79, %p80
    %p83 = scmp.ne.s32.totalorder %s68, %s82
    %p84 = scmp.eq.s32.totalorder %s16, 0
    %p85 = por %p83, %p84
    %s87 = sadd.s32 %s86, 1
    %p90 = scmp.eq.s32.totalorder %s10, 1
    %p91 = scmp.ne.s32.totalorder %s86, %s88
    %p92 = scmp.eq.s32.totalorder %s10, 0
    %p93 = por %p91, %p92
    %p94 = scmp.ne.s32.totalorder %s86, %s88
    %p95 = scmp.eq.s32.totalorder %s15, 1
    %p96 = por %p94, %p95
    %p97 = scmp.ne.s32.totalorder %s88, %s89
    %p98 = scmp.eq.s32.totalorder %s15, 0
    %p99 = por %p97, %p98
    %p100 = scmp.ne.s32.totalorder %s88, %s89
    %p101 = scmp.eq.s32.totalorder %s16, 1
    %p102 = por %p100, %p101
    %p104 = scmp.ne.s32.totalorder %s89, %s103
    %p105 = scmp.eq.s32.totalorder %s16, 0
    %p106 = por %p104, %p105
    %s107 = ssub.s32 %s10, %s17
    %p108 = scmp.eq.s32.totalorder %s107, 0
    %s110 = sadd.s32 %s109, 1
    %s111 = scalar_select %p108, %s109, %s110
    %p114 = pneg %p108
    %p115 = scmp.eq.s32.totalorder %s10, 1
    %p116 = por %p114, %p115
    %p117 = scmp.ne.s32.totalorder %s109, %s112
    %p118 = scmp.eq.s32.totalorder %s10, 0
    %p119 = por %p117, %p118
    %p120 = scmp.ne.s32.totalorder %s109, %s112
    %p121 = scmp.eq.s32.totalorder %s15, 1
    %p122 = por %p120, %p121
    %p123 = scmp.ne.s32.totalorder %s112, %s113
    %p124 = scmp.eq.s32.totalorder %s15, 0
    %p125 = por %p123, %p124
    %p126 = scmp.ne.s32.totalorder %s112, %s113
    %p127 = scmp.eq.s32.totalorder %s16, 1
    %p128 = por %p126, %p127
    %p130 = scmp.ne.s32.totalorder %s113, %s129
    %p131 = scmp.eq.s32.totalorder %s16, 0
    %p132 = por %p130, %p131
    %p133 = scmp.le.s32.totalorder 1, %s10
    %p134 = scmp.lt.s32.totalorder %s10, 3
    %p135 = pnand %p133, %p134
    %p136 = pneg %p135
    // Predicated region
    $region9: #{moco_cycle_forward.7} parent=5 // pred_check
      _
    $region10: #{moco_cycle_forward.7} parent=5 // pred_check_branch
      %138 = sbr.rel (%p135) target = $region12
    $region11: #{moco_cycle_forward.7} parent=5 // pred_region
      %s139 = ssub.s32 %s10, 1
      // Predicated region
      $region13: #{moco_cycle_forward.7} parent=11 // pred_check
        %p140 = pneg %p57
      $region14: #{moco_cycle_forward.7} parent=11 // pred_check_branch
        %142 = sbr.rel (%p140) target = $region16
      $region15: #{moco_cycle_forward.7} parent=11 // pred_region
        _
      $region16: #{moco_cycle_forward.7} parent=11 // pred_fallthru
        _
      // Predicated region
      $region17: #{moco_cycle_forward.7} parent=11 // pred_check
        %p143 = pneg %p78
      $region18: #{moco_cycle_forward.7} parent=11 // pred_check_branch
        %145 = sbr.rel (%p143) target = $region20
      $region19: #{moco_cycle_forward.7} parent=11 // pred_region
        _
      $region20: #{moco_cycle_forward.7} parent=11 // pred_fallthru
        _
      // Predicated region
      $region21: #{moco_cycle_forward.7} parent=11 // pred_check
        %p146 = pneg %p99
      $region22: #{moco_cycle_forward.7} parent=11 // pred_check_branch
        %148 = sbr.rel (%p146) target = $region24
      $region23: #{moco_cycle_forward.7} parent=11 // pred_region
        _
      $region24: #{moco_cycle_forward.7} parent=11 // pred_fallthru
        _
    $region12: #{moco_cycle_forward.7} parent=5 // pred_fallthru
      _
    %p149 = scmp.lt.s32.totalorder %s10, 2
    // Predicated region
    $region25: #{moco_cycle_forward.7} parent=5 // pred_check
      %p150 = pneg %p149
    $region26: #{moco_cycle_forward.7} parent=5 // pred_check_branch
      %152 = sbr.rel (%p150) target = $region28
    $region27: #{moco_cycle_forward.7} parent=5 // pred_region
      // Predicated region
      $region29: #{moco_cycle_forward.7} parent=27 // pred_check
        %p153 = pneg %p30
      $region30: #{moco_cycle_forward.7} parent=27 // pred_check_branch
        %155 = sbr.rel (%p153) target = $region32
      $region31: #{moco_cycle_forward.7} parent=27 // pred_region
        %s156 = smul.u32 32, %s10
        %p157 = scmp.lt.s32.totalorder %s156, 63
        %s158 = scalar_select %p157, %s156, 63
        %s159 = smul.addr %s158, 4
        %s160 = scalar_lea.vmem %s0, %s159
        %s161 = smul.u32 32, %s10
      $region32: #{moco_cycle_forward.7} parent=27 // pred_fallthru
        _
    $region28: #{moco_cycle_forward.7} parent=5 // pred_fallthru
      _
    %p162 = scmp.le.s32.totalorder 1, %s10
    %p163 = scmp.lt.s32.totalorder %s10, 3
    %p164 = pnand %p162, %p163
    %p165 = pneg %p164
    // Predicated region
    $region33: #{moco_cycle_forward.7} parent=5 // pred_check
      _
    $region34: #{moco_cycle_forward.7} parent=5 // pred_check_branch
      %167 = sbr.rel (%p164) target = $region36
    $region35: #{moco_cycle_forward.7} parent=5 // pred_region
      %s168 = ssub.s32 %s10, 1
      %s169 = smul.u32 32, %s15
      %p170 = scmp.lt.s32.totalorder %s169, 63
      %s171 = scalar_select %p170, %s169, 63
      %s172 = smul.addr %s171, 4
      %s173 = scalar_lea.vmem %s0, %s172
      %p174 = pneg %p36
      %p175 = pneg %p33
      %p176 = pneg %p57
      %p177 = pneg %p54
      %p178 = pneg %p78
      %p179 = pneg %p75
      %p180 = pneg %p99
      %p181 = pneg %p96
      %p182 = pneg %p125
      %p183 = pneg %p122
      %s184 = smul.u32 32, %s15
      %p185 = scmp.lt.s32.totalorder %s184, 63
      %s186 = scalar_select %p185, %s184, 63
      %s187 = smul.addr %s186, 4
      %s188 = scalar_lea.vmem %s4, %s187
      %s189 = smul.u32 32, %s15
      %p190 = scmp.lt.s32.totalorder %s189, 63
      %s191 = scalar_select %p190, %s189, 63
      %s192 = smul.addr %s191, 4
      %s193 = scalar_lea.vmem %s0, %s192
      %s194 = smul.u32 32, %s15
      %s195 = smul.u32 32, %s15
      %p196 = scmp.lt.s32.totalorder %s195, 63
      %s197 = scalar_select %p196, %s195, 63
      %s198 = smul.addr %s197, 4
      %s199 = scalar_lea.vmem %s4, %s198
      %s200 = smul.u32 32, %s15
      %v202 = vld [vmem:[%s193] sm:$0xf]
      %v203 = vld [vmem:[%s193 + $0x4] sm:$0xf]
      %v204 = vld [vmem:[%s193 + $0x8] sm:$0xf]
      %v205 = vld [vmem:[%s193 + $0xc] sm:$0xf]
      %v206 = vld [vmem:[%s193 + $0x10] sm:$0xf]
      %v207 = vld [vmem:[%s193 + $0x14] sm:$0xf]
      %v208 = vld [vmem:[%s193 + $0x18] sm:$0xf]
      %v209 = vld [vmem:[%s193 + $0x1c] sm:$0xf]
      %v210 = vld [vmem:[%s193 + $0x20] sm:$0xf]
      %v211 = vld [vmem:[%s193 + $0x24] sm:$0xf]
      %v212 = vld [vmem:[%s193 + $0x28] sm:$0xf]
      %v213 = vld [vmem:[%s193 + $0x2c] sm:$0xf]
      %v214 = vld [vmem:[%s193 + $0x30] sm:$0xf]
      %v215 = vld [vmem:[%s193 + $0x34] sm:$0xf]
      %v216 = vld [vmem:[%s193 + $0x38] sm:$0xf]
      %v217 = vld [vmem:[%s193 + $0x3c] sm:$0xf]
      %v218 = vld [vmem:[%s193 + $0x40] sm:$0xf]
      %v219 = vld [vmem:[%s193 + $0x44] sm:$0xf]
      %v220 = vld [vmem:[%s193 + $0x48] sm:$0xf]
      %v221 = vld [vmem:[%s193 + $0x4c] sm:$0xf]
      %v222 = vld [vmem:[%s193 + $0x50] sm:$0xf]
      %v223 = vld [vmem:[%s193 + $0x54] sm:$0xf]
      %v224 = vld [vmem:[%s193 + $0x58] sm:$0xf]
      %v225 = vld [vmem:[%s193 + $0x5c] sm:$0xf]
      %v226 = vld [vmem:[%s193 + $0x60] sm:$0xf]
      %v227 = vld [vmem:[%s193 + $0x64] sm:$0xf]
      %v228 = vld [vmem:[%s193 + $0x68] sm:$0xf]
      %v229 = vld [vmem:[%s193 + $0x6c] sm:$0xf]
      %v230 = vld [vmem:[%s193 + $0x70] sm:$0xf]
      %v231 = vld [vmem:[%s193 + $0x74] sm:$0xf]
      %v232 = vld [vmem:[%s193 + $0x78] sm:$0xf]
      %v233 = vld [vmem:[%s193 + $0x7c] sm:$0xf]
      %v234 = vld [vmem:[%s1] sm:$0xf]
      %v235 = vld [vmem:[%s1 + $0x4] sm:$0xf]
      %v236 = vld [vmem:[%s1 + $0x8] sm:$0xf]
      %v237 = vld [vmem:[%s1 + $0xc] sm:$0x3]
      %v270 = vunpack.c.l.b16 %v202
      %v271 = vunpack.c.l.b16 %v203
      %v272 = vunpack.c.l.b16 %v204
      %v273 = vunpack.c.l.b16 %v205
      %v274 = vunpack.c.l.b16 %v206
      %v275 = vunpack.c.l.b16 %v207
      %v276 = vunpack.c.l.b16 %v208
      %v277 = vunpack.c.l.b16 %v209
      %v278 = vunpack.c.l.b16 %v210
      %v279 = vunpack.c.l.b16 %v211
      %v280 = vunpack.c.l.b16 %v212
      %v281 = vunpack.c.l.b16 %v213
      %v282 = vunpack.c.l.b16 %v214
      %v283 = vunpack.c.l.b16 %v215
      %v284 = vunpack.c.l.b16 %v216
      %v285 = vunpack.c.l.b16 %v217
      %v286 = vunpack.c.l.b16 %v218
      %v287 = vunpack.c.l.b16 %v219
      %v288 = vunpack.c.l.b16 %v220
      %v289 = vunpack.c.l.b16 %v221
      %v290 = vunpack.c.l.b16 %v222
      %v291 = vunpack.c.l.b16 %v223
      %v292 = vunpack.c.l.b16 %v224
      %v293 = vunpack.c.l.b16 %v225
      %v294 = vunpack.c.l.b16 %v226
      %v295 = vunpack.c.l.b16 %v227
      %v296 = vunpack.c.l.b16 %v228
      %v297 = vunpack.c.l.b16 %v229
      %v298 = vunpack.c.l.b16 %v230
      %v299 = vunpack.c.l.b16 %v231
      %v300 = vunpack.c.l.b16 %v232
      %v301 = vunpack.c.l.b16 %v233
      %v302 = vpack.c.b16 %v271, %v270
      %v303 = vpack.c.b16 %v273, %v272
      %v304 = vpack.c.b16 %v275, %v274
      %v305 = vpack.c.b16 %v277, %v276
      %v306 = vpack.c.b16 %v279, %v278
      %v307 = vpack.c.b16 %v281, %v280
      %v308 = vpack.c.b16 %v283, %v282
      %v309 = vpack.c.b16 %v285, %v284
      %v310 = vpack.c.b16 %v287, %v286
      %v311 = vpack.c.b16 %v289, %v288
      %v312 = vpack.c.b16 %v291, %v290
      %v313 = vpack.c.b16 %v293, %v292
      %v314 = vpack.c.b16 %v295, %v294
      %v315 = vpack.c.b16 %v297, %v296
      %v316 = vpack.c.b16 %v299, %v298
      %v317 = vpack.c.b16 %v301, %v300
      %v322 = vunpack.c.l.b16 %v234
      %v323 = vunpack.c.l.b16 %v235
      %v324 = vunpack.c.l.b16 %v236
      %v325 = vunpack.c.l.b16 %v237
      %v326 = vpack.c.b16 %v323, %v322
      %v327 = vpack.c.b16 %v325, %v324
      %vm329 = vcmask 220160
      %v331 = vsel %vm329, %v302, 0
      %v334 = vsel %vm329, %v303, 0
      %v337 = vsel %vm329, %v304, 0
      %v340 = vsel %vm329, %v305, 0
      %v343 = vsel %vm329, %v306, 0
      %v346 = vsel %vm329, %v307, 0
      %v349 = vsel %vm329, %v308, 0
      %v352 = vsel %vm329, %v309, 0
      %v355 = vsel %vm329, %v310, 0
      %v358 = vsel %vm329, %v311, 0
      %v361 = vsel %vm329, %v312, 0
      %v364 = vsel %vm329, %v313, 0
      %v367 = vsel %vm329, %v314, 0
      %v370 = vsel %vm329, %v315, 0
      %v373 = vsel %vm329, %v316, 0
      %v376 = vsel %vm329, %v317, 0
      %vm378 = vcmask 1044480
      %vm379 = vcmask 1045504
      %v380 = vsel %vm378, 4294967295, 65535
      %v381 = vsel %vm379, %v380, 0
      %v383 = vand.u32 %v327, %v381
      %385 = vmatprep.subr.bf16.mxu0 0
      %386 = vmatpush1.bf16.msra.mxu0 0
      %387 = vmatprep.subr.bf16.mxu0 0
      %388 = vmatpush1.bf16.msra.mxu0 0
      %389 = vmatprep.subr.bf16.mxu0 0
      %390 = vmatpush1.bf16.msra.mxu0 0
      %391 = vmatprep.subr.bf16.mxu0 0
      %392 = vmatpush1.bf16.msra.mxu0 0
      %393 = vmatprep.subr.bf16.mxu0 0
      %394 = vmatpush1.bf16.msra.mxu0 0
      %395 = vmatprep.subr.bf16.mxu0 0
      %396 = vmatpush1.bf16.msra.mxu0 0
      %397 = vmatprep.subr.bf16.mxu0 0
      %398 = vmatpush1.bf16.msra.mxu0 %v383
      %399 = vmatprep.subr.bf16.mxu0 0
      %400 = vmatpush1.bf16.msra.mxu0 %v326
      %401 = vmatprep.subr.bf16.mxu0 0
      %402 = vmatpush2.bf16.msra.mxu0 0
      %403 = vmatprep.subr.bf16.mxu0 0
      %404 = vmatpush2.bf16.msra.mxu0 0
      %405 = vmatprep.subr.bf16.mxu0 0
      %406 = vmatpush2.bf16.msra.mxu0 0
      %407 = vmatprep.subr.bf16.mxu0 0
      %408 = vmatpush2.bf16.msra.mxu0 0
      %409 = vmatprep.subr.bf16.mxu0 0
      %410 = vmatpush2.bf16.msra.mxu0 0
      %411 = vmatprep.subr.bf16.mxu0 0
      %412 = vmatpush2.bf16.msra.mxu0 0
      %413 = vmatprep.subr.bf16.mxu0 0
      %414 = vmatpush2.bf16.msra.mxu0 0
      %415 = vmatprep.subr.bf16.mxu0 0
      %416 = vmatpush2.bf16.msra.mxu0 0
      %417 = vmatprep.mubr.bf16.mxu0 0
      %418 = vmatmul.mubr.bf16.gmra.mxu0 %v331
      %v419 = vpop.f32.mrf.mxu0
      %v420 = vadd.f32 0.0, %v419
      %v421 = vpop.f32.mrf.mxu0
      %v422 = vpop.f32.mrf.mxu0
      %v423 = vadd.f32 0.0, %v422
      %v424 = vpop.f32.mrf.mxu0
      %425 = vmatprep.mubr.bf16.mxu0 0
      %426 = vmatmul.mubr.bf16.gmra.mxu0 %v334
      %v427 = vpop.f32.mrf.mxu0
      %v428 = vadd.f32 0.0, %v427
      %v429 = vpop.f32.mrf.mxu0
      %v430 = vpop.f32.mrf.mxu0
      %v431 = vadd.f32 0.0, %v430
      %v432 = vpop.f32.mrf.mxu0
      %433 = vmatprep.mubr.bf16.mxu0 0
      %434 = vmatmul.mubr.bf16.gmra.mxu0 %v337
      %v435 = vpop.f32.mrf.mxu0
      %v436 = vadd.f32 0.0, %v435
      %v437 = vpop.f32.mrf.mxu0
      %v438 = vpop.f32.mrf.mxu0
      %v439 = vadd.f32 0.0, %v438
      %v440 = vpop.f32.mrf.mxu0
      %441 = vmatprep.mubr.bf16.mxu0 0
      %442 = vmatmul.mubr.bf16.gmra.mxu0 %v340
      %v443 = vpop.f32.mrf.mxu0
      %v444 = vadd.f32 0.0, %v443
      %v445 = vpop.f32.mrf.mxu0
      %v446 = vpop.f32.mrf.mxu0
      %v447 = vadd.f32 0.0, %v446
      %v448 = vpop.f32.mrf.mxu0
      %449 = vmatprep.mubr.bf16.mxu0 0
      %450 = vmatmul.mubr.bf16.gmra.mxu0 %v343
      %v451 = vpop.f32.mrf.mxu0
      %v452 = vadd.f32 0.0, %v451
      %v453 = vpop.f32.mrf.mxu0
      %v454 = vpop.f32.mrf.mxu0
      %v455 = vadd.f32 0.0, %v454
      %v456 = vpop.f32.mrf.mxu0
      %457 = vmatprep.mubr.bf16.mxu0 0
      %458 = vmatmul.mubr.bf16.gmra.mxu0 %v346
      %v459 = vpop.f32.mrf.mxu0
      %v460 = vadd.f32 0.0, %v459
      %v461 = vpop.f32.mrf.mxu0
      %v462 = vpop.f32.mrf.mxu0
      %v463 = vadd.f32 0.0, %v462
      %v464 = vpop.f32.mrf.mxu0
      %465 = vmatprep.mubr.bf16.mxu0 0
      %466 = vmatmul.mubr.bf16.gmra.mxu0 %v349
      %v467 = vpop.f32.mrf.mxu0
      %v468 = vadd.f32 0.0, %v467
      %v469 = vpop.f32.mrf.mxu0
      %v470 = vpop.f32.mrf.mxu0
      %v471 = vadd.f32 0.0, %v470
      %v472 = vpop.f32.mrf.mxu0
      %473 = vmatprep.mubr.bf16.mxu0 0
      %474 = vmatmul.mubr.bf16.gmra.mxu0 %v352
      %v475 = vpop.f32.mrf.mxu0
      %v476 = vadd.f32 0.0, %v475
      %v477 = vpop.f32.mrf.mxu0
      %v478 = vpop.f32.mrf.mxu0
      %v479 = vadd.f32 0.0, %v478
      %v480 = vpop.f32.mrf.mxu0
      %481 = vmatprep.mubr.bf16.mxu0 0
      %482 = vmatmul.mubr.bf16.gmra.mxu0 %v355
      %v483 = vpop.f32.mrf.mxu0
      %v484 = vadd.f32 0.0, %v483
      %v485 = vpop.f32.mrf.mxu0
      %v486 = vpop.f32.mrf.mxu0
      %v487 = vadd.f32 0.0, %v486
      %v488 = vpop.f32.mrf.mxu0
      %489 = vmatprep.mubr.bf16.mxu0 0
      %490 = vmatmul.mubr.bf16.gmra.mxu0 %v358
      %v491 = vpop.f32.mrf.mxu0
      %v492 = vadd.f32 0.0, %v491
      %v493 = vpop.f32.mrf.mxu0
      %v494 = vpop.f32.mrf.mxu0
      %v495 = vadd.f32 0.0, %v494
      %v496 = vpop.f32.mrf.mxu0
      %497 = vmatprep.mubr.bf16.mxu0 0
      %498 = vmatmul.mubr.bf16.gmra.mxu0 %v361
      %v499 = vpop.f32.mrf.mxu0
      %v500 = vadd.f32 0.0, %v499
      %v501 = vpop.f32.mrf.mxu0
      %v502 = vpop.f32.mrf.mxu0
      %v503 = vadd.f32 0.0, %v502
      %v504 = vpop.f32.mrf.mxu0
      %505 = vmatprep.mubr.bf16.mxu0 0
      %506 = vmatmul.mubr.bf16.gmra.mxu0 %v364
      %v507 = vpop.f32.mrf.mxu0
      %v508 = vadd.f32 0.0, %v507
      %v509 = vpop.f32.mrf.mxu0
      %v510 = vpop.f32.mrf.mxu0
      %v511 = vadd.f32 0.0, %v510
      %v512 = vpop.f32.mrf.mxu0
      %513 = vmatprep.mubr.bf16.mxu0 0
      %514 = vmatmul.mubr.bf16.gmra.mxu0 %v367
      %v515 = vpop.f32.mrf.mxu0
      %v516 = vadd.f32 0.0, %v515
      %v517 = vpop.f32.mrf.mxu0
      %v518 = vpop.f32.mrf.mxu0
      %v519 = vadd.f32 0.0, %v518
      %v520 = vpop.f32.mrf.mxu0
      %521 = vmatprep.mubr.bf16.mxu0 0
      %522 = vmatmul.mubr.bf16.gmra.mxu0 %v370
      %v523 = vpop.f32.mrf.mxu0
      %v524 = vadd.f32 0.0, %v523
      %v525 = vpop.f32.mrf.mxu0
      %v526 = vpop.f32.mrf.mxu0
      %v527 = vadd.f32 0.0, %v526
      %v528 = vpop.f32.mrf.mxu0
      %529 = vmatprep.mubr.bf16.mxu0 0
      %530 = vmatmul.mubr.bf16.gmra.mxu0 %v373
      %v531 = vpop.f32.mrf.mxu0
      %v532 = vadd.f32 0.0, %v531
      %v533 = vpop.f32.mrf.mxu0
      %v534 = vpop.f32.mrf.mxu0
      %v535 = vadd.f32 0.0, %v534
      %v536 = vpop.f32.mrf.mxu0
      %537 = vmatprep.mubr.bf16.mxu0 0
      %538 = vmatmul.mubr.bf16.gmra.mxu0 %v376
      %v539 = vpop.f32.mrf.mxu0
      %v540 = vadd.f32 0.0, %v539
      %v541 = vpop.f32.mrf.mxu0
      %v542 = vpop.f32.mrf.mxu0
      %v543 = vadd.f32 0.0, %v542
      %v544 = vpop.f32.mrf.mxu0
      %545 = vdwg.mxu0
      %v546 = vld [vmem:[%s2] sm:$0x1]
      %v548 = vlaneseq
      %v549 = vshrl.u32 %v548, 7
      %v550 = vsub.s32 0, %v549
      %v551 = vrot.slane %v546, %v550
      %v553 = vmul.f32 %v420, %v551
      %v554 = vmul.f32 %v423, %v551
      %v555 = vmul.f32 %v428, %v551
      %v556 = vmul.f32 %v431, %v551
      %v557 = vmul.f32 %v436, %v551
      %v558 = vmul.f32 %v439, %v551
      %v559 = vmul.f32 %v444, %v551
      %v560 = vmul.f32 %v447, %v551
      %v561 = vmul.f32 %v452, %v551
      %v562 = vmul.f32 %v455, %v551
      %v563 = vmul.f32 %v460, %v551
      %v564 = vmul.f32 %v463, %v551
      %v565 = vmul.f32 %v468, %v551
      %v566 = vmul.f32 %v471, %v551
      %v567 = vmul.f32 %v476, %v551
      %v568 = vmul.f32 %v479, %v551
      %v569 = vmul.f32 %v484, %v551
      %v570 = vmul.f32 %v487, %v551
      %v571 = vmul.f32 %v492, %v551
      %v572 = vmul.f32 %v495, %v551
      %v573 = vmul.f32 %v500, %v551
      %v574 = vmul.f32 %v503, %v551
      %v575 = vmul.f32 %v508, %v551
      %v576 = vmul.f32 %v511, %v551
      %v577 = vmul.f32 %v516, %v551
      %v578 = vmul.f32 %v519, %v551
      %v579 = vmul.f32 %v524, %v551
      %v580 = vmul.f32 %v527, %v551
      %v581 = vmul.f32 %v532, %v551
      %v582 = vmul.f32 %v535, %v551
      %v583 = vmul.f32 %v540, %v551
      %v584 = vmul.f32 %v543, %v551
      %v585 = vld [vmem:[%s3] sm:$0x1]
      %v587 = vlaneseq
      %v588 = vshrl.u32 %v587, 7
      %v589 = vsub.s32 0, %v588
      %v590 = vrot.slane %v585, %v589
      %v592 = vadd.f32 %v553, %v590
      %v593 = vadd.f32 %v554, %v590
      %v594 = vadd.f32 %v555, %v590
      %v595 = vadd.f32 %v556, %v590
      %v596 = vadd.f32 %v557, %v590
      %v597 = vadd.f32 %v558, %v590
      %v598 = vadd.f32 %v559, %v590
      %v599 = vadd.f32 %v560, %v590
      %v600 = vadd.f32 %v561, %v590
      %v601 = vadd.f32 %v562, %v590
      %v602 = vadd.f32 %v563, %v590
      %v603 = vadd.f32 %v564, %v590
      %v604 = vadd.f32 %v565, %v590
      %v605 = vadd.f32 %v566, %v590
      %v606 = vadd.f32 %v567, %v590
      %v607 = vadd.f32 %v568, %v590
      %v608 = vadd.f32 %v569, %v590
      %v609 = vadd.f32 %v570, %v590
      %v610 = vadd.f32 %v571, %v590
      %v611 = vadd.f32 %v572, %v590
      %v612 = vadd.f32 %v573, %v590
      %v613 = vadd.f32 %v574, %v590
      %v614 = vadd.f32 %v575, %v590
      %v615 = vadd.f32 %v576, %v590
      %v616 = vadd.f32 %v577, %v590
      %v617 = vadd.f32 %v578, %v590
      %v618 = vadd.f32 %v579, %v590
      %v619 = vadd.f32 %v580, %v590
      %v620 = vadd.f32 %v581, %v590
      %v621 = vadd.f32 %v582, %v590
      %v622 = vadd.f32 %v583, %v590
      %v623 = vadd.f32 %v584, %v590
      %v624 = vmax.f32 %v592, 0.0
      %v625 = vmax.f32 %v593, 0.0
      %v626 = vmax.f32 %v594, 0.0
      %v627 = vmax.f32 %v595, 0.0
      %v628 = vmax.f32 %v596, 0.0
      %v629 = vmax.f32 %v597, 0.0
      %v630 = vmax.f32 %v598, 0.0
      %v631 = vmax.f32 %v599, 0.0
      %v632 = vmax.f32 %v600, 0.0
      %v633 = vmax.f32 %v601, 0.0
      %v634 = vmax.f32 %v602, 0.0
      %v635 = vmax.f32 %v603, 0.0
      %v636 = vmax.f32 %v604, 0.0
      %v637 = vmax.f32 %v605, 0.0
      %v638 = vmax.f32 %v606, 0.0
      %v639 = vmax.f32 %v607, 0.0
      %v640 = vmax.f32 %v608, 0.0
      %v641 = vmax.f32 %v609, 0.0
      %v642 = vmax.f32 %v610, 0.0
      %v643 = vmax.f32 %v611, 0.0
      %v644 = vmax.f32 %v612, 0.0
      %v645 = vmax.f32 %v613, 0.0
      %v646 = vmax.f32 %v614, 0.0
      %v647 = vmax.f32 %v615, 0.0
      %v648 = vmax.f32 %v616, 0.0
      %v649 = vmax.f32 %v617, 0.0
      %v650 = vmax.f32 %v618, 0.0
      %v651 = vmax.f32 %v619, 0.0
      %v652 = vmax.f32 %v620, 0.0
      %v653 = vmax.f32 %v621, 0.0
      %v654 = vmax.f32 %v622, 0.0
      %v655 = vmax.f32 %v623, 0.0
      %v656 = vpack.c.bf16 %v625, %v624
      %v657 = vpack.c.bf16 %v627, %v626
      %v658 = vpack.c.bf16 %v629, %v628
      %v659 = vpack.c.bf16 %v631, %v630
      %v660 = vpack.c.bf16 %v633, %v632
      %v661 = vpack.c.bf16 %v635, %v634
      %v662 = vpack.c.bf16 %v637, %v636
      %v663 = vpack.c.bf16 %v639, %v638
      %v664 = vpack.c.bf16 %v641, %v640
      %v665 = vpack.c.bf16 %v643, %v642
      %v666 = vpack.c.bf16 %v645, %v644
      %v667 = vpack.c.bf16 %v647, %v646
      %v668 = vpack.c.bf16 %v649, %v648
      %v669 = vpack.c.bf16 %v651, %v650
      %v670 = vpack.c.bf16 %v653, %v652
      %v671 = vpack.c.bf16 %v655, %v654
      %v688 = vunpack.c.l.b16 %v656
      %v689 = vunpack.c.h.b16 %v656
      %v690 = vunpack.c.l.b16 %v657
      %v691 = vunpack.c.h.b16 %v657
      %v692 = vunpack.c.l.b16 %v658
      %v693 = vunpack.c.h.b16 %v658
      %v694 = vunpack.c.l.b16 %v659
      %v695 = vunpack.c.h.b16 %v659
      %v696 = vunpack.c.l.b16 %v660
      %v697 = vunpack.c.h.b16 %v660
      %v698 = vunpack.c.l.b16 %v661
      %v699 = vunpack.c.h.b16 %v661
      %v700 = vunpack.c.l.b16 %v662
      %v701 = vunpack.c.h.b16 %v662
      %v702 = vunpack.c.l.b16 %v663
      %v703 = vunpack.c.h.b16 %v663
      %v704 = vunpack.c.l.b16 %v664
      %v705 = vunpack.c.h.b16 %v664
      %v706 = vunpack.c.l.b16 %v665
      %v707 = vunpack.c.h.b16 %v665
      %v708 = vunpack.c.l.b16 %v666
      %v709 = vunpack.c.h.b16 %v666
      %v710 = vunpack.c.l.b16 %v667
      %v711 = vunpack.c.h.b16 %v667
      %v712 = vunpack.c.l.b16 %v668
      %v713 = vunpack.c.h.b16 %v668
      %v714 = vunpack.c.l.b16 %v669
      %v715 = vunpack.c.h.b16 %v669
      %v716 = vunpack.c.l.b16 %v670
      %v717 = vunpack.c.h.b16 %v670
      %v718 = vunpack.c.l.b16 %v671
      %v719 = vunpack.c.h.b16 %v671
      %v720 = vpack.c.b16 %v688, %v688
      %v721 = vpack.c.b16 %v689, %v689
      %v722 = vpack.c.b16 %v690, %v690
      %v723 = vpack.c.b16 %v691, %v691
      %v724 = vpack.c.b16 %v692, %v692
      %v725 = vpack.c.b16 %v693, %v693
      %v726 = vpack.c.b16 %v694, %v694
      %v727 = vpack.c.b16 %v695, %v695
      %v728 = vpack.c.b16 %v696, %v696
      %v729 = vpack.c.b16 %v697, %v697
      %v730 = vpack.c.b16 %v698, %v698
      %v731 = vpack.c.b16 %v699, %v699
      %v732 = vpack.c.b16 %v700, %v700
      %v733 = vpack.c.b16 %v701, %v701
      %v734 = vpack.c.b16 %v702, %v702
      %v735 = vpack.c.b16 %v703, %v703
      %v736 = vpack.c.b16 %v704, %v704
      %v737 = vpack.c.b16 %v705, %v705
      %v738 = vpack.c.b16 %v706, %v706
      %v739 = vpack.c.b16 %v707, %v707
      %v740 = vpack.c.b16 %v708, %v708
      %v741 = vpack.c.b16 %v709, %v709
      %v742 = vpack.c.b16 %v710, %v710
      %v743 = vpack.c.b16 %v711, %v711
      %v744 = vpack.c.b16 %v712, %v712
      %v745 = vpack.c.b16 %v713, %v713
      %v746 = vpack.c.b16 %v714, %v714
      %v747 = vpack.c.b16 %v715, %v715
      %v748 = vpack.c.b16 %v716, %v716
      %v749 = vpack.c.b16 %v717, %v717
      %v750 = vpack.c.b16 %v718, %v718
      %v751 = vpack.c.b16 %v719, %v719
      %vm784 = vcmask 60416
      %785 = vst.msk [vmem:[%s199] sm:$0xf] %vm784, %v720
      %786 = vst.msk [vmem:[%s199 + $0x4] sm:$0xf] %vm784, %v721
      %787 = vst.msk [vmem:[%s199 + $0x8] sm:$0xf] %vm784, %v722
      %788 = vst.msk [vmem:[%s199 + $0xc] sm:$0xf] %vm784, %v723
      %789 = vst.msk [vmem:[%s199 + $0x10] sm:$0xf] %vm784, %v724
      %790 = vst.msk [vmem:[%s199 + $0x14] sm:$0xf] %vm784, %v725
      %791 = vst.msk [vmem:[%s199 + $0x18] sm:$0xf] %vm784, %v726
      %792 = vst.msk [vmem:[%s199 + $0x1c] sm:$0xf] %vm784, %v727
      %793 = vst.msk [vmem:[%s199 + $0x20] sm:$0xf] %vm784, %v728
      %794 = vst.msk [vmem:[%s199 + $0x24] sm:$0xf] %vm784, %v729
      %795 = vst.msk [vmem:[%s199 + $0x28] sm:$0xf] %vm784, %v730
      %796 = vst.msk [vmem:[%s199 + $0x2c] sm:$0xf] %vm784, %v731
      %797 = vst.msk [vmem:[%s199 + $0x30] sm:$0xf] %vm784, %v732
      %798 = vst.msk [vmem:[%s199 + $0x34] sm:$0xf] %vm784, %v733
      %799 = vst.msk [vmem:[%s199 + $0x38] sm:$0xf] %vm784, %v734
      %800 = vst.msk [vmem:[%s199 + $0x3c] sm:$0xf] %vm784, %v735
      %801 = vst.msk [vmem:[%s199 + $0x40] sm:$0xf] %vm784, %v736
      %802 = vst.msk [vmem:[%s199 + $0x44] sm:$0xf] %vm784, %v737
      %803 = vst.msk [vmem:[%s199 + $0x48] sm:$0xf] %vm784, %v738
      %804 = vst.msk [vmem:[%s199 + $0x4c] sm:$0xf] %vm784, %v739
      %805 = vst.msk [vmem:[%s199 + $0x50] sm:$0xf] %vm784, %v740
      %806 = vst.msk [vmem:[%s199 + $0x54] sm:$0xf] %vm784, %v741
      %807 = vst.msk [vmem:[%s199 + $0x58] sm:$0xf] %vm784, %v742
      %808 = vst.msk [vmem:[%s199 + $0x5c] sm:$0xf] %vm784, %v743
      %809 = vst.msk [vmem:[%s199 + $0x60] sm:$0xf] %vm784, %v744
      %810 = vst.msk [vmem:[%s199 + $0x64] sm:$0xf] %vm784, %v745
      %811 = vst.msk [vmem:[%s199 + $0x68] sm:$0xf] %vm784, %v746
      %812 = vst.msk [vmem:[%s199 + $0x6c] sm:$0xf] %vm784, %v747
      %813 = vst.msk [vmem:[%s199 + $0x70] sm:$0xf] %vm784, %v748
      %814 = vst.msk [vmem:[%s199 + $0x74] sm:$0xf] %vm784, %v749
      %815 = vst.msk [vmem:[%s199 + $0x78] sm:$0xf] %vm784, %v750
      %816 = vst.msk [vmem:[%s199 + $0x7c] sm:$0xf] %vm784, %v751
      %s817 = smul.u32 32, %s15
      %p818 = scmp.lt.s32.totalorder %s817, 63
      %s819 = scalar_select %p818, %s817, 63
      %s820 = smul.addr %s819, 4
      %s821 = scalar_lea.vmem %s4, %s820
      // Predicated region
      $region37: #{moco_cycle_forward.7} parent=35 // pred_check
        %p822 = pneg %p122
      $region38: #{moco_cycle_forward.7} parent=35 // pred_check_branch
        %824 = sbr.rel (%p822) target = $region40
      $region39: #{moco_cycle_forward.7} parent=35 // pred_region
        %s825 = smul.u32 32, %s15
      $region40: #{moco_cycle_forward.7} parent=35 // pred_fallthru
        _
    $region36: #{moco_cycle_forward.7} parent=5 // pred_fallthru
      _
    %p826 = scmp.le.s32.totalorder 2, %s10
    // Predicated region
    $region41: #{moco_cycle_forward.7} parent=5 // pred_check
      %p827 = pneg %p826
    $region42: #{moco_cycle_forward.7} parent=5 // pred_check_branch
      %829 = sbr.rel (%p827) target = $region44
    $region43: #{moco_cycle_forward.7} parent=5 // pred_region
      %s830 = ssub.s32 %s10, 2
      // Predicated region
      $region45: #{moco_cycle_forward.7} parent=43 // pred_check
        %p831 = pneg %p128
      $region46: #{moco_cycle_forward.7} parent=43 // pred_check_branch
        %833 = sbr.rel (%p831) target = $region48
      $region47: #{moco_cycle_forward.7} parent=43 // pred_region
        %s834 = smul.u32 32, %s16
        %p835 = scmp.lt.s32.totalorder %s834, 63
        %s836 = scalar_select %p835, %s834, 63
        %s837 = smul.addr %s836, 4
        %s838 = scalar_lea.vmem %s4, %s837
      $region48: #{moco_cycle_forward.7} parent=43 // pred_fallthru
        _
    $region44: #{moco_cycle_forward.7} parent=5 // pred_fallthru
      _
  $region6: #{moco_cycle_forward.7} parent=0 // loop_footer
    %s14 = sadd.s32 1, %s10
  $region7: #{moco_cycle_forward.7} parent=0 // loop_footer_branch
    %9 = sbr.rel target = $region3
  $region8: #{moco_cycle_forward.7} parent=0 // loop_exit
    _

// kernel: moco_cycle_forward.8
$region0: #{moco_cycle_forward.8}
  #allocation0 [shape = 'u32[]', space=smem, size = 0x4, offset = 0x4, fixed_abs, tag = 'smem constant byte address 0x4 - core index']
  #allocation1 [shape = 'u32[144,128]{1,0:T(1,128)}', space=vmem, size = 0x12000, scoped, tag = 'internal scratch']
  %s0 = inlined_call_operand.vmem [shape: bf16[128,72], index: 0, kind: input, shape index: {}]
  %s1 = inlined_call_operand.vmem [shape: bf16[72,8], index: 1, kind: input, shape index: {}]
  %s2 = inlined_call_operand.vmem [shape: f32[1,8], index: 2, kind: input, shape index: {}]
  %s3 = inlined_call_operand.vmem [shape: f32[1,8], index: 3, kind: input, shape index: {}]
  %s4 = inlined_call_operand.vmem [shape: bf16[128,8], index: 4, kind: output, shape index: {}]
  %s5 = sld [smem:[#allocation0]]
  $region49: #{moco_cycle_forward.8} parent=0
    _
  %s7 = ssub.s32 1, %s5
  %s8 = scalar_select 0, %s7, %s5
  loop: start=0, step=1, limit=4
  $region2: #{moco_cycle_forward.8} parent=0 // loop_pre_header
    _
  $region3: #{moco_cycle_forward.8} parent=0 // loop_header
    %s10 = sphi 0, %s14
    %p11 = scmp.ge.s32.totalorder %s10, 4
    %s20 = sphi 0, %s22
    %s23 = sphi 0, %s20
    %s24 = sphi 0, %s23
    %s40 = sphi 0, %s24
    %s44 = sphi 0, %s44
    %s46 = sphi 0, %s44
    %s47 = sphi 0, %s46
    %s61 = sphi 0, %s47
    %s65 = sphi 0, %s65
    %s67 = sphi 0, %s65
    %s68 = sphi 0, %s67
    %s82 = sphi 0, %s68
    %s86 = sphi 0, %s86
    %s88 = sphi 0, %s86
    %s89 = sphi 0, %s88
    %s103 = sphi 0, %s89
    %s109 = sphi 0, %s111
    %s112 = sphi 0, %s109
    %s113 = sphi 0, %s112
    %s129 = sphi 0, %s113
  $region4: #{moco_cycle_forward.8} parent=0 // loop_header_branch
    %13 = sbr.rel (%p11) target = $region8
  $region5: #{moco_cycle_forward.8} parent=0 // loop_body
    %s15 = ssub.s32 %s10, 1
    %s16 = ssub.s32 %s10, 2
    %s17 = sadd.s32 %s10, 1
    %s18 = ssub.s32 %s10, %s17
    %p19 = scmp.eq.s32.totalorder %s18, 0
    %s21 = sadd.s32 %s20, 1
    %s22 = scalar_select %p19, %s20, %s21
    %p25 = pneg %p19
    %p26 = scmp.eq.s32.totalorder %s10, 1
    %p27 = por %p25, %p26
    %p28 = scmp.ne.s32.totalorder %s20, %s23
    %p29 = scmp.eq.s32.totalorder %s10, 0
    %p30 = por %p28, %p29
    %p31 = scmp.ne.s32.totalorder %s20, %s23
    %p32 = scmp.eq.s32.totalorder %s15, 1
    %p33 = por %p31, %p32
    %p34 = scmp.ne.s32.totalorder %s23, %s24
    %p35 = scmp.eq.s32.totalorder %s15, 0
    %p36 = por %p34, %p35
    %p37 = scmp.ne.s32.totalorder %s23, %s24
    %p38 = scmp.eq.s32.totalorder %s16, 1
    %p39 = por %p37, %p38
    %p41 = scmp.ne.s32.totalorder %s24, %s40
    %p42 = scmp.eq.s32.totalorder %s16, 0
    %p43 = por %p41, %p42
    %s45 = sadd.s32 %s44, 1
    %p48 = scmp.eq.s32.totalorder %s10, 1
    %p49 = scmp.ne.s32.totalorder %s44, %s46
    %p50 = scmp.eq.s32.totalorder %s10, 0
    %p51 = por %p49, %p50
    %p52 = scmp.ne.s32.totalorder %s44, %s46
    %p53 = scmp.eq.s32.totalorder %s15, 1
    %p54 = por %p52, %p53
    %p55 = scmp.ne.s32.totalorder %s46, %s47
    %p56 = scmp.eq.s32.totalorder %s15, 0
    %p57 = por %p55, %p56
    %p58 = scmp.ne.s32.totalorder %s46, %s47
    %p59 = scmp.eq.s32.totalorder %s16, 1
    %p60 = por %p58, %p59
    %p62 = scmp.ne.s32.totalorder %s47, %s61
    %p63 = scmp.eq.s32.totalorder %s16, 0
    %p64 = por %p62, %p63
    %s66 = sadd.s32 %s65, 1
    %p69 = scmp.eq.s32.totalorder %s10, 1
    %p70 = scmp.ne.s32.totalorder %s65, %s67
    %p71 = scmp.eq.s32.totalorder %s10, 0
    %p72 = por %p70, %p71
    %p73 = scmp.ne.s32.totalorder %s65, %s67
    %p74 = scmp.eq.s32.totalorder %s15, 1
    %p75 = por %p73, %p74
    %p76 = scmp.ne.s32.totalorder %s67, %s68
    %p77 = scmp.eq.s32.totalorder %s15, 0
    %p78 = por %p76, %p77
    %p79 = scmp.ne.s32.totalorder %s67, %s68
    %p80 = scmp.eq.s32.totalorder %s16, 1
    %p81 = por %p79, %p80
    %p83 = scmp.ne.s32.totalorder %s68, %s82
    %p84 = scmp.eq.s32.totalorder %s16, 0
    %p85 = por %p83, %p84
    %s87 = sadd.s32 %s86, 1
    %p90 = scmp.eq.s32.totalorder %s10, 1
    %p91 = scmp.ne.s32.totalorder %s86, %s88
    %p92 = scmp.eq.s32.totalorder %s10, 0
    %p93 = por %p91, %p92
    %p94 = scmp.ne.s32.totalorder %s86, %s88
    %p95 = scmp.eq.s32.totalorder %s15, 1
    %p96 = por %p94, %p95
    %p97 = scmp.ne.s32.totalorder %s88, %s89
    %p98 = scmp.eq.s32.totalorder %s15, 0
    %p99 = por %p97, %p98
    %p100 = scmp.ne.s32.totalorder %s88, %s89
    %p101 = scmp.eq.s32.totalorder %s16, 1
    %p102 = por %p100, %p101
    %p104 = scmp.ne.s32.totalorder %s89, %s103
    %p105 = scmp.eq.s32.totalorder %s16, 0
    %p106 = por %p104, %p105
    %s107 = ssub.s32 %s10, %s17
    %p108 = scmp.eq.s32.totalorder %s107, 0
    %s110 = sadd.s32 %s109, 1
    %s111 = scalar_select %p108, %s109, %s110
    %p114 = pneg %p108
    %p115 = scmp.eq.s32.totalorder %s10, 1
    %p116 = por %p114, %p115
    %p117 = scmp.ne.s32.totalorder %s109, %s112
    %p118 = scmp.eq.s32.totalorder %s10, 0
    %p119 = por %p117, %p118
    %p120 = scmp.ne.s32.totalorder %s109, %s112
    %p121 = scmp.eq.s32.totalorder %s15, 1
    %p122 = por %p120, %p121
    %p123 = scmp.ne.s32.totalorder %s112, %s113
    %p124 = scmp.eq.s32.totalorder %s15, 0
    %p125 = por %p123, %p124
    %p126 = scmp.ne.s32.totalorder %s112, %s113
    %p127 = scmp.eq.s32.totalorder %s16, 1
    %p128 = por %p126, %p127
    %p130 = scmp.ne.s32.totalorder %s113, %s129
    %p131 = scmp.eq.s32.totalorder %s16, 0
    %p132 = por %p130, %p131
    %p133 = scmp.le.s32.totalorder 1, %s10
    %p134 = scmp.lt.s32.totalorder %s10, 3
    %p135 = pnand %p133, %p134
    %p136 = pneg %p135
    // Predicated region
    $region9: #{moco_cycle_forward.8} parent=5 // pred_check
      _
    $region10: #{moco_cycle_forward.8} parent=5 // pred_check_branch
      %138 = sbr.rel (%p135) target = $region12
    $region11: #{moco_cycle_forward.8} parent=5 // pred_region
      %s139 = ssub.s32 %s10, 1
      // Predicated region
      $region13: #{moco_cycle_forward.8} parent=11 // pred_check
        %p140 = pneg %p57
      $region14: #{moco_cycle_forward.8} parent=11 // pred_check_branch
        %142 = sbr.rel (%p140) target = $region16
      $region15: #{moco_cycle_forward.8} parent=11 // pred_region
        _
      $region16: #{moco_cycle_forward.8} parent=11 // pred_fallthru
        _
      // Predicated region
      $region17: #{moco_cycle_forward.8} parent=11 // pred_check
        %p143 = pneg %p78
      $region18: #{moco_cycle_forward.8} parent=11 // pred_check_branch
        %145 = sbr.rel (%p143) target = $region20
      $region19: #{moco_cycle_forward.8} parent=11 // pred_region
        _
      $region20: #{moco_cycle_forward.8} parent=11 // pred_fallthru
        _
      // Predicated region
      $region21: #{moco_cycle_forward.8} parent=11 // pred_check
        %p146 = pneg %p99
      $region22: #{moco_cycle_forward.8} parent=11 // pred_check_branch
        %148 = sbr.rel (%p146) target = $region24
      $region23: #{moco_cycle_forward.8} parent=11 // pred_region
        _
      $region24: #{moco_cycle_forward.8} parent=11 // pred_fallthru
        _
    $region12: #{moco_cycle_forward.8} parent=5 // pred_fallthru
      _
    %p149 = scmp.lt.s32.totalorder %s10, 2
    // Predicated region
    $region25: #{moco_cycle_forward.8} parent=5 // pred_check
      %p150 = pneg %p149
    $region26: #{moco_cycle_forward.8} parent=5 // pred_check_branch
      %152 = sbr.rel (%p150) target = $region28
    $region27: #{moco_cycle_forward.8} parent=5 // pred_region
      // Predicated region
      $region29: #{moco_cycle_forward.8} parent=27 // pred_check
        %p153 = pneg %p30
      $region30: #{moco_cycle_forward.8} parent=27 // pred_check_branch
        %155 = sbr.rel (%p153) target = $region32
      $region31: #{moco_cycle_forward.8} parent=27 // pred_region
        %s156 = smul.u32 8, %s10
        %p157 = scmp.lt.s32.totalorder %s156, 15
        %s158 = scalar_select %p157, %s156, 15
        %s159 = smul.addr %s158, 4
        %s160 = scalar_lea.vmem %s0, %s159
        %s161 = smul.u32 8, %s10
      $region32: #{moco_cycle_forward.8} parent=27 // pred_fallthru
        _
    $region28: #{moco_cycle_forward.8} parent=5 // pred_fallthru
      _
    %p162 = scmp.le.s32.totalorder 1, %s10
    %p163 = scmp.lt.s32.totalorder %s10, 3
    %p164 = pnand %p162, %p163
    %p165 = pneg %p164
    // Predicated region
    $region33: #{moco_cycle_forward.8} parent=5 // pred_check
      _
    $region34: #{moco_cycle_forward.8} parent=5 // pred_check_branch
      %167 = sbr.rel (%p164) target = $region36
    $region35: #{moco_cycle_forward.8} parent=5 // pred_region
      %s168 = ssub.s32 %s10, 1
      %s169 = smul.u32 8, %s15
      %p170 = scmp.lt.s32.totalorder %s169, 15
      %s171 = scalar_select %p170, %s169, 15
      %s172 = smul.addr %s171, 4
      %s173 = scalar_lea.vmem %s0, %s172
      %p174 = pneg %p36
      %p175 = pneg %p33
      %p176 = pneg %p57
      %p177 = pneg %p54
      %p178 = pneg %p78
      %p179 = pneg %p75
      %p180 = pneg %p99
      %p181 = pneg %p96
      %p182 = pneg %p125
      %p183 = pneg %p122
      %s184 = smul.u32 8, %s15
      %p185 = scmp.lt.s32.totalorder %s184, 15
      %s186 = scalar_select %p185, %s184, 15
      %s187 = smul.addr %s186, 4
      %s188 = scalar_lea.vmem %s4, %s187
      %s189 = smul.u32 8, %s15
      %p190 = scmp.lt.s32.totalorder %s189, 15
      %s191 = scalar_select %p190, %s189, 15
      %s192 = smul.addr %s191, 4
      %s193 = scalar_lea.vmem %s0, %s192
      %s194 = smul.u32 8, %s15
      %s195 = smul.u32 8, %s15
      %p196 = scmp.lt.s32.totalorder %s195, 15
      %s197 = scalar_select %p196, %s195, 15
      %s198 = smul.addr %s197, 4
      %s199 = scalar_lea.vmem %s4, %s198
      %s200 = smul.u32 8, %s15
      %v202 = vld [vmem:[%s193] sm:$0xf]
      %v203 = vld [vmem:[%s193 + $0x4] sm:$0xf]
      %v204 = vld [vmem:[%s193 + $0x8] sm:$0xf]
      %v205 = vld [vmem:[%s193 + $0xc] sm:$0xf]
      %v206 = vld [vmem:[%s193 + $0x10] sm:$0xf]
      %v207 = vld [vmem:[%s193 + $0x14] sm:$0xf]
      %v208 = vld [vmem:[%s193 + $0x18] sm:$0xf]
      %v209 = vld [vmem:[%s193 + $0x1c] sm:$0xf]
      %v210 = vld [vmem:[%s1] sm:$0xf]
      %v211 = vld [vmem:[%s1 + $0x4] sm:$0xf]
      %v212 = vld [vmem:[%s1 + $0x8] sm:$0xf]
      %v213 = vld [vmem:[%s1 + $0xc] sm:$0xf]
      %v214 = vld [vmem:[%s1 + $0x10] sm:$0xf]
      %v215 = vld [vmem:[%s1 + $0x14] sm:$0xf]
      %v216 = vld [vmem:[%s1 + $0x18] sm:$0xf]
      %v217 = vld [vmem:[%s1 + $0x1c] sm:$0xf]
      %v218 = vld [vmem:[%s1 + $0x20] sm:$0xf]
      %v227 = vunpack.c.l.b16 %v202
      %v228 = vunpack.c.l.b16 %v203
      %v229 = vunpack.c.l.b16 %v204
      %v230 = vunpack.c.l.b16 %v205
      %v231 = vunpack.c.l.b16 %v206
      %v232 = vunpack.c.l.b16 %v207
      %v233 = vunpack.c.l.b16 %v208
      %v234 = vunpack.c.l.b16 %v209
      %v235 = vpack.c.b16 %v228, %v227
      %v236 = vpack.c.b16 %v230, %v229
      %v237 = vpack.c.b16 %v232, %v231
      %v238 = vpack.c.b16 %v234, %v233
      %v248 = vunpack.c.l.b16 %v210
      %v249 = vunpack.c.l.b16 %v211
      %v250 = vunpack.c.l.b16 %v212
      %v251 = vunpack.c.l.b16 %v213
      %v252 = vunpack.c.l.b16 %v214
      %v253 = vunpack.c.l.b16 %v215
      %v254 = vunpack.c.l.b16 %v216
      %v255 = vunpack.c.l.b16 %v217
      %v256 = vunpack.c.l.b16 %v218
      %v257 = vpack.c.b16 %v249, %v248
      %v258 = vpack.c.b16 %v251, %v250
      %v259 = vpack.c.b16 %v253, %v252
      %v260 = vpack.c.b16 %v255, %v254
      %v261 = vpack.c.b16 %v256, %v256
      %vm266 = vcmask 588800
      %v268 = vsel %vm266, %v235, 0
      %v271 = vsel %vm266, %v236, 0
      %v274 = vsel %vm266, %v237, 0
      %v277 = vsel %vm266, %v238, 0
      %vm279 = vcmask 1043456
      %v281 = vsel %vm279, %v261, 0
      %283 = vmatprep.subr.bf16.mxu0 0
      %284 = vmatpush1.bf16.msra.mxu0 0
      %285 = vmatprep.subr.bf16.mxu0 0
      %286 = vmatpush1.bf16.msra.mxu0 0
      %287 = vmatprep.subr.bf16.mxu0 0
      %288 = vmatpush1.bf16.msra.mxu0 0
      %289 = vmatprep.subr.bf16.mxu0 0
      %290 = vmatpush1.bf16.msra.mxu0 %v281
      %291 = vmatprep.subr.bf16.mxu0 0
      %292 = vmatpush1.bf16.msra.mxu0 %v260
      %293 = vmatprep.subr.bf16.mxu0 0
      %294 = vmatpush1.bf16.msra.mxu0 %v259
      %295 = vmatprep.subr.bf16.mxu0 0
      %296 = vmatpush1.bf16.msra.mxu0 %v258
      %297 = vmatprep.subr.bf16.mxu0 0
      %298 = vmatpush1.bf16.msra.mxu0 %v257
      %299 = vmatprep.subr.bf16.mxu0 0
      %300 = vmatpush2.bf16.msra.mxu0 0
      %301 = vmatprep.subr.bf16.mxu0 0
      %302 = vmatpush2.bf16.msra.mxu0 0
      %303 = vmatprep.subr.bf16.mxu0 0
      %304 = vmatpush2.bf16.msra.mxu0 0
      %305 = vmatprep.subr.bf16.mxu0 0
      %306 = vmatpush2.bf16.msra.mxu0 0
      %307 = vmatprep.subr.bf16.mxu0 0
      %308 = vmatpush2.bf16.msra.mxu0 0
      %309 = vmatprep.subr.bf16.mxu0 0
      %310 = vmatpush2.bf16.msra.mxu0 0
      %311 = vmatprep.subr.bf16.mxu0 0
      %312 = vmatpush2.bf16.msra.mxu0 0
      %313 = vmatprep.subr.bf16.mxu0 0
      %314 = vmatpush2.bf16.msra.mxu0 0
      %315 = vmatprep.mubr.bf16.mxu0 0
      %316 = vmatmul.mubr.bf16.gmra.mxu0 %v268
      %v317 = vpop.f32.mrf.mxu0
      %v318 = vadd.f32 0.0, %v317
      %v319 = vpop.f32.mrf.mxu0
      %v320 = vpop.f32.mrf.mxu0
      %v321 = vadd.f32 0.0, %v320
      %v322 = vpop.f32.mrf.mxu0
      %323 = vmatprep.mubr.bf16.mxu0 0
      %324 = vmatmul.mubr.bf16.gmra.mxu0 %v271
      %v325 = vpop.f32.mrf.mxu0
      %v326 = vadd.f32 0.0, %v325
      %v327 = vpop.f32.mrf.mxu0
      %v328 = vpop.f32.mrf.mxu0
      %v329 = vadd.f32 0.0, %v328
      %v330 = vpop.f32.mrf.mxu0
      %331 = vmatprep.mubr.bf16.mxu0 0
      %332 = vmatmul.mubr.bf16.gmra.mxu0 %v274
      %v333 = vpop.f32.mrf.mxu0
      %v334 = vadd.f32 0.0, %v333
      %v335 = vpop.f32.mrf.mxu0
      %v336 = vpop.f32.mrf.mxu0
      %v337 = vadd.f32 0.0, %v336
      %v338 = vpop.f32.mrf.mxu0
      %339 = vmatprep.mubr.bf16.mxu0 0
      %340 = vmatmul.mubr.bf16.gmra.mxu0 %v277
      %v341 = vpop.f32.mrf.mxu0
      %v342 = vadd.f32 0.0, %v341
      %v343 = vpop.f32.mrf.mxu0
      %v344 = vpop.f32.mrf.mxu0
      %v345 = vadd.f32 0.0, %v344
      %v346 = vpop.f32.mrf.mxu0
      %347 = vdwg.mxu0
      %v348 = vld [vmem:[%s2] sm:$0x1]
      %v350 = vlaneseq
      %v351 = vshrl.u32 %v350, 7
      %v352 = vsub.s32 0, %v351
      %v353 = vrot.slane %v348, %v352
      %v355 = vmul.f32 %v318, %v353
      %v356 = vmul.f32 %v321, %v353
      %v357 = vmul.f32 %v326, %v353
      %v358 = vmul.f32 %v329, %v353
      %v359 = vmul.f32 %v334, %v353
      %v360 = vmul.f32 %v337, %v353
      %v361 = vmul.f32 %v342, %v353
      %v362 = vmul.f32 %v345, %v353
      %v363 = vld [vmem:[%s3] sm:$0x1]
      %v365 = vlaneseq
      %v366 = vshrl.u32 %v365, 7
      %v367 = vsub.s32 0, %v366
      %v368 = vrot.slane %v363, %v367
      %v370 = vadd.f32 %v355, %v368
      %v371 = vadd.f32 %v356, %v368
      %v372 = vadd.f32 %v357, %v368
      %v373 = vadd.f32 %v358, %v368
      %v374 = vadd.f32 %v359, %v368
      %v375 = vadd.f32 %v360, %v368
      %v376 = vadd.f32 %v361, %v368
      %v377 = vadd.f32 %v362, %v368
      %v378 = vmax.f32 %v370, 0.0
      %v379 = vmax.f32 %v371, 0.0
      %v380 = vmax.f32 %v372, 0.0
      %v381 = vmax.f32 %v373, 0.0
      %v382 = vmax.f32 %v374, 0.0
      %v383 = vmax.f32 %v375, 0.0
      %v384 = vmax.f32 %v376, 0.0
      %v385 = vmax.f32 %v377, 0.0
      %v386 = vpack.c.bf16 %v379, %v378
      %v387 = vpack.c.bf16 %v381, %v380
      %v388 = vpack.c.bf16 %v383, %v382
      %v389 = vpack.c.bf16 %v385, %v384
      %v394 = vunpack.c.l.b16 %v386
      %v395 = vunpack.c.h.b16 %v386
      %v396 = vunpack.c.l.b16 %v387
      %v397 = vunpack.c.h.b16 %v387
      %v398 = vunpack.c.l.b16 %v388
      %v399 = vunpack.c.h.b16 %v388
      %v400 = vunpack.c.l.b16 %v389
      %v401 = vunpack.c.h.b16 %v389
      %v402 = vpack.c.b16 %v394, %v394
      %v403 = vpack.c.b16 %v395, %v395
      %v404 = vpack.c.b16 %v396, %v396
      %v405 = vpack.c.b16 %v397, %v397
      %v406 = vpack.c.b16 %v398, %v398
      %v407 = vpack.c.b16 %v399, %v399
      %v408 = vpack.c.b16 %v400, %v400
      %v409 = vpack.c.b16 %v401, %v401
      %vm418 = vcmask 60416
      %419 = vst.msk [vmem:[%s199] sm:$0xf] %vm418, %v402
      %420 = vst.msk [vmem:[%s199 + $0x4] sm:$0xf] %vm418, %v403
      %421 = vst.msk [vmem:[%s199 + $0x8] sm:$0xf] %vm418, %v404
      %422 = vst.msk [vmem:[%s199 + $0xc] sm:$0xf] %vm418, %v405
      %423 = vst.msk [vmem:[%s199 + $0x10] sm:$0xf] %vm418, %v406
      %424 = vst.msk [vmem:[%s199 + $0x14] sm:$0xf] %vm418, %v407
      %425 = vst.msk [vmem:[%s199 + $0x18] sm:$0xf] %vm418, %v408
      %426 = vst.msk [vmem:[%s199 + $0x1c] sm:$0xf] %vm418, %v409
      %s427 = smul.u32 8, %s15
      %p428 = scmp.lt.s32.totalorder %s427, 15
      %s429 = scalar_select %p428, %s427, 15
      %s430 = smul.addr %s429, 4
      %s431 = scalar_lea.vmem %s4, %s430
      // Predicated region
      $region37: #{moco_cycle_forward.8} parent=35 // pred_check
        %p432 = pneg %p122
      $region38: #{moco_cycle_forward.8} parent=35 // pred_check_branch
        %434 = sbr.rel (%p432) target = $region40
      $region39: #{moco_cycle_forward.8} parent=35 // pred_region
        %s435 = smul.u32 8, %s15
      $region40: #{moco_cycle_forward.8} parent=35 // pred_fallthru
        _
    $region36: #{moco_cycle_forward.8} parent=5 // pred_fallthru
      _
    %p436 = scmp.le.s32.totalorder 2, %s10
    // Predicated region
    $region41: #{moco_cycle_forward.8} parent=5 // pred_check
      %p437 = pneg %p436
    $region42: #{moco_cycle_forward.8} parent=5 // pred_check_branch
      %439 = sbr.rel (%p437) target = $region44
    $region43: #{moco_cycle_forward.8} parent=5 // pred_region
      %s440 = ssub.s32 %s10, 2
      // Predicated region
      $region45: #{moco_cycle_forward.8} parent=43 // pred_check
        %p441 = pneg %p128
      $region46: #{moco_cycle_forward.8} parent=43 // pred_check_branch
        %443 = sbr.rel (%p441) target = $region48
      $region47: #{moco_cycle_forward.8} parent=43 // pred_region
        %s444 = smul.u32 8, %s16
        %p445 = scmp.lt.s32.totalorder %s444, 15
        %s446 = scalar_select %p445, %s444, 15
        %s447 = smul.addr %s446, 4
        %s448 = scalar_lea.vmem %s4, %s447
      $region48: #{moco_cycle_forward.8} parent=43 // pred_fallthru
        _
    $region44: #{moco_cycle_forward.8} parent=5 // pred_fallthru
      _
  $region6: #{moco_cycle_forward.8} parent=0 // loop_footer
    %s14 = sadd.s32 1, %s10
  $region7: #{moco_cycle_forward.8} parent=0 // loop_footer_branch
    %9 = sbr.rel target = $region3
  $region8: #{moco_cycle_forward.8} parent=0 // loop_exit
    _

// kernel: moco_cycle_forward.9
$region0: #{moco_cycle_forward.9}
  #allocation0 [shape = 'u32[]', space=smem, size = 0x4, offset = 0x4, fixed_abs, tag = 'smem constant byte address 0x4 - core index']
  #allocation1 [shape = 'u32[144,128]{1,0:T(1,128)}', space=vmem, size = 0x12000, scoped, tag = 'internal scratch']
  %s0 = inlined_call_operand.vmem [shape: bf16[32,72], index: 0, kind: input, shape index: {}]
  %s1 = inlined_call_operand.vmem [shape: bf16[72,16], index: 1, kind: input, shape index: {}]
  %s2 = inlined_call_operand.vmem [shape: f32[1,16], index: 2, kind: input, shape index: {}]
  %s3 = inlined_call_operand.vmem [shape: f32[1,16], index: 3, kind: input, shape index: {}]
  %s4 = inlined_call_operand.vmem [shape: bf16[32,16], index: 4, kind: output, shape index: {}]
  %s5 = sld [smem:[#allocation0]]
  $region49: #{moco_cycle_forward.9} parent=0
    _
  %s7 = ssub.s32 1, %s5
  %s8 = scalar_select 0, %s7, %s5
  loop: start=0, step=1, limit=4
  $region2: #{moco_cycle_forward.9} parent=0 // loop_pre_header
    _
  $region3: #{moco_cycle_forward.9} parent=0 // loop_header
    %s10 = sphi 0, %s14
    %p11 = scmp.ge.s32.totalorder %s10, 4
    %s20 = sphi 0, %s22
    %s23 = sphi 0, %s20
    %s24 = sphi 0, %s23
    %s40 = sphi 0, %s24
    %s44 = sphi 0, %s44
    %s46 = sphi 0, %s44
    %s47 = sphi 0, %s46
    %s61 = sphi 0, %s47
    %s65 = sphi 0, %s65
    %s67 = sphi 0, %s65
    %s68 = sphi 0, %s67
    %s82 = sphi 0, %s68
    %s86 = sphi 0, %s86
    %s88 = sphi 0, %s86
    %s89 = sphi 0, %s88
    %s103 = sphi 0, %s89
    %s109 = sphi 0, %s111
    %s112 = sphi 0, %s109
    %s113 = sphi 0, %s112
    %s129 = sphi 0, %s113
  $region4: #{moco_cycle_forward.9} parent=0 // loop_header_branch
    %13 = sbr.rel (%p11) target = $region8
  $region5: #{moco_cycle_forward.9} parent=0 // loop_body
    %s15 = ssub.s32 %s10, 1
    %s16 = ssub.s32 %s10, 2
    %s17 = sadd.s32 %s10, 1
    %s18 = ssub.s32 %s10, %s17
    %p19 = scmp.eq.s32.totalorder %s18, 0
    %s21 = sadd.s32 %s20, 1
    %s22 = scalar_select %p19, %s20, %s21
    %p25 = pneg %p19
    %p26 = scmp.eq.s32.totalorder %s10, 1
    %p27 = por %p25, %p26
    %p28 = scmp.ne.s32.totalorder %s20, %s23
    %p29 = scmp.eq.s32.totalorder %s10, 0
    %p30 = por %p28, %p29
    %p31 = scmp.ne.s32.totalorder %s20, %s23
    %p32 = scmp.eq.s32.totalorder %s15, 1
    %p33 = por %p31, %p32
    %p34 = scmp.ne.s32.totalorder %s23, %s24
    %p35 = scmp.eq.s32.totalorder %s15, 0
    %p36 = por %p34, %p35
    %p37 = scmp.ne.s32.totalorder %s23, %s24
    %p38 = scmp.eq.s32.totalorder %s16, 1
    %p39 = por %p37, %p38
    %p41 = scmp.ne.s32.totalorder %s24, %s40
    %p42 = scmp.eq.s32.totalorder %s16, 0
    %p43 = por %p41, %p42
    %s45 = sadd.s32 %s44, 1
    %p48 = scmp.eq.s32.totalorder %s10, 1
    %p49 = scmp.ne.s32.totalorder %s44, %s46
    %p50 = scmp.eq.s32.totalorder %s10, 0
    %p51 = por %p49, %p50
    %p52 = scmp.ne.s32.totalorder %s44, %s46
    %p53 = scmp.eq.s32.totalorder %s15, 1
    %p54 = por %p52, %p53
    %p55 = scmp.ne.s32.totalorder %s46, %s47
    %p56 = scmp.eq.s32.totalorder %s15, 0
    %p57 = por %p55, %p56
    %p58 = scmp.ne.s32.totalorder %s46, %s47
    %p59 = scmp.eq.s32.totalorder %s16, 1
    %p60 = por %p58, %p59
    %p62 = scmp.ne.s32.totalorder %s47, %s61
    %p63 = scmp.eq.s32.totalorder %s16, 0
    %p64 = por %p62, %p63
    %s66 = sadd.s32 %s65, 1
    %p69 = scmp.eq.s32.totalorder %s10, 1
    %p70 = scmp.ne.s32.totalorder %s65, %s67
    %p71 = scmp.eq.s32.totalorder %s10, 0
    %p72 = por %p70, %p71
    %p73 = scmp.ne.s32.totalorder %s65, %s67
    %p74 = scmp.eq.s32.totalorder %s15, 1
    %p75 = por %p73, %p74
    %p76 = scmp.ne.s32.totalorder %s67, %s68
    %p77 = scmp.eq.s32.totalorder %s15, 0
    %p78 = por %p76, %p77
    %p79 = scmp.ne.s32.totalorder %s67, %s68
    %p80 = scmp.eq.s32.totalorder %s16, 1
    %p81 = por %p79, %p80
    %p83 = scmp.ne.s32.totalorder %s68, %s82
    %p84 = scmp.eq.s32.totalorder %s16, 0
    %p85 = por %p83, %p84
    %s87 = sadd.s32 %s86, 1
    %p90 = scmp.eq.s32.totalorder %s10, 1
    %p91 = scmp.ne.s32.totalorder %s86, %s88
    %p92 = scmp.eq.s32.totalorder %s10, 0
    %p93 = por %p91, %p92
    %p94 = scmp.ne.s32.totalorder %s86, %s88
    %p95 = scmp.eq.s32.totalorder %s15, 1
    %p96 = por %p94, %p95
    %p97 = scmp.ne.s32.totalorder %s88, %s89
    %p98 = scmp.eq.s32.totalorder %s15, 0
    %p99 = por %p97, %p98
    %p100 = scmp.ne.s32.totalorder %s88, %s89
    %p101 = scmp.eq.s32.totalorder %s16, 1
    %p102 = por %p100, %p101
    %p104 = scmp.ne.s32.totalorder %s89, %s103
    %p105 = scmp.eq.s32.totalorder %s16, 0
    %p106 = por %p104, %p105
    %s107 = ssub.s32 %s10, %s17
    %p108 = scmp.eq.s32.totalorder %s107, 0
    %s110 = sadd.s32 %s109, 1
    %s111 = scalar_select %p108, %s109, %s110
    %p114 = pneg %p108
    %p115 = scmp.eq.s32.totalorder %s10, 1
    %p116 = por %p114, %p115
    %p117 = scmp.ne.s32.totalorder %s109, %s112
    %p118 = scmp.eq.s32.totalorder %s10, 0
    %p119 = por %p117, %p118
    %p120 = scmp.ne.s32.totalorder %s109, %s112
    %p121 = scmp.eq.s32.totalorder %s15, 1
    %p122 = por %p120, %p121
    %p123 = scmp.ne.s32.totalorder %s112, %s113
    %p124 = scmp.eq.s32.totalorder %s15, 0
    %p125 = por %p123, %p124
    %p126 = scmp.ne.s32.totalorder %s112, %s113
    %p127 = scmp.eq.s32.totalorder %s16, 1
    %p128 = por %p126, %p127
    %p130 = scmp.ne.s32.totalorder %s113, %s129
    %p131 = scmp.eq.s32.totalorder %s16, 0
    %p132 = por %p130, %p131
    %p133 = scmp.le.s32.totalorder 1, %s10
    %p134 = scmp.lt.s32.totalorder %s10, 3
    %p135 = pnand %p133, %p134
    %p136 = pneg %p135
    // Predicated region
    $region9: #{moco_cycle_forward.9} parent=5 // pred_check
      _
    $region10: #{moco_cycle_forward.9} parent=5 // pred_check_branch
      %138 = sbr.rel (%p135) target = $region12
    $region11: #{moco_cycle_forward.9} parent=5 // pred_region
      %s139 = ssub.s32 %s10, 1
      // Predicated region
      $region13: #{moco_cycle_forward.9} parent=11 // pred_check
        %p140 = pneg %p57
      $region14: #{moco_cycle_forward.9} parent=11 // pred_check_branch
        %142 = sbr.rel (%p140) target = $region16
      $region15: #{moco_cycle_forward.9} parent=11 // pred_region
        _
      $region16: #{moco_cycle_forward.9} parent=11 // pred_fallthru
        _
      // Predicated region
      $region17: #{moco_cycle_forward.9} parent=11 // pred_check
        %p143 = pneg %p78
      $region18: #{moco_cycle_forward.9} parent=11 // pred_check_branch
        %145 = sbr.rel (%p143) target = $region20
      $region19: #{moco_cycle_forward.9} parent=11 // pred_region
        _
      $region20: #{moco_cycle_forward.9} parent=11 // pred_fallthru
        _
      // Predicated region
      $region21: #{moco_cycle_forward.9} parent=11 // pred_check
        %p146 = pneg %p99
      $region22: #{moco_cycle_forward.9} parent=11 // pred_check_branch
        %148 = sbr.rel (%p146) target = $region24
      $region23: #{moco_cycle_forward.9} parent=11 // pred_region
        _
      $region24: #{moco_cycle_forward.9} parent=11 // pred_fallthru
        _
    $region12: #{moco_cycle_forward.9} parent=5 // pred_fallthru
      _
    %p149 = scmp.lt.s32.totalorder %s10, 2
    // Predicated region
    $region25: #{moco_cycle_forward.9} parent=5 // pred_check
      %p150 = pneg %p149
    $region26: #{moco_cycle_forward.9} parent=5 // pred_check_branch
      %152 = sbr.rel (%p150) target = $region28
    $region27: #{moco_cycle_forward.9} parent=5 // pred_region
      // Predicated region
      $region29: #{moco_cycle_forward.9} parent=27 // pred_check
        %p153 = pneg %p30
      $region30: #{moco_cycle_forward.9} parent=27 // pred_check_branch
        %155 = sbr.rel (%p153) target = $region32
      $region31: #{moco_cycle_forward.9} parent=27 // pred_region
        %s156 = smul.u32 2, %s10
        %p157 = scmp.lt.s32.totalorder %s156, 3
        %s158 = scalar_select %p157, %s156, 3
        %s159 = smul.addr %s158, 4
        %s160 = scalar_lea.vmem %s0, %s159
        %s161 = smul.u32 2, %s10
      $region32: #{moco_cycle_forward.9} parent=27 // pred_fallthru
        _
    $region28: #{moco_cycle_forward.9} parent=5 // pred_fallthru
      _
    %p162 = scmp.le.s32.totalorder 1, %s10
    %p163 = scmp.lt.s32.totalorder %s10, 3
    %p164 = pnand %p162, %p163
    %p165 = pneg %p164
    // Predicated region
    $region33: #{moco_cycle_forward.9} parent=5 // pred_check
      _
    $region34: #{moco_cycle_forward.9} parent=5 // pred_check_branch
      %167 = sbr.rel (%p164) target = $region36
    $region35: #{moco_cycle_forward.9} parent=5 // pred_region
      %s168 = ssub.s32 %s10, 1
      %s169 = smul.u32 2, %s15
      %p170 = scmp.lt.s32.totalorder %s169, 3
      %s171 = scalar_select %p170, %s169, 3
      %s172 = smul.addr %s171, 4
      %s173 = scalar_lea.vmem %s0, %s172
      %p174 = pneg %p36
      %p175 = pneg %p33
      %p176 = pneg %p57
      %p177 = pneg %p54
      %p178 = pneg %p78
      %p179 = pneg %p75
      %p180 = pneg %p99
      %p181 = pneg %p96
      %p182 = pneg %p125
      %p183 = pneg %p122
      %s184 = smul.u32 2, %s15
      %p185 = scmp.lt.s32.totalorder %s184, 3
      %s186 = scalar_select %p185, %s184, 3
      %s187 = smul.addr %s186, 4
      %s188 = scalar_lea.vmem %s4, %s187
      %s189 = smul.u32 2, %s15
      %p190 = scmp.lt.s32.totalorder %s189, 3
      %s191 = scalar_select %p190, %s189, 3
      %s192 = smul.addr %s191, 4
      %s193 = scalar_lea.vmem %s0, %s192
      %s194 = smul.u32 2, %s15
      %s195 = smul.u32 2, %s15
      %p196 = scmp.lt.s32.totalorder %s195, 3
      %s197 = scalar_select %p196, %s195, 3
      %s198 = smul.addr %s197, 4
      %s199 = scalar_lea.vmem %s4, %s198
      %s200 = smul.u32 2, %s15
      %v202 = vld [vmem:[%s193] sm:$0xf]
      %v203 = vld [vmem:[%s193 + $0x4] sm:$0xf]
      %v204 = vld [vmem:[%s1] sm:$0xf]
      %v205 = vld [vmem:[%s1 + $0x4] sm:$0xf]
      %v206 = vld [vmem:[%s1 + $0x8] sm:$0xf]
      %v207 = vld [vmem:[%s1 + $0xc] sm:$0xf]
      %v208 = vld [vmem:[%s1 + $0x10] sm:$0xf]
      %v209 = vld [vmem:[%s1 + $0x14] sm:$0xf]
      %v210 = vld [vmem:[%s1 + $0x18] sm:$0xf]
      %v211 = vld [vmem:[%s1 + $0x1c] sm:$0xf]
      %v212 = vld [vmem:[%s1 + $0x20] sm:$0xf]
      %v215 = vunpack.c.l.b16 %v202
      %v216 = vunpack.c.l.b16 %v203
      %v217 = vpack.c.b16 %v216, %v215
      %v227 = vunpack.c.l.b16 %v204
      %v228 = vunpack.c.l.b16 %v205
      %v229 = vunpack.c.l.b16 %v206
      %v230 = vunpack.c.l.b16 %v207
      %v231 = vunpack.c.l.b16 %v208
      %v232 = vunpack.c.l.b16 %v209
      %v233 = vunpack.c.l.b16 %v210
      %v234 = vunpack.c.l.b16 %v211
      %v235 = vunpack.c.l.b16 %v212
      %v236 = vpack.c.b16 %v228, %v227
      %v237 = vpack.c.b16 %v230, %v229
      %v238 = vpack.c.b16 %v232, %v231
      %v239 = vpack.c.b16 %v234, %v233
      %v240 = vpack.c.b16 %v235, %v235
      %vm245 = vcmask 588800
      %v247 = vsel %vm245, %v217, 0
      %vm249 = vcmask 1043456
      %v251 = vsel %vm249, %v240, 0
      %253 = vmatprep.subr.bf16.mxu0 0
      %254 = vmatpush1.bf16.msra.mxu0 0
      %255 = vmatprep.subr.bf16.mxu0 0
      %256 = vmatpush1.bf16.msra.mxu0 0
      %257 = vmatprep.subr.bf16.mxu0 0
      %258 = vmatpush1.bf16.msra.mxu0 0
      %259 = vmatprep.subr.bf16.mxu0 0
      %260 = vmatpush1.bf16.msra.mxu0 %v251
      %261 = vmatprep.subr.bf16.mxu0 0
      %262 = vmatpush1.bf16.msra.mxu0 %v239
      %263 = vmatprep.subr.bf16.mxu0 0
      %264 = vmatpush1.bf16.msra.mxu0 %v238
      %265 = vmatprep.subr.bf16.mxu0 0
      %266 = vmatpush1.bf16.msra.mxu0 %v237
      %267 = vmatprep.subr.bf16.mxu0 0
      %268 = vmatpush1.bf16.msra.mxu0 %v236
      %269 = vmatprep.subr.bf16.mxu0 0
      %270 = vmatpush2.bf16.msra.mxu0 0
      %271 = vmatprep.subr.bf16.mxu0 0
      %272 = vmatpush2.bf16.msra.mxu0 0
      %273 = vmatprep.subr.bf16.mxu0 0
      %274 = vmatpush2.bf16.msra.mxu0 0
      %275 = vmatprep.subr.bf16.mxu0 0
      %276 = vmatpush2.bf16.msra.mxu0 0
      %277 = vmatprep.subr.bf16.mxu0 0
      %278 = vmatpush2.bf16.msra.mxu0 0
      %279 = vmatprep.subr.bf16.mxu0 0
      %280 = vmatpush2.bf16.msra.mxu0 0
      %281 = vmatprep.subr.bf16.mxu0 0
      %282 = vmatpush2.bf16.msra.mxu0 0
      %283 = vmatprep.subr.bf16.mxu0 0
      %284 = vmatpush2.bf16.msra.mxu0 0
      %285 = vmatprep.mubr.bf16.mxu0 0
      %286 = vmatmul.mubr.bf16.gmra.mxu0 %v247
      %v287 = vpop.f32.mrf.mxu0
      %v288 = vadd.f32 0.0, %v287
      %v289 = vpop.f32.mrf.mxu0
      %v290 = vpop.f32.mrf.mxu0
      %v291 = vadd.f32 0.0, %v290
      %v292 = vpop.f32.mrf.mxu0
      %293 = vdwg.mxu0
      %v294 = vld [vmem:[%s2] sm:$0x1]
      %v296 = vlaneseq
      %v297 = vshrl.u32 %v296, 7
      %v298 = vsub.s32 0, %v297
      %v299 = vrot.slane %v294, %v298
      %v301 = vmul.f32 %v288, %v299
      %v302 = vmul.f32 %v291, %v299
      %v303 = vld [vmem:[%s3] sm:$0x1]
      %v305 = vlaneseq
      %v306 = vshrl.u32 %v305, 7
      %v307 = vsub.s32 0, %v306
      %v308 = vrot.slane %v303, %v307
      %v310 = vadd.f32 %v301, %v308
      %v311 = vadd.f32 %v302, %v308
      %v312 = vmax.f32 %v310, 0.0
      %v313 = vmax.f32 %v311, 0.0
      %v314 = vpack.c.bf16 %v313, %v312
      %v316 = vunpack.c.l.b16 %v314
      %v317 = vunpack.c.h.b16 %v314
      %v318 = vpack.c.b16 %v316, %v316
      %v319 = vpack.c.b16 %v317, %v317
      %vm322 = vcmask 125952
      %323 = vst.msk [vmem:[%s199] sm:$0xf] %vm322, %v318
      %324 = vst.msk [vmem:[%s199 + $0x4] sm:$0xf] %vm322, %v319
      %s325 = smul.u32 2, %s15
      %p326 = scmp.lt.s32.totalorder %s325, 3
      %s327 = scalar_select %p326, %s325, 3
      %s328 = smul.addr %s327, 4
      %s329 = scalar_lea.vmem %s4, %s328
      // Predicated region
      $region37: #{moco_cycle_forward.9} parent=35 // pred_check
        %p330 = pneg %p122
      $region38: #{moco_cycle_forward.9} parent=35 // pred_check_branch
        %332 = sbr.rel (%p330) target = $region40
      $region39: #{moco_cycle_forward.9} parent=35 // pred_region
        %s333 = smul.u32 2, %s15
      $region40: #{moco_cycle_forward.9} parent=35 // pred_fallthru
        _
    $region36: #{moco_cycle_forward.9} parent=5 // pred_fallthru
      _
    %p334 = scmp.le.s32.totalorder 2, %s10
    // Predicated region
    $region41: #{moco_cycle_forward.9} parent=5 // pred_check
      %p335 = pneg %p334
    $region42: #{moco_cycle_forward.9} parent=5 // pred_check_branch
      %337 = sbr.rel (%p335) target = $region44
    $region43: #{moco_cycle_forward.9} parent=5 // pred_region
      %s338 = ssub.s32 %s10, 2
      // Predicated region
      $region45: #{moco_cycle_forward.9} parent=43 // pred_check
        %p339 = pneg %p128
      $region46: #{moco_cycle_forward.9} parent=43 // pred_check_branch
        %341 = sbr.rel (%p339) target = $region48
      $region47: #{moco_cycle_forward.9} parent=43 // pred_region
        %s342 = smul.u32 2, %s16
        %p343 = scmp.lt.s32.totalorder %s342, 3
        %s344 = scalar_select %p343, %s342, 3
        %s345 = smul.addr %s344, 4
        %s346 = scalar_lea.vmem %s4, %s345
      $region48: #{moco_cycle_forward.9} parent=43 // pred_fallthru
        _
    $region44: #{moco_cycle_forward.9} parent=5 // pred_fallthru
      _
  $region6: #{moco_cycle_forward.9} parent=0 // loop_footer
    %s14 = sadd.s32 1, %s10
  $region7: #{moco_cycle_forward.9} parent=0 // loop_footer_branch
    %9 = sbr.rel target = $region3
  $region8: #{moco_cycle_forward.9} parent=0 // loop_exit
    _

// kernel: moco_cycle_forward.10
$region0: #{moco_cycle_forward.10}
  #allocation0 [shape = 'u32[]', space=smem, size = 0x4, offset = 0x4, fixed_abs, tag = 'smem constant byte address 0x4 - core index']
  #allocation1 [shape = 'u32[144,128]{1,0:T(1,128)}', space=vmem, size = 0x12000, scoped, tag = 'internal scratch']
  %s0 = inlined_call_operand.vmem [shape: bf16[8,144], index: 0, kind: input, shape index: {}]
  %s1 = inlined_call_operand.vmem [shape: bf16[144,16], index: 1, kind: input, shape index: {}]
  %s2 = inlined_call_operand.vmem [shape: f32[1,16], index: 2, kind: input, shape index: {}]
  %s3 = inlined_call_operand.vmem [shape: f32[1,16], index: 3, kind: input, shape index: {}]
  %s4 = inlined_call_operand.vmem [shape: bf16[8,16], index: 4, kind: output, shape index: {}]
  %s5 = sld [smem:[#allocation0]]
  $region26: #{moco_cycle_forward.10} parent=0
    _
  %s7 = ssub.s32 1, %s5
  %s8 = scalar_select 0, %s7, %s5
  // Predicated region
  $region2: #{moco_cycle_forward.10} parent=0 // pred_check
    _
  $region3: #{moco_cycle_forward.10} parent=0 // pred_check_branch
    %10 = sbr.rel (0) target = $region5
  $region4: #{moco_cycle_forward.10} parent=0 // pred_region
    _
  $region5: #{moco_cycle_forward.10} parent=0 // pred_fallthru
    _
  // Predicated region
  $region6: #{moco_cycle_forward.10} parent=0 // pred_check
    _
  $region7: #{moco_cycle_forward.10} parent=0 // pred_check_branch
    %12 = sbr.rel (0) target = $region9
  $region8: #{moco_cycle_forward.10} parent=0 // pred_region
    _
  $region9: #{moco_cycle_forward.10} parent=0 // pred_fallthru
    _
  // Predicated region
  $region10: #{moco_cycle_forward.10} parent=0 // pred_check
    _
  $region11: #{moco_cycle_forward.10} parent=0 // pred_check_branch
    %14 = sbr.rel (0) target = $region13
  $region12: #{moco_cycle_forward.10} parent=0 // pred_region
    _
  $region13: #{moco_cycle_forward.10} parent=0 // pred_fallthru
    _
  // Predicated region
  $region14: #{moco_cycle_forward.10} parent=0 // pred_check
    _
  $region15: #{moco_cycle_forward.10} parent=0 // pred_check_branch
    %16 = sbr.rel (0) target = $region17
  $region16: #{moco_cycle_forward.10} parent=0 // pred_region
    _
  $region17: #{moco_cycle_forward.10} parent=0 // pred_fallthru
    _
  %v18 = vld [vmem:[%s0] sm:$0xff]
  %v19 = vld [vmem:[%s1] sm:$0xf]
  %v20 = vld [vmem:[%s1 + $0x4] sm:$0xf]
  %v21 = vld [vmem:[%s1 + $0x8] sm:$0xf]
  %v22 = vld [vmem:[%s1 + $0xc] sm:$0xf]
  %v23 = vld [vmem:[%s1 + $0x10] sm:$0xf]
  %v24 = vld [vmem:[%s1 + $0x14] sm:$0xf]
  %v25 = vld [vmem:[%s1 + $0x18] sm:$0xf]
  %v26 = vld [vmem:[%s1 + $0x1c] sm:$0xf]
  %v27 = vld [vmem:[%s1 + $0x20] sm:$0xf]
  %v28 = vld [vmem:[%s1 + $0x24] sm:$0xf]
  %v29 = vld [vmem:[%s1 + $0x28] sm:$0xf]
  %v30 = vld [vmem:[%s1 + $0x2c] sm:$0xf]
  %v31 = vld [vmem:[%s1 + $0x30] sm:$0xf]
  %v32 = vld [vmem:[%s1 + $0x34] sm:$0xf]
  %v33 = vld [vmem:[%s1 + $0x38] sm:$0xf]
  %v34 = vld [vmem:[%s1 + $0x3c] sm:$0xf]
  %v35 = vld [vmem:[%s1 + $0x40] sm:$0xf]
  %v36 = vld [vmem:[%s1 + $0x44] sm:$0xf]
  %v38 = vunpack.c.l.b16 %v18
  %v39 = vunpack.c.h.b16 %v18
  %v40 = vpack.c.b16 %v38, %v38
  %v41 = vpack.c.b16 %v39, %v39
  %v61 = vunpack.c.l.b16 %v19
  %v62 = vunpack.c.l.b16 %v20
  %v63 = vunpack.c.l.b16 %v21
  %v64 = vunpack.c.l.b16 %v22
  %v65 = vunpack.c.l.b16 %v23
  %v66 = vunpack.c.l.b16 %v24
  %v67 = vunpack.c.l.b16 %v25
  %v68 = vunpack.c.l.b16 %v26
  %v69 = vunpack.c.l.b16 %v27
  %v70 = vunpack.c.l.b16 %v28
  %v71 = vunpack.c.l.b16 %v29
  %v72 = vunpack.c.l.b16 %v30
  %v73 = vunpack.c.l.b16 %v31
  %v74 = vunpack.c.l.b16 %v32
  %v75 = vunpack.c.l.b16 %v33
  %v76 = vunpack.c.l.b16 %v34
  %v77 = vunpack.c.l.b16 %v35
  %v78 = vunpack.c.l.b16 %v36
  %v79 = vpack.c.b16 %v62, %v61
  %v80 = vpack.c.b16 %v64, %v63
  %v81 = vpack.c.b16 %v66, %v65
  %v82 = vpack.c.b16 %v68, %v67
  %v83 = vpack.c.b16 %v70, %v69
  %v84 = vpack.c.b16 %v72, %v71
  %v85 = vpack.c.b16 %v74, %v73
  %v86 = vpack.c.b16 %v76, %v75
  %v87 = vpack.c.b16 %v78, %v77
  %vm97 = vcmask 130048
  %v99 = vsel %vm97, %v41, 0
  %101 = vmatprep.subr.bf16.mxu0 0
  %102 = vmatpush1.bf16.msra.mxu0 %v86
  %103 = vmatprep.subr.bf16.mxu0 0
  %104 = vmatpush1.bf16.msra.mxu0 %v85
  %105 = vmatprep.subr.bf16.mxu0 0
  %106 = vmatpush1.bf16.msra.mxu0 %v84
  %107 = vmatprep.subr.bf16.mxu0 0
  %108 = vmatpush1.bf16.msra.mxu0 %v83
  %109 = vmatprep.subr.bf16.mxu0 0
  %110 = vmatpush1.bf16.msra.mxu0 %v82
  %111 = vmatprep.subr.bf16.mxu0 0
  %112 = vmatpush1.bf16.msra.mxu0 %v81
  %113 = vmatprep.subr.bf16.mxu0 0
  %114 = vmatpush1.bf16.msra.mxu0 %v80
  %115 = vmatprep.subr.bf16.mxu0 0
  %116 = vmatpush1.bf16.msra.mxu0 %v79
  %117 = vmatprep.subr.bf16.mxu0 0
  %118 = vmatpush2.bf16.msra.mxu0 0
  %119 = vmatprep.subr.bf16.mxu0 0
  %120 = vmatpush2.bf16.msra.mxu0 0
  %121 = vmatprep.subr.bf16.mxu0 0
  %122 = vmatpush2.bf16.msra.mxu0 0
  %123 = vmatprep.subr.bf16.mxu0 0
  %124 = vmatpush2.bf16.msra.mxu0 0
  %125 = vmatprep.subr.bf16.mxu0 0
  %126 = vmatpush2.bf16.msra.mxu0 0
  %127 = vmatprep.subr.bf16.mxu0 0
  %128 = vmatpush2.bf16.msra.mxu0 0
  %129 = vmatprep.subr.bf16.mxu0 0
  %130 = vmatpush2.bf16.msra.mxu0 0
  %131 = vmatprep.subr.bf16.mxu0 0
  %132 = vmatpush2.bf16.msra.mxu0 %v87
  %133 = vmatprep.mubr.bf16.mxu0 %v99
  %134 = vmatmul.mubr.bf16.gmra.mxu0 %v40
  %v135 = vpop.f32.mrf.mxu0
  %v136 = vadd.f32 0.0, %v135
  %v137 = vpop.f32.mrf.mxu0
  %v138 = vpop.f32.mrf.mxu0
  %v139 = vpop.f32.mrf.mxu0
  %140 = vdwg.mxu0
  %v141 = vld [vmem:[%s2] sm:$0x1]
  %v143 = vlaneseq
  %v144 = vshrl.u32 %v143, 7
  %v145 = vsub.s32 0, %v144
  %v146 = vrot.slane %v141, %v145
  %v148 = vmul.f32 %v136, %v146
  %v149 = vld [vmem:[%s3] sm:$0x1]
  %v151 = vlaneseq
  %v152 = vshrl.u32 %v151, 7
  %v153 = vsub.s32 0, %v152
  %v154 = vrot.slane %v149, %v153
  %v156 = vadd.f32 %v148, %v154
  %v157 = vmax.f32 %v156, 0.0
  %v158 = vpack.c.bf16 %v157, %v157
  %vm159 = vcmask 125952
  %160 = vst.msk [vmem:[%s4] sm:$0xf] %vm159, %v158
  // Predicated region
  $region18: #{moco_cycle_forward.10} parent=0 // pred_check
    _
  $region19: #{moco_cycle_forward.10} parent=0 // pred_check_branch
    %162 = sbr.rel (0) target = $region21
  $region20: #{moco_cycle_forward.10} parent=0 // pred_region
    _
  $region21: #{moco_cycle_forward.10} parent=0 // pred_fallthru
    _
  // Predicated region
  $region22: #{moco_cycle_forward.10} parent=0 // pred_check
    _
  $region23: #{moco_cycle_forward.10} parent=0 // pred_check_branch
    %164 = sbr.rel (0) target = $region25
  $region24: #{moco_cycle_forward.10} parent=0 // pred_region
    _
  $region25: #{moco_cycle_forward.10} parent=0 // pred_fallthru
    _

// kernel: moco_cycle_forward.11
$region0: #{moco_cycle_forward.11}
  #allocation0 [shape = 'u32[]', space=smem, size = 0x4, offset = 0x4, fixed_abs, tag = 'smem constant byte address 0x4 - core index']
  #allocation1 [shape = 'u32[144,128]{1,0:T(1,128)}', space=vmem, size = 0x12000, scoped, tag = 'internal scratch']
  %s0 = inlined_call_operand.vmem [shape: bf16[8,144], index: 0, kind: input, shape index: {}]
  %s1 = inlined_call_operand.vmem [shape: bf16[144,32], index: 1, kind: input, shape index: {}]
  %s2 = inlined_call_operand.vmem [shape: f32[1,32], index: 2, kind: input, shape index: {}]
  %s3 = inlined_call_operand.vmem [shape: f32[1,32], index: 3, kind: input, shape index: {}]
  %s4 = inlined_call_operand.vmem [shape: bf16[8,32], index: 4, kind: output, shape index: {}]
  %s5 = sld [smem:[#allocation0]]
  $region26: #{moco_cycle_forward.11} parent=0
    _
  %s7 = ssub.s32 1, %s5
  %s8 = scalar_select 0, %s7, %s5
  // Predicated region
  $region2: #{moco_cycle_forward.11} parent=0 // pred_check
    _
  $region3: #{moco_cycle_forward.11} parent=0 // pred_check_branch
    %10 = sbr.rel (0) target = $region5
  $region4: #{moco_cycle_forward.11} parent=0 // pred_region
    _
  $region5: #{moco_cycle_forward.11} parent=0 // pred_fallthru
    _
  // Predicated region
  $region6: #{moco_cycle_forward.11} parent=0 // pred_check
    _
  $region7: #{moco_cycle_forward.11} parent=0 // pred_check_branch
    %12 = sbr.rel (0) target = $region9
  $region8: #{moco_cycle_forward.11} parent=0 // pred_region
    _
  $region9: #{moco_cycle_forward.11} parent=0 // pred_fallthru
    _
  // Predicated region
  $region10: #{moco_cycle_forward.11} parent=0 // pred_check
    _
  $region11: #{moco_cycle_forward.11} parent=0 // pred_check_branch
    %14 = sbr.rel (0) target = $region13
  $region12: #{moco_cycle_forward.11} parent=0 // pred_region
    _
  $region13: #{moco_cycle_forward.11} parent=0 // pred_fallthru
    _
  // Predicated region
  $region14: #{moco_cycle_forward.11} parent=0 // pred_check
    _
  $region15: #{moco_cycle_forward.11} parent=0 // pred_check_branch
    %16 = sbr.rel (0) target = $region17
  $region16: #{moco_cycle_forward.11} parent=0 // pred_region
    _
  $region17: #{moco_cycle_forward.11} parent=0 // pred_fallthru
    _
  %v18 = vld [vmem:[%s0] sm:$0xff]
  %v19 = vld [vmem:[%s1] sm:$0xf]
  %v20 = vld [vmem:[%s1 + $0x4] sm:$0xf]
  %v21 = vld [vmem:[%s1 + $0x8] sm:$0xf]
  %v22 = vld [vmem:[%s1 + $0xc] sm:$0xf]
  %v23 = vld [vmem:[%s1 + $0x10] sm:$0xf]
  %v24 = vld [vmem:[%s1 + $0x14] sm:$0xf]
  %v25 = vld [vmem:[%s1 + $0x18] sm:$0xf]
  %v26 = vld [vmem:[%s1 + $0x1c] sm:$0xf]
  %v27 = vld [vmem:[%s1 + $0x20] sm:$0xf]
  %v28 = vld [vmem:[%s1 + $0x24] sm:$0xf]
  %v29 = vld [vmem:[%s1 + $0x28] sm:$0xf]
  %v30 = vld [vmem:[%s1 + $0x2c] sm:$0xf]
  %v31 = vld [vmem:[%s1 + $0x30] sm:$0xf]
  %v32 = vld [vmem:[%s1 + $0x34] sm:$0xf]
  %v33 = vld [vmem:[%s1 + $0x38] sm:$0xf]
  %v34 = vld [vmem:[%s1 + $0x3c] sm:$0xf]
  %v35 = vld [vmem:[%s1 + $0x40] sm:$0xf]
  %v36 = vld [vmem:[%s1 + $0x44] sm:$0xf]
  %v38 = vunpack.c.l.b16 %v18
  %v39 = vunpack.c.h.b16 %v18
  %v40 = vpack.c.b16 %v38, %v38
  %v41 = vpack.c.b16 %v39, %v39
  %v61 = vunpack.c.l.b16 %v19
  %v62 = vunpack.c.l.b16 %v20
  %v63 = vunpack.c.l.b16 %v21
  %v64 = vunpack.c.l.b16 %v22
  %v65 = vunpack.c.l.b16 %v23
  %v66 = vunpack.c.l.b16 %v24
  %v67 = vunpack.c.l.b16 %v25
  %v68 = vunpack.c.l.b16 %v26
  %v69 = vunpack.c.l.b16 %v27
  %v70 = vunpack.c.l.b16 %v28
  %v71 = vunpack.c.l.b16 %v29
  %v72 = vunpack.c.l.b16 %v30
  %v73 = vunpack.c.l.b16 %v31
  %v74 = vunpack.c.l.b16 %v32
  %v75 = vunpack.c.l.b16 %v33
  %v76 = vunpack.c.l.b16 %v34
  %v77 = vunpack.c.l.b16 %v35
  %v78 = vunpack.c.l.b16 %v36
  %v79 = vpack.c.b16 %v62, %v61
  %v80 = vpack.c.b16 %v64, %v63
  %v81 = vpack.c.b16 %v66, %v65
  %v82 = vpack.c.b16 %v68, %v67
  %v83 = vpack.c.b16 %v70, %v69
  %v84 = vpack.c.b16 %v72, %v71
  %v85 = vpack.c.b16 %v74, %v73
  %v86 = vpack.c.b16 %v76, %v75
  %v87 = vpack.c.b16 %v78, %v77
  %vm97 = vcmask 130048
  %v99 = vsel %vm97, %v41, 0
  %101 = vmatprep.subr.bf16.mxu0 0
  %102 = vmatpush1.bf16.msra.mxu0 %v86
  %103 = vmatprep.subr.bf16.mxu0 0
  %104 = vmatpush1.bf16.msra.mxu0 %v85
  %105 = vmatprep.subr.bf16.mxu0 0
  %106 = vmatpush1.bf16.msra.mxu0 %v84
  %107 = vmatprep.subr.bf16.mxu0 0
  %108 = vmatpush1.bf16.msra.mxu0 %v83
  %109 = vmatprep.subr.bf16.mxu0 0
  %110 = vmatpush1.bf16.msra.mxu0 %v82
  %111 = vmatprep.subr.bf16.mxu0 0
  %112 = vmatpush1.bf16.msra.mxu0 %v81
  %113 = vmatprep.subr.bf16.mxu0 0
  %114 = vmatpush1.bf16.msra.mxu0 %v80
  %115 = vmatprep.subr.bf16.mxu0 0
  %116 = vmatpush1.bf16.msra.mxu0 %v79
  %117 = vmatprep.subr.bf16.mxu0 0
  %118 = vmatpush2.bf16.msra.mxu0 0
  %119 = vmatprep.subr.bf16.mxu0 0
  %120 = vmatpush2.bf16.msra.mxu0 0
  %121 = vmatprep.subr.bf16.mxu0 0
  %122 = vmatpush2.bf16.msra.mxu0 0
  %123 = vmatprep.subr.bf16.mxu0 0
  %124 = vmatpush2.bf16.msra.mxu0 0
  %125 = vmatprep.subr.bf16.mxu0 0
  %126 = vmatpush2.bf16.msra.mxu0 0
  %127 = vmatprep.subr.bf16.mxu0 0
  %128 = vmatpush2.bf16.msra.mxu0 0
  %129 = vmatprep.subr.bf16.mxu0 0
  %130 = vmatpush2.bf16.msra.mxu0 0
  %131 = vmatprep.subr.bf16.mxu0 0
  %132 = vmatpush2.bf16.msra.mxu0 %v87
  %133 = vmatprep.mubr.bf16.mxu0 %v99
  %134 = vmatmul.mubr.bf16.gmra.mxu0 %v40
  %v135 = vpop.f32.mrf.mxu0
  %v136 = vadd.f32 0.0, %v135
  %v137 = vpop.f32.mrf.mxu0
  %v138 = vpop.f32.mrf.mxu0
  %v139 = vpop.f32.mrf.mxu0
  %140 = vdwg.mxu0
  %v141 = vld [vmem:[%s2] sm:$0x1]
  %v143 = vlaneseq
  %v144 = vshrl.u32 %v143, 7
  %v145 = vsub.s32 0, %v144
  %v146 = vrot.slane %v141, %v145
  %v148 = vmul.f32 %v136, %v146
  %v149 = vld [vmem:[%s3] sm:$0x1]
  %v151 = vlaneseq
  %v152 = vshrl.u32 %v151, 7
  %v153 = vsub.s32 0, %v152
  %v154 = vrot.slane %v149, %v153
  %v156 = vadd.f32 %v148, %v154
  %v157 = vmax.f32 %v156, 0.0
  %v158 = vpack.c.bf16 %v157, %v157
  %vm159 = vcmask 257024
  %160 = vst.msk [vmem:[%s4] sm:$0xf] %vm159, %v158
  // Predicated region
  $region18: #{moco_cycle_forward.11} parent=0 // pred_check
    _
  $region19: #{moco_cycle_forward.11} parent=0 // pred_check_branch
    %162 = sbr.rel (0) target = $region21
  $region20: #{moco_cycle_forward.11} parent=0 // pred_region
    _
  $region21: #{moco_cycle_forward.11} parent=0 // pred_fallthru
    _
  // Predicated region
  $region22: #{moco_cycle_forward.11} parent=0 // pred_check
    _
  $region23: #{moco_cycle_forward.11} parent=0 // pred_check_branch
    %164 = sbr.rel (0) target = $region25
  $region24: #{moco_cycle_forward.11} parent=0 // pred_region
    _
  $region25: #{moco_cycle_forward.11} parent=0 // pred_fallthru
    _

// kernel: moco_cycle_forward.12
$region0: #{moco_cycle_forward.12}
  #allocation0 [shape = 'u32[]', space=smem, size = 0x4, offset = 0x4, fixed_abs, tag = 'smem constant byte address 0x4 - core index']
  #allocation1 [shape = 'u32[144,128]{1,0:T(1,128)}', space=vmem, size = 0x12000, scoped, tag = 'internal scratch']
  %s0 = inlined_call_operand.vmem [shape: f32[2,8,1024], index: 0, kind: input, shape index: {}]
  %s1 = inlined_call_operand.vmem [shape: f32[2,192,32], index: 1, kind: input, shape index: {}]
  %s2 = inlined_call_operand.vmem [shape: f32[2,6,1024], index: 2, kind: output, shape index: {}]
  %s3 = sld [smem:[#allocation0]]
  $region41: #{moco_cycle_forward.12} parent=0
    _
  %s5 = ssub.s32 1, %s3
  %s6 = scalar_select 0, %s5, %s3
  loop: start=0, step=1, limit=4
  $region2: #{moco_cycle_forward.12} parent=0 // loop_pre_header
    _
  $region3: #{moco_cycle_forward.12} parent=0 // loop_header
    %s8 = sphi 0, %s12
    %p9 = scmp.ge.s32.totalorder %s8, 4
    %s15 = sphi 0, %s27
    %s16 = sphi 0, %s23
    %s17 = sphi 0, %s15
    %s18 = sphi 0, %s16
    %s19 = sphi 0, %s17
    %s20 = sphi 0, %s18
    %s32 = sphi 0, %s34
    %s35 = sphi 0, %s32
    %s36 = sphi 0, %s35
    %s52 = sphi 0, %s36
    %s58 = sphi 0, %s60
    %s61 = sphi 0, %s58
    %s62 = sphi 0, %s61
    %s78 = sphi 0, %s62
    %s86 = sphi 0, %s88
    %s89 = sphi 0, %s86
    %s90 = sphi 0, %s89
    %s106 = sphi 0, %s90
  $region4: #{moco_cycle_forward.12} parent=0 // loop_header_branch
    %11 = sbr.rel (%p9) target = $region8
  $region5: #{moco_cycle_forward.12} parent=0 // loop_body
    %s13 = ssub.s32 %s8, 1
    %s14 = ssub.s32 %s8, 2
    %s21 = sadd.s32 1, %s16
    %p22 = scmp.ge.s32.totalorder %s21, 1
    %s23 = scalar_select %p22, 0, %s21
    %s24 = sadd.s32 1, %s15
    %s25 = scalar_select %p22, %s24, %s15
    %p26 = scmp.ge.s32.totalorder %s25, 2
    %s27 = scalar_select %p26, 0, %s25
    %s28 = ssub.s32 %s15, %s27
    %s29 = ssub.s32 %s16, %s23
    %s30 = sor.u32 %s28, %s29
    %p31 = scmp.eq.s32.totalorder %s30, 0
    %s33 = sadd.s32 %s32, 1
    %s34 = scalar_select %p31, %s32, %s33
    %p37 = pneg %p31
    %p38 = scmp.eq.s32.totalorder %s8, 1
    %p39 = por %p37, %p38
    %p40 = scmp.ne.s32.totalorder %s32, %s35
    %p41 = scmp.eq.s32.totalorder %s8, 0
    %p42 = por %p40, %p41
    %p43 = scmp.ne.s32.totalorder %s32, %s35
    %p44 = scmp.eq.s32.totalorder %s13, 1
    %p45 = por %p43, %p44
    %p46 = scmp.ne.s32.totalorder %s35, %s36
    %p47 = scmp.eq.s32.totalorder %s13, 0
    %p48 = por %p46, %p47
    %p49 = scmp.ne.s32.totalorder %s35, %s36
    %p50 = scmp.eq.s32.totalorder %s14, 1
    %p51 = por %p49, %p50
    %p53 = scmp.ne.s32.totalorder %s36, %s52
    %p54 = scmp.eq.s32.totalorder %s14, 0
    %p55 = por %p53, %p54
    %s56 = ssub.s32 %s15, %s27
    %p57 = scmp.eq.s32.totalorder %s56, 0
    %s59 = sadd.s32 %s58, 1
    %s60 = scalar_select %p57, %s58, %s59
    %p63 = pneg %p57
    %p64 = scmp.eq.s32.totalorder %s8, 1
    %p65 = por %p63, %p64
    %p66 = scmp.ne.s32.totalorder %s58, %s61
    %p67 = scmp.eq.s32.totalorder %s8, 0
    %p68 = por %p66, %p67
    %p69 = scmp.ne.s32.totalorder %s58, %s61
    %p70 = scmp.eq.s32.totalorder %s13, 1
    %p71 = por %p69, %p70
    %p72 = scmp.ne.s32.totalorder %s61, %s62
    %p73 = scmp.eq.s32.totalorder %s13, 0
    %p74 = por %p72, %p73
    %p75 = scmp.ne.s32.totalorder %s61, %s62
    %p76 = scmp.eq.s32.totalorder %s14, 1
    %p77 = por %p75, %p76
    %p79 = scmp.ne.s32.totalorder %s62, %s78
    %p80 = scmp.eq.s32.totalorder %s14, 0
    %p81 = por %p79, %p80
    %s82 = ssub.s32 %s15, %s27
    %s83 = ssub.s32 %s16, %s23
    %s84 = sor.u32 %s82, %s83
    %p85 = scmp.eq.s32.totalorder %s84, 0
    %s87 = sadd.s32 %s86, 1
    %s88 = scalar_select %p85, %s86, %s87
    %p91 = pneg %p85
    %p92 = scmp.eq.s32.totalorder %s8, 1
    %p93 = por %p91, %p92
    %p94 = scmp.ne.s32.totalorder %s86, %s89
    %p95 = scmp.eq.s32.totalorder %s8, 0
    %p96 = por %p94, %p95
    %p97 = scmp.ne.s32.totalorder %s86, %s89
    %p98 = scmp.eq.s32.totalorder %s13, 1
    %p99 = por %p97, %p98
    %p100 = scmp.ne.s32.totalorder %s89, %s90
    %p101 = scmp.eq.s32.totalorder %s13, 0
    %p102 = por %p100, %p101
    %p103 = scmp.ne.s32.totalorder %s89, %s90
    %p104 = scmp.eq.s32.totalorder %s14, 1
    %p105 = por %p103, %p104
    %p107 = scmp.ne.s32.totalorder %s90, %s106
    %p108 = scmp.eq.s32.totalorder %s14, 0
    %p109 = por %p107, %p108
    %p110 = scmp.le.s32.totalorder 1, %s8
    %p111 = scmp.lt.s32.totalorder %s8, 3
    %p112 = pnand %p110, %p111
    %p113 = pneg %p112
    // Predicated region
    $region9: #{moco_cycle_forward.12} parent=5 // pred_check
      _
    $region10: #{moco_cycle_forward.12} parent=5 // pred_check_branch
      %115 = sbr.rel (%p112) target = $region12
    $region11: #{moco_cycle_forward.12} parent=5 // pred_region
      %s116 = ssub.s32 %s8, 1
    $region12: #{moco_cycle_forward.12} parent=5 // pred_fallthru
      _
    %p117 = scmp.lt.s32.totalorder %s8, 2
    // Predicated region
    $region13: #{moco_cycle_forward.12} parent=5 // pred_check
      %p118 = pneg %p117
    $region14: #{moco_cycle_forward.12} parent=5 // pred_check_branch
      %120 = sbr.rel (%p118) target = $region16
    $region15: #{moco_cycle_forward.12} parent=5 // pred_region
      // Predicated region
      $region17: #{moco_cycle_forward.12} parent=15 // pred_check
        %p121 = pneg %p42
      $region18: #{moco_cycle_forward.12} parent=15 // pred_check_branch
        %123 = sbr.rel (%p121) target = $region20
      $region19: #{moco_cycle_forward.12} parent=15 // pred_region
        %s124 = smul.u32 8, %s16
        %p125 = scmp.lt.s32.totalorder %s15, 1
        %s126 = scalar_select %p125, %s15, 1
        %p127 = scmp.lt.s32.totalorder %s124, 7
        %s128 = scalar_select %p127, %s124, 7
        %s129 = smul.addr %s126, 8
        %s130 = sadd.s32 %s128, %s129
        %s131 = smul.addr %s130, 8
        %s132 = scalar_lea.vmem %s0, %s131
        %s133 = smul.u32 8, %s16
      $region20: #{moco_cycle_forward.12} parent=15 // pred_fallthru
        _
      // Predicated region
      $region21: #{moco_cycle_forward.12} parent=15 // pred_check
        %p134 = pneg %p68
      $region22: #{moco_cycle_forward.12} parent=15 // pred_check_branch
        %136 = sbr.rel (%p134) target = $region24
      $region23: #{moco_cycle_forward.12} parent=15 // pred_region
        %p137 = scmp.lt.s32.totalorder %s15, 1
        %s138 = scalar_select %p137, %s15, 1
        %s139 = smul.addr %s138, 24
        %s140 = smul.addr %s139, 8
        %s141 = scalar_lea.vmem %s1, %s140
      $region24: #{moco_cycle_forward.12} parent=15 // pred_fallthru
        _
    $region16: #{moco_cycle_forward.12} parent=5 // pred_fallthru
      _
    %p142 = scmp.le.s32.totalorder 1, %s8
    %p143 = scmp.lt.s32.totalorder %s8, 3
    %p144 = pnand %p142, %p143
    %p145 = pneg %p144
    // Predicated region
    $region25: #{moco_cycle_forward.12} parent=5 // pred_check
      _
    $region26: #{moco_cycle_forward.12} parent=5 // pred_check_branch
      %147 = sbr.rel (%p144) target = $region28
    $region27: #{moco_cycle_forward.12} parent=5 // pred_region
      %s148 = ssub.s32 %s8, 1
      %s149 = smul.u32 8, %s18
      %p150 = scmp.lt.s32.totalorder %s17, 1
      %s151 = scalar_select %p150, %s17, 1
      %p152 = scmp.lt.s32.totalorder %s149, 7
      %s153 = scalar_select %p152, %s149, 7
      %s154 = smul.addr %s151, 8
      %s155 = sadd.s32 %s153, %s154
      %s156 = smul.addr %s155, 8
      %s157 = scalar_lea.vmem %s0, %s156
      %p158 = pneg %p48
      %p159 = pneg %p45
      %p160 = scmp.lt.s32.totalorder %s17, 1
      %s161 = scalar_select %p160, %s17, 1
      %s162 = smul.addr %s161, 24
      %s163 = smul.addr %s162, 8
      %s164 = scalar_lea.vmem %s1, %s163
      %p165 = pneg %p74
      %p166 = pneg %p71
      %p167 = pneg %p102
      %p168 = pneg %p99
      %s169 = smul.u32 8, %s18
      %p170 = scmp.lt.s32.totalorder %s17, 1
      %s171 = scalar_select %p170, %s17, 1
      %p172 = scmp.lt.s32.totalorder %s169, 7
      %s173 = scalar_select %p172, %s169, 7
      %s174 = smul.addr %s171, 8
      %s175 = sadd.s32 %s173, %s174
      %s176 = smul.addr %s175, 8
      %s177 = scalar_lea.vmem %s2, %s176
      %s178 = smul.u32 8, %s18
      %p179 = scmp.lt.s32.totalorder %s17, 1
      %s180 = scalar_select %p179, %s17, 1
      %p181 = scmp.lt.s32.totalorder %s178, 7
      %s182 = scalar_select %p181, %s178, 7
      %s183 = smul.addr %s180, 8
      %s184 = sadd.s32 %s182, %s183
      %s185 = smul.addr %s184, 8
      %s186 = scalar_lea.vmem %s0, %s185
      %s187 = smul.u32 8, %s18
      %p188 = scmp.lt.s32.totalorder %s17, 1
      %s189 = scalar_select %p188, %s17, 1
      %s190 = smul.addr %s189, 24
      %s191 = smul.addr %s190, 8
      %s192 = scalar_lea.vmem %s1, %s191
      %s193 = smul.u32 8, %s18
      %p194 = scmp.lt.s32.totalorder %s17, 1
      %s195 = scalar_select %p194, %s17, 1
      %p196 = scmp.lt.s32.totalorder %s193, 7
      %s197 = scalar_select %p196, %s193, 7
      %s198 = smul.addr %s195, 8
      %s199 = sadd.s32 %s197, %s198
      %s200 = smul.addr %s199, 8
      %s201 = scalar_lea.vmem %s2, %s200
      %s202 = smul.u32 8, %s18
      %v203 = vld [vmem:[%s186] sm:$0xff]
      %v204 = vld [vmem:[%s186 + $0x8] sm:$0xff]
      %v205 = vld [vmem:[%s186 + $0x10] sm:$0xff]
      %v206 = vld [vmem:[%s186 + $0x18] sm:$0xff]
      %v207 = vld [vmem:[%s186 + $0x20] sm:$0xff]
      %v208 = vld [vmem:[%s186 + $0x28] sm:$0xff]
      %v209 = vld [vmem:[%s186 + $0x30] sm:$0xff]
      %v210 = vld [vmem:[%s186 + $0x38] sm:$0xff]
      %v211 = vcvt.f32.s32.to.zero.pseudo %v203
      %v212 = vcvt.f32.s32.to.zero.pseudo %v204
      %v213 = vcvt.f32.s32.to.zero.pseudo %v205
      %v214 = vcvt.f32.s32.to.zero.pseudo %v206
      %v215 = vcvt.f32.s32.to.zero.pseudo %v207
      %v216 = vcvt.f32.s32.to.zero.pseudo %v208
      %v217 = vcvt.f32.s32.to.zero.pseudo %v209
      %v218 = vcvt.f32.s32.to.zero.pseudo %v210
      %v219 = vlaneseq
      %v220 = vshrl.u32 %v219, 7
      %v221 = vadd.s32 %v220, 8
      %v222 = vadd.s32 %v220, 16
      %v223 = vadd.s32 %v220, 24
      %v224 = vlaneseq
      %v225 = vshrl.u32 %v224, 7
      %v226 = vsub.s32 3, %v225
      %v227 = vrot.slane %v211, %v226
      %v228 = vlaneseq
      %v229 = vshrl.u32 %v228, 7
      %v230 = vsub.s32 3, %v229
      %v231 = vrot.slane %v212, %v230
      %v232 = vlaneseq
      %v233 = vshrl.u32 %v232, 7
      %v234 = vsub.s32 3, %v233
      %v235 = vrot.slane %v213, %v234
      %v236 = vlaneseq
      %v237 = vshrl.u32 %v236, 7
      %v238 = vsub.s32 3, %v237
      %v239 = vrot.slane %v214, %v238
      %v240 = vlaneseq
      %v241 = vshrl.u32 %v240, 7
      %v242 = vsub.s32 3, %v241
      %v243 = vrot.slane %v215, %v242
      %v244 = vlaneseq
      %v245 = vshrl.u32 %v244, 7
      %v246 = vsub.s32 3, %v245
      %v247 = vrot.slane %v216, %v246
      %v248 = vlaneseq
      %v249 = vshrl.u32 %v248, 7
      %v250 = vsub.s32 3, %v249
      %v251 = vrot.slane %v217, %v250
      %v252 = vlaneseq
      %v253 = vshrl.u32 %v252, 7
      %v254 = vsub.s32 3, %v253
      %v255 = vrot.slane %v218, %v254
      %vm256 = vcmp.eq.s32.totalorder %v220, %v227
      %vm257 = vcmp.eq.s32.totalorder %v220, %v231
      %vm258 = vcmp.eq.s32.totalorder %v220, %v235
      %vm259 = vcmp.eq.s32.totalorder %v220, %v239
      %vm260 = vcmp.eq.s32.totalorder %v220, %v243
      %vm261 = vcmp.eq.s32.totalorder %v220, %v247
      %vm262 = vcmp.eq.s32.totalorder %v220, %v251
      %vm263 = vcmp.eq.s32.totalorder %v220, %v255
      %vm264 = vcmp.eq.s32.totalorder %v221, %v227
      %vm265 = vcmp.eq.s32.totalorder %v221, %v231
      %vm266 = vcmp.eq.s32.totalorder %v221, %v235
      %vm267 = vcmp.eq.s32.totalorder %v221, %v239
      %vm268 = vcmp.eq.s32.totalorder %v221, %v243
      %vm269 = vcmp.eq.s32.totalorder %v221, %v247
      %vm270 = vcmp.eq.s32.totalorder %v221, %v251
      %vm271 = vcmp.eq.s32.totalorder %v221, %v255
      %vm272 = vcmp.eq.s32.totalorder %v222, %v227
      %vm273 = vcmp.eq.s32.totalorder %v222, %v231
      %vm274 = vcmp.eq.s32.totalorder %v222, %v235
      %vm275 = vcmp.eq.s32.totalorder %v222, %v239
      %vm276 = vcmp.eq.s32.totalorder %v222, %v243
      %vm277 = vcmp.eq.s32.totalorder %v222, %v247
      %vm278 = vcmp.eq.s32.totalorder %v222, %v251
      %vm279 = vcmp.eq.s32.totalorder %v222, %v255
      %vm280 = vcmp.eq.s32.totalorder %v223, %v227
      %vm281 = vcmp.eq.s32.totalorder %v223, %v231
      %vm282 = vcmp.eq.s32.totalorder %v223, %v235
      %vm283 = vcmp.eq.s32.totalorder %v223, %v239
      %vm284 = vcmp.eq.s32.totalorder %v223, %v243
      %vm285 = vcmp.eq.s32.totalorder %v223, %v247
      %vm286 = vcmp.eq.s32.totalorder %v223, %v251
      %vm287 = vcmp.eq.s32.totalorder %v223, %v255
      %v288 = vlaneseq
      %v289 = vshrl.u32 %v288, 7
      %v290 = vsub.s32 4, %v289
      %v291 = vrot.slane %v203, %v290
      %v292 = vlaneseq
      %v293 = vshrl.u32 %v292, 7
      %v294 = vsub.s32 4, %v293
      %v295 = vrot.slane %v204, %v294
      %v296 = vlaneseq
      %v297 = vshrl.u32 %v296, 7
      %v298 = vsub.s32 4, %v297
      %v299 = vrot.slane %v205, %v298
      %v300 = vlaneseq
      %v301 = vshrl.u32 %v300, 7
      %v302 = vsub.s32 4, %v301
      %v303 = vrot.slane %v206, %v302
      %v304 = vlaneseq
      %v305 = vshrl.u32 %v304, 7
      %v306 = vsub.s32 4, %v305
      %v307 = vrot.slane %v207, %v306
      %v308 = vlaneseq
      %v309 = vshrl.u32 %v308, 7
      %v310 = vsub.s32 4, %v309
      %v311 = vrot.slane %v208, %v310
      %v312 = vlaneseq
      %v313 = vshrl.u32 %v312, 7
      %v314 = vsub.s32 4, %v313
      %v315 = vrot.slane %v209, %v314
      %v316 = vlaneseq
      %v317 = vshrl.u32 %v316, 7
      %v318 = vsub.s32 4, %v317
      %v319 = vrot.slane %v210, %v318
      %v320 = vsel %vm256, %v291, 0.0
      %v321 = vsel %vm257, %v295, 0.0
      %v322 = vsel %vm258, %v299, 0.0
      %v323 = vsel %vm259, %v303, 0.0
      %v324 = vsel %vm260, %v307, 0.0
      %v325 = vsel %vm261, %v311, 0.0
      %v326 = vsel %vm262, %v315, 0.0
      %v327 = vsel %vm263, %v319, 0.0
      %v328 = vsel %vm264, %v291, 0.0
      %v329 = vsel %vm265, %v295, 0.0
      %v330 = vsel %vm266, %v299, 0.0
      %v331 = vsel %vm267, %v303, 0.0
      %v332 = vsel %vm268, %v307, 0.0
      %v333 = vsel %vm269, %v311, 0.0
      %v334 = vsel %vm270, %v315, 0.0
      %v335 = vsel %vm271, %v319, 0.0
      %v336 = vsel %vm272, %v291, 0.0
      %v337 = vsel %vm273, %v295, 0.0
      %v338 = vsel %vm274, %v299, 0.0
      %v339 = vsel %vm275, %v303, 0.0
      %v340 = vsel %vm276, %v307, 0.0
      %v341 = vsel %vm277, %v311, 0.0
      %v342 = vsel %vm278, %v315, 0.0
      %v343 = vsel %vm279, %v319, 0.0
      %v344 = vsel %vm280, %v291, 0.0
      %v345 = vsel %vm281, %v295, 0.0
      %v346 = vsel %vm282, %v299, 0.0
      %v347 = vsel %vm283, %v303, 0.0
      %v348 = vsel %vm284, %v307, 0.0
      %v349 = vsel %vm285, %v311, 0.0
      %v350 = vsel %vm286, %v315, 0.0
      %v351 = vsel %vm287, %v319, 0.0
      %v352 = vadd.s32 %v211, 1
      %v353 = vadd.s32 %v212, 1
      %v354 = vadd.s32 %v213, 1
      %v355 = vadd.s32 %v214, 1
      %v356 = vadd.s32 %v215, 1
      %v357 = vadd.s32 %v216, 1
      %v358 = vadd.s32 %v217, 1
      %v359 = vadd.s32 %v218, 1
      %v360 = vlaneseq
      %v361 = vshrl.u32 %v360, 7
      %v362 = vsub.s32 3, %v361
      %v363 = vrot.slane %v352, %v362
      %v364 = vlaneseq
      %v365 = vshrl.u32 %v364, 7
      %v366 = vsub.s32 3, %v365
      %v367 = vrot.slane %v353, %v366
      %v368 = vlaneseq
      %v369 = vshrl.u32 %v368, 7
      %v370 = vsub.s32 3, %v369
      %v371 = vrot.slane %v354, %v370
      %v372 = vlaneseq
      %v373 = vshrl.u32 %v372, 7
      %v374 = vsub.s32 3, %v373
      %v375 = vrot.slane %v355, %v374
      %v376 = vlaneseq
      %v377 = vshrl.u32 %v376, 7
      %v378 = vsub.s32 3, %v377
      %v379 = vrot.slane %v356, %v378
      %v380 = vlaneseq
      %v381 = vshrl.u32 %v380, 7
      %v382 = vsub.s32 3, %v381
      %v383 = vrot.slane %v357, %v382
      %v384 = vlaneseq
      %v385 = vshrl.u32 %v384, 7
      %v386 = vsub.s32 3, %v385
      %v387 = vrot.slane %v358, %v386
      %v388 = vlaneseq
      %v389 = vshrl.u32 %v388, 7
      %v390 = vsub.s32 3, %v389
      %v391 = vrot.slane %v359, %v390
      %vm392 = vcmp.eq.s32.totalorder %v220, %v363
      %vm393 = vcmp.eq.s32.totalorder %v220, %v367
      %vm394 = vcmp.eq.s32.totalorder %v220, %v371
      %vm395 = vcmp.eq.s32.totalorder %v220, %v375
      %vm396 = vcmp.eq.s32.totalorder %v220, %v379
      %vm397 = vcmp.eq.s32.totalorder %v220, %v383
      %vm398 = vcmp.eq.s32.totalorder %v220, %v387
      %vm399 = vcmp.eq.s32.totalorder %v220, %v391
      %vm400 = vcmp.eq.s32.totalorder %v221, %v363
      %vm401 = vcmp.eq.s32.totalorder %v221, %v367
      %vm402 = vcmp.eq.s32.totalorder %v221, %v371
      %vm403 = vcmp.eq.s32.totalorder %v221, %v375
      %vm404 = vcmp.eq.s32.totalorder %v221, %v379
      %vm405 = vcmp.eq.s32.totalorder %v221, %v383
      %vm406 = vcmp.eq.s32.totalorder %v221, %v387
      %vm407 = vcmp.eq.s32.totalorder %v221, %v391
      %vm408 = vcmp.eq.s32.totalorder %v222, %v363
      %vm409 = vcmp.eq.s32.totalorder %v222, %v367
      %vm410 = vcmp.eq.s32.totalorder %v222, %v371
      %vm411 = vcmp.eq.s32.totalorder %v222, %v375
      %vm412 = vcmp.eq.s32.totalorder %v222, %v379
      %vm413 = vcmp.eq.s32.totalorder %v222, %v383
      %vm414 = vcmp.eq.s32.totalorder %v222, %v387
      %vm415 = vcmp.eq.s32.totalorder %v222, %v391
      %vm416 = vcmp.eq.s32.totalorder %v223, %v363
      %vm417 = vcmp.eq.s32.totalorder %v223, %v367
      %vm418 = vcmp.eq.s32.totalorder %v223, %v371
      %vm419 = vcmp.eq.s32.totalorder %v223, %v375
      %vm420 = vcmp.eq.s32.totalorder %v223, %v379
      %vm421 = vcmp.eq.s32.totalorder %v223, %v383
      %vm422 = vcmp.eq.s32.totalorder %v223, %v387
      %vm423 = vcmp.eq.s32.totalorder %v223, %v391
      %v424 = vlaneseq
      %v425 = vshrl.u32 %v424, 7
      %v426 = vsub.s32 5, %v425
      %v427 = vrot.slane %v203, %v426
      %v428 = vlaneseq
      %v429 = vshrl.u32 %v428, 7
      %v430 = vsub.s32 5, %v429
      %v431 = vrot.slane %v204, %v430
      %v432 = vlaneseq
      %v433 = vshrl.u32 %v432, 7
      %v434 = vsub.s32 5, %v433
      %v435 = vrot.slane %v205, %v434
      %v436 = vlaneseq
      %v437 = vshrl.u32 %v436, 7
      %v438 = vsub.s32 5, %v437
      %v439 = vrot.slane %v206, %v438
      %v440 = vlaneseq
      %v441 = vshrl.u32 %v440, 7
      %v442 = vsub.s32 5, %v441
      %v443 = vrot.slane %v207, %v442
      %v444 = vlaneseq
      %v445 = vshrl.u32 %v444, 7
      %v446 = vsub.s32 5, %v445
      %v447 = vrot.slane %v208, %v446
      %v448 = vlaneseq
      %v449 = vshrl.u32 %v448, 7
      %v450 = vsub.s32 5, %v449
      %v451 = vrot.slane %v209, %v450
      %v452 = vlaneseq
      %v453 = vshrl.u32 %v452, 7
      %v454 = vsub.s32 5, %v453
      %v455 = vrot.slane %v210, %v454
      %v456 = vsel %vm392, %v427, 0.0
      %v457 = vsel %vm393, %v431, 0.0
      %v458 = vsel %vm394, %v435, 0.0
      %v459 = vsel %vm395, %v439, 0.0
      %v460 = vsel %vm396, %v443, 0.0
      %v461 = vsel %vm397, %v447, 0.0
      %v462 = vsel %vm398, %v451, 0.0
      %v463 = vsel %vm399, %v455, 0.0
      %v464 = vsel %vm400, %v427, 0.0
      %v465 = vsel %vm401, %v431, 0.0
      %v466 = vsel %vm402, %v435, 0.0
      %v467 = vsel %vm403, %v439, 0.0
      %v468 = vsel %vm404, %v443, 0.0
      %v469 = vsel %vm405, %v447, 0.0
      %v470 = vsel %vm406, %v451, 0.0
      %v471 = vsel %vm407, %v455, 0.0
      %v472 = vsel %vm408, %v427, 0.0
      %v473 = vsel %vm409, %v431, 0.0
      %v474 = vsel %vm410, %v435, 0.0
      %v475 = vsel %vm411, %v439, 0.0
      %v476 = vsel %vm412, %v443, 0.0
      %v477 = vsel %vm413, %v447, 0.0
      %v478 = vsel %vm414, %v451, 0.0
      %v479 = vsel %vm415, %v455, 0.0
      %v480 = vsel %vm416, %v427, 0.0
      %v481 = vsel %vm417, %v431, 0.0
      %v482 = vsel %vm418, %v435, 0.0
      %v483 = vsel %vm419, %v439, 0.0
      %v484 = vsel %vm420, %v443, 0.0
      %v485 = vsel %vm421, %v447, 0.0
      %v486 = vsel %vm422, %v451, 0.0
      %v487 = vsel %vm423, %v455, 0.0
      %v488 = vadd.f32 %v320, %v456
      %v489 = vadd.f32 %v321, %v457
      %v490 = vadd.f32 %v322, %v458
      %v491 = vadd.f32 %v323, %v459
      %v492 = vadd.f32 %v324, %v460
      %v493 = vadd.f32 %v325, %v461
      %v494 = vadd.f32 %v326, %v462
      %v495 = vadd.f32 %v327, %v463
      %v496 = vadd.f32 %v328, %v464
      %v497 = vadd.f32 %v329, %v465
      %v498 = vadd.f32 %v330, %v466
      %v499 = vadd.f32 %v331, %v467
      %v500 = vadd.f32 %v332, %v468
      %v501 = vadd.f32 %v333, %v469
      %v502 = vadd.f32 %v334, %v470
      %v503 = vadd.f32 %v335, %v471
      %v504 = vadd.f32 %v336, %v472
      %v505 = vadd.f32 %v337, %v473
      %v506 = vadd.f32 %v338, %v474
      %v507 = vadd.f32 %v339, %v475
      %v508 = vadd.f32 %v340, %v476
      %v509 = vadd.f32 %v341, %v477
      %v510 = vadd.f32 %v342, %v478
      %v511 = vadd.f32 %v343, %v479
      %v512 = vadd.f32 %v344, %v480
      %v513 = vadd.f32 %v345, %v481
      %v514 = vadd.f32 %v346, %v482
      %v515 = vadd.f32 %v347, %v483
      %v516 = vadd.f32 %v348, %v484
      %v517 = vadd.f32 %v349, %v485
      %v518 = vadd.f32 %v350, %v486
      %v519 = vadd.f32 %v351, %v487
      %v520 = vlaneseq
      %v521 = vshrl.u32 %v520, 7
      %v522 = vsub.s32 0, %v521
      %v523 = vrot.slane %v211, %v522
      %v524 = vlaneseq
      %v525 = vshrl.u32 %v524, 7
      %v526 = vsub.s32 0, %v525
      %v527 = vrot.slane %v212, %v526
      %v528 = vlaneseq
      %v529 = vshrl.u32 %v528, 7
      %v530 = vsub.s32 0, %v529
      %v531 = vrot.slane %v213, %v530
      %v532 = vlaneseq
      %v533 = vshrl.u32 %v532, 7
      %v534 = vsub.s32 0, %v533
      %v535 = vrot.slane %v214, %v534
      %v536 = vlaneseq
      %v537 = vshrl.u32 %v536, 7
      %v538 = vsub.s32 0, %v537
      %v539 = vrot.slane %v215, %v538
      %v540 = vlaneseq
      %v541 = vshrl.u32 %v540, 7
      %v542 = vsub.s32 0, %v541
      %v543 = vrot.slane %v216, %v542
      %v544 = vlaneseq
      %v545 = vshrl.u32 %v544, 7
      %v546 = vsub.s32 0, %v545
      %v547 = vrot.slane %v217, %v546
      %v548 = vlaneseq
      %v549 = vshrl.u32 %v548, 7
      %v550 = vsub.s32 0, %v549
      %v551 = vrot.slane %v218, %v550
      %vm552 = vcmp.eq.s32.totalorder %v220, %v523
      %vm553 = vcmp.eq.s32.totalorder %v220, %v527
      %vm554 = vcmp.eq.s32.totalorder %v220, %v531
      %vm555 = vcmp.eq.s32.totalorder %v220, %v535
      %vm556 = vcmp.eq.s32.totalorder %v220, %v539
      %vm557 = vcmp.eq.s32.totalorder %v220, %v543
      %vm558 = vcmp.eq.s32.totalorder %v220, %v547
      %vm559 = vcmp.eq.s32.totalorder %v220, %v551
      %vm560 = vcmp.eq.s32.totalorder %v221, %v523
      %vm561 = vcmp.eq.s32.totalorder %v221, %v527
      %vm562 = vcmp.eq.s32.totalorder %v221, %v531
      %vm563 = vcmp.eq.s32.totalorder %v221, %v535
      %vm564 = vcmp.eq.s32.totalorder %v221, %v539
      %vm565 = vcmp.eq.s32.totalorder %v221, %v543
      %vm566 = vcmp.eq.s32.totalorder %v221, %v547
      %vm567 = vcmp.eq.s32.totalorder %v221, %v551
      %vm568 = vcmp.eq.s32.totalorder %v222, %v523
      %vm569 = vcmp.eq.s32.totalorder %v222, %v527
      %vm570 = vcmp.eq.s32.totalorder %v222, %v531
      %vm571 = vcmp.eq.s32.totalorder %v222, %v535
      %vm572 = vcmp.eq.s32.totalorder %v222, %v539
      %vm573 = vcmp.eq.s32.totalorder %v222, %v543
      %vm574 = vcmp.eq.s32.totalorder %v222, %v547
      %vm575 = vcmp.eq.s32.totalorder %v222, %v551
      %vm576 = vcmp.eq.s32.totalorder %v223, %v523
      %vm577 = vcmp.eq.s32.totalorder %v223, %v527
      %vm578 = vcmp.eq.s32.totalorder %v223, %v531
      %vm579 = vcmp.eq.s32.totalorder %v223, %v535
      %vm580 = vcmp.eq.s32.totalorder %v223, %v539
      %vm581 = vcmp.eq.s32.totalorder %v223, %v543
      %vm582 = vcmp.eq.s32.totalorder %v223, %v547
      %vm583 = vcmp.eq.s32.totalorder %v223, %v551
      %v584 = vlaneseq
      %v585 = vshrl.u32 %v584, 7
      %v586 = vsub.s32 1, %v585
      %v587 = vrot.slane %v203, %v586
      %v588 = vlaneseq
      %v589 = vshrl.u32 %v588, 7
      %v590 = vsub.s32 1, %v589
      %v591 = vrot.slane %v204, %v590
      %v592 = vlaneseq
      %v593 = vshrl.u32 %v592, 7
      %v594 = vsub.s32 1, %v593
      %v595 = vrot.slane %v205, %v594
      %v596 = vlaneseq
      %v597 = vshrl.u32 %v596, 7
      %v598 = vsub.s32 1, %v597
      %v599 = vrot.slane %v206, %v598
      %v600 = vlaneseq
      %v601 = vshrl.u32 %v600, 7
      %v602 = vsub.s32 1, %v601
      %v603 = vrot.slane %v207, %v602
      %v604 = vlaneseq
      %v605 = vshrl.u32 %v604, 7
      %v606 = vsub.s32 1, %v605
      %v607 = vrot.slane %v208, %v606
      %v608 = vlaneseq
      %v609 = vshrl.u32 %v608, 7
      %v610 = vsub.s32 1, %v609
      %v611 = vrot.slane %v209, %v610
      %v612 = vlaneseq
      %v613 = vshrl.u32 %v612, 7
      %v614 = vsub.s32 1, %v613
      %v615 = vrot.slane %v210, %v614
      %v616 = vsel %vm552, %v587, 0.0
      %v617 = vsel %vm553, %v591, 0.0
      %v618 = vsel %vm554, %v595, 0.0
      %v619 = vsel %vm555, %v599, 0.0
      %v620 = vsel %vm556, %v603, 0.0
      %v621 = vsel %vm557, %v607, 0.0
      %v622 = vsel %vm558, %v611, 0.0
      %v623 = vsel %vm559, %v615, 0.0
      %v624 = vsel %vm560, %v587, 0.0
      %v625 = vsel %vm561, %v591, 0.0
      %v626 = vsel %vm562, %v595, 0.0
      %v627 = vsel %vm563, %v599, 0.0
      %v628 = vsel %vm564, %v603, 0.0
      %v629 = vsel %vm565, %v607, 0.0
      %v630 = vsel %vm566, %v611, 0.0
      %v631 = vsel %vm567, %v615, 0.0
      %v632 = vsel %vm568, %v587, 0.0
      %v633 = vsel %vm569, %v591, 0.0
      %v634 = vsel %vm570, %v595, 0.0
      %v635 = vsel %vm571, %v599, 0.0
      %v636 = vsel %vm572, %v603, 0.0
      %v637 = vsel %vm573, %v607, 0.0
      %v638 = vsel %vm574, %v611, 0.0
      %v639 = vsel %vm575, %v615, 0.0
      %v640 = vsel %vm576, %v587, 0.0
      %v641 = vsel %vm577, %v591, 0.0
      %v642 = vsel %vm578, %v595, 0.0
      %v643 = vsel %vm579, %v599, 0.0
      %v644 = vsel %vm580, %v603, 0.0
      %v645 = vsel %vm581, %v607, 0.0
      %v646 = vsel %vm582, %v611, 0.0
      %v647 = vsel %vm583, %v615, 0.0
      %v648 = vlaneseq
      %v649 = vshrl.u32 %v648, 7
      %v650 = vsub.s32 0, %v649
      %v651 = vrot.slane %v352, %v650
      %v652 = vlaneseq
      %v653 = vshrl.u32 %v652, 7
      %v654 = vsub.s32 0, %v653
      %v655 = vrot.slane %v353, %v654
      %v656 = vlaneseq
      %v657 = vshrl.u32 %v656, 7
      %v658 = vsub.s32 0, %v657
      %v659 = vrot.slane %v354, %v658
      %v660 = vlaneseq
      %v661 = vshrl.u32 %v660, 7
      %v662 = vsub.s32 0, %v661
      %v663 = vrot.slane %v355, %v662
      %v664 = vlaneseq
      %v665 = vshrl.u32 %v664, 7
      %v666 = vsub.s32 0, %v665
      %v667 = vrot.slane %v356, %v666
      %v668 = vlaneseq
      %v669 = vshrl.u32 %v668, 7
      %v670 = vsub.s32 0, %v669
      %v671 = vrot.slane %v357, %v670
      %v672 = vlaneseq
      %v673 = vshrl.u32 %v672, 7
      %v674 = vsub.s32 0, %v673
      %v675 = vrot.slane %v358, %v674
      %v676 = vlaneseq
      %v677 = vshrl.u32 %v676, 7
      %v678 = vsub.s32 0, %v677
      %v679 = vrot.slane %v359, %v678
      %vm680 = vcmp.eq.s32.totalorder %v220, %v651
      %vm681 = vcmp.eq.s32.totalorder %v220, %v655
      %vm682 = vcmp.eq.s32.totalorder %v220, %v659
      %vm683 = vcmp.eq.s32.totalorder %v220, %v663
      %vm684 = vcmp.eq.s32.totalorder %v220, %v667
      %vm685 = vcmp.eq.s32.totalorder %v220, %v671
      %vm686 = vcmp.eq.s32.totalorder %v220, %v675
      %vm687 = vcmp.eq.s32.totalorder %v220, %v679
      %vm688 = vcmp.eq.s32.totalorder %v221, %v651
      %vm689 = vcmp.eq.s32.totalorder %v221, %v655
      %vm690 = vcmp.eq.s32.totalorder %v221, %v659
      %vm691 = vcmp.eq.s32.totalorder %v221, %v663
      %vm692 = vcmp.eq.s32.totalorder %v221, %v667
      %vm693 = vcmp.eq.s32.totalorder %v221, %v671
      %vm694 = vcmp.eq.s32.totalorder %v221, %v675
      %vm695 = vcmp.eq.s32.totalorder %v221, %v679
      %vm696 = vcmp.eq.s32.totalorder %v222, %v651
      %vm697 = vcmp.eq.s32.totalorder %v222, %v655
      %vm698 = vcmp.eq.s32.totalorder %v222, %v659
      %vm699 = vcmp.eq.s32.totalorder %v222, %v663
      %vm700 = vcmp.eq.s32.totalorder %v222, %v667
      %vm701 = vcmp.eq.s32.totalorder %v222, %v671
      %vm702 = vcmp.eq.s32.totalorder %v222, %v675
      %vm703 = vcmp.eq.s32.totalorder %v222, %v679
      %vm704 = vcmp.eq.s32.totalorder %v223, %v651
      %vm705 = vcmp.eq.s32.totalorder %v223, %v655
      %vm706 = vcmp.eq.s32.totalorder %v223, %v659
      %vm707 = vcmp.eq.s32.totalorder %v223, %v663
      %vm708 = vcmp.eq.s32.totalorder %v223, %v667
      %vm709 = vcmp.eq.s32.totalorder %v223, %v671
      %vm710 = vcmp.eq.s32.totalorder %v223, %v675
      %vm711 = vcmp.eq.s32.totalorder %v223, %v679
      %v712 = vlaneseq
      %v713 = vshrl.u32 %v712, 7
      %v714 = vsub.s32 2, %v713
      %v715 = vrot.slane %v203, %v714
      %v716 = vlaneseq
      %v717 = vshrl.u32 %v716, 7
      %v718 = vsub.s32 2, %v717
      %v719 = vrot.slane %v204, %v718
      %v720 = vlaneseq
      %v721 = vshrl.u32 %v720, 7
      %v722 = vsub.s32 2, %v721
      %v723 = vrot.slane %v205, %v722
      %v724 = vlaneseq
      %v725 = vshrl.u32 %v724, 7
      %v726 = vsub.s32 2, %v725
      %v727 = vrot.slane %v206, %v726
      %v728 = vlaneseq
      %v729 = vshrl.u32 %v728, 7
      %v730 = vsub.s32 2, %v729
      %v731 = vrot.slane %v207, %v730
      %v732 = vlaneseq
      %v733 = vshrl.u32 %v732, 7
      %v734 = vsub.s32 2, %v733
      %v735 = vrot.slane %v208, %v734
      %v736 = vlaneseq
      %v737 = vshrl.u32 %v736, 7
      %v738 = vsub.s32 2, %v737
      %v739 = vrot.slane %v209, %v738
      %v740 = vlaneseq
      %v741 = vshrl.u32 %v740, 7
      %v742 = vsub.s32 2, %v741
      %v743 = vrot.slane %v210, %v742
      %v744 = vsel %vm680, %v715, 0.0
      %v745 = vsel %vm681, %v719, 0.0
      %v746 = vsel %vm682, %v723, 0.0
      %v747 = vsel %vm683, %v727, 0.0
      %v748 = vsel %vm684, %v731, 0.0
      %v749 = vsel %vm685, %v735, 0.0
      %v750 = vsel %vm686, %v739, 0.0
      %v751 = vsel %vm687, %v743, 0.0
      %v752 = vsel %vm688, %v715, 0.0
      %v753 = vsel %vm689, %v719, 0.0
      %v754 = vsel %vm690, %v723, 0.0
      %v755 = vsel %vm691, %v727, 0.0
      %v756 = vsel %vm692, %v731, 0.0
      %v757 = vsel %vm693, %v735, 0.0
      %v758 = vsel %vm694, %v739, 0.0
      %v759 = vsel %vm695, %v743, 0.0
      %v760 = vsel %vm696, %v715, 0.0
      %v761 = vsel %vm697, %v719, 0.0
      %v762 = vsel %vm698, %v723, 0.0
      %v763 = vsel %vm699, %v727, 0.0
      %v764 = vsel %vm700, %v731, 0.0
      %v765 = vsel %vm701, %v735, 0.0
      %v766 = vsel %vm702, %v739, 0.0
      %v767 = vsel %vm703, %v743, 0.0
      %v768 = vsel %vm704, %v715, 0.0
      %v769 = vsel %vm705, %v719, 0.0
      %v770 = vsel %vm706, %v723, 0.0
      %v771 = vsel %vm707, %v727, 0.0
      %v772 = vsel %vm708, %v731, 0.0
      %v773 = vsel %vm709, %v735, 0.0
      %v774 = vsel %vm710, %v739, 0.0
      %v775 = vsel %vm711, %v743, 0.0
      %v776 = vadd.f32 %v616, %v744
      %v777 = vadd.f32 %v617, %v745
      %v778 = vadd.f32 %v618, %v746
      %v779 = vadd.f32 %v619, %v747
      %v780 = vadd.f32 %v620, %v748
      %v781 = vadd.f32 %v621, %v749
      %v782 = vadd.f32 %v622, %v750
      %v783 = vadd.f32 %v623, %v751
      %v784 = vadd.f32 %v624, %v752
      %v785 = vadd.f32 %v625, %v753
      %v786 = vadd.f32 %v626, %v754
      %v787 = vadd.f32 %v627, %v755
      %v788 = vadd.f32 %v628, %v756
      %v789 = vadd.f32 %v629, %v757
      %v790 = vadd.f32 %v630, %v758
      %v791 = vadd.f32 %v631, %v759
      %v792 = vadd.f32 %v632, %v760
      %v793 = vadd.f32 %v633, %v761
      %v794 = vadd.f32 %v634, %v762
      %v795 = vadd.f32 %v635, %v763
      %v796 = vadd.f32 %v636, %v764
      %v797 = vadd.f32 %v637, %v765
      %v798 = vadd.f32 %v638, %v766
      %v799 = vadd.f32 %v639, %v767
      %v800 = vadd.f32 %v640, %v768
      %v801 = vadd.f32 %v641, %v769
      %v802 = vadd.f32 %v642, %v770
      %v803 = vadd.f32 %v643, %v771
      %v804 = vadd.f32 %v644, %v772
      %v805 = vadd.f32 %v645, %v773
      %v806 = vadd.f32 %v646, %v774
      %v807 = vadd.f32 %v647, %v775
      %v808 = vld [vmem:[%s192] sm:$0xff]
      %v809 = vld [vmem:[%s192 + $0x8] sm:$0xff]
      %v810 = vld [vmem:[%s192 + $0x10] sm:$0xff]
      %v811 = vld [vmem:[%s192 + $0x18] sm:$0xff]
      %v812 = vld [vmem:[%s192 + $0x20] sm:$0xff]
      %v813 = vld [vmem:[%s192 + $0x28] sm:$0xff]
      %v814 = vld [vmem:[%s192 + $0x30] sm:$0xff]
      %v815 = vld [vmem:[%s192 + $0x38] sm:$0xff]
      %v816 = vld [vmem:[%s192 + $0x40] sm:$0xff]
      %v817 = vld [vmem:[%s192 + $0x48] sm:$0xff]
      %v818 = vld [vmem:[%s192 + $0x50] sm:$0xff]
      %v819 = vld [vmem:[%s192 + $0x58] sm:$0xff]
      %v820 = vld [vmem:[%s192 + $0x60] sm:$0xff]
      %v821 = vld [vmem:[%s192 + $0x68] sm:$0xff]
      %v822 = vld [vmem:[%s192 + $0x70] sm:$0xff]
      %v823 = vld [vmem:[%s192 + $0x78] sm:$0xff]
      %v824 = vld [vmem:[%s192 + $0x80] sm:$0xff]
      %v825 = vld [vmem:[%s192 + $0x88] sm:$0xff]
      %v826 = vld [vmem:[%s192 + $0x90] sm:$0xff]
      %v827 = vld [vmem:[%s192 + $0x98] sm:$0xff]
      %v828 = vld [vmem:[%s192 + $0xa0] sm:$0xff]
      %v829 = vld [vmem:[%s192 + $0xa8] sm:$0xff]
      %v830 = vld [vmem:[%s192 + $0xb0] sm:$0xff]
      %v831 = vld [vmem:[%s192 + $0xb8] sm:$0xff]
      %vm832 = vcmask 261120
      %v834 = vsel %vm832, %v808, 0
      %v837 = vsel %vm832, %v809, 0
      %v840 = vsel %vm832, %v810, 0
      %v843 = vsel %vm832, %v811, 0
      %v846 = vsel %vm832, %v812, 0
      %v849 = vsel %vm832, %v813, 0
      %v852 = vsel %vm832, %v814, 0
      %v855 = vsel %vm832, %v815, 0
      %v858 = vsel %vm832, %v816, 0
      %v861 = vsel %vm832, %v817, 0
      %v864 = vsel %vm832, %v818, 0
      %v867 = vsel %vm832, %v819, 0
      %v870 = vsel %vm832, %v820, 0
      %v873 = vsel %vm832, %v821, 0
      %v876 = vsel %vm832, %v822, 0
      %v879 = vsel %vm832, %v823, 0
      %v882 = vsel %vm832, %v824, 0
      %v885 = vsel %vm832, %v825, 0
      %v888 = vsel %vm832, %v826, 0
      %v891 = vsel %vm832, %v827, 0
      %v894 = vsel %vm832, %v828, 0
      %v897 = vsel %vm832, %v829, 0
      %v900 = vsel %vm832, %v830, 0
      %v903 = vsel %vm832, %v831, 0
      %905 = vmatprep.subr.mxu0 0.0
      %906 = vmatpush1.msra.mxu0 0.0
      %907 = vmatprep.subr.mxu0 0.0
      %908 = vmatpush1.msra.mxu0 0.0
      %909 = vmatprep.subr.mxu0 0.0
      %910 = vmatpush1.msra.mxu0 0.0
      %911 = vmatprep.subr.mxu0 0.0
      %912 = vmatpush1.msra.mxu0 0.0
      %913 = vmatprep.subr.mxu0 0.0
      %914 = vmatpush1.msra.mxu0 0.0
      %915 = vmatprep.subr.mxu0 0.0
      %916 = vmatpush1.msra.mxu0 0.0
      %917 = vmatprep.subr.mxu0 0.0
      %918 = vmatpush1.msra.mxu0 0.0
      %919 = vmatprep.subr.mxu0 0.0
      %920 = vmatpush1.msra.mxu0 0.0
      %921 = vmatprep.subr.mxu0 0.0
      %922 = vmatpush1.msra.mxu0 0.0
      %923 = vmatprep.subr.mxu0 0.0
      %924 = vmatpush1.msra.mxu0 0.0
      %925 = vmatprep.subr.mxu0 0.0
      %926 = vmatpush1.msra.mxu0 0.0
      %927 = vmatprep.subr.mxu0 0.0
      %928 = vmatpush1.msra.mxu0 0.0
      %929 = vmatprep.subr.mxu0 %v513
      %930 = vmatpush1.msra.mxu0 %v512
      %931 = vmatprep.subr.mxu0 %v505
      %932 = vmatpush1.msra.mxu0 %v504
      %933 = vmatprep.subr.mxu0 %v497
      %934 = vmatpush1.msra.mxu0 %v496
      %935 = vmatprep.subr.mxu0 %v489
      %936 = vmatpush1.msra.mxu0 %v488
      %937 = vmatprep.subr.mxu0 0.0
      %938 = vmatpush2.msra.mxu0 0.0
      %939 = vmatprep.subr.mxu0 0.0
      %940 = vmatpush2.msra.mxu0 0.0
      %941 = vmatprep.subr.mxu0 0.0
      %942 = vmatpush2.msra.mxu0 0.0
      %943 = vmatprep.subr.mxu0 0.0
      %944 = vmatpush2.msra.mxu0 0.0
      %945 = vmatprep.subr.mxu0 0.0
      %946 = vmatpush2.msra.mxu0 0.0
      %947 = vmatprep.subr.mxu0 0.0
      %948 = vmatpush2.msra.mxu0 0.0
      %949 = vmatprep.subr.mxu0 0.0
      %950 = vmatpush2.msra.mxu0 0.0
      %951 = vmatprep.subr.mxu0 0.0
      %952 = vmatpush2.msra.mxu0 0.0
      %953 = vmatprep.subr.mxu0 0.0
      %954 = vmatpush2.msra.mxu0 0.0
      %955 = vmatprep.subr.mxu0 0.0
      %956 = vmatpush2.msra.mxu0 0.0
      %957 = vmatprep.subr.mxu0 0.0
      %958 = vmatpush2.msra.mxu0 0.0
      %959 = vmatprep.subr.mxu0 0.0
      %960 = vmatpush2.msra.mxu0 0.0
      %961 = vmatprep.subr.mxu0 0.0
      %962 = vmatpush2.msra.mxu0 0.0
      %963 = vmatprep.subr.mxu0 0.0
      %964 = vmatpush2.msra.mxu0 0.0
      %965 = vmatprep.subr.mxu0 0.0
      %966 = vmatpush2.msra.mxu0 0.0
      %967 = vmatprep.subr.mxu0 0.0
      %968 = vmatpush2.msra.mxu0 0.0
      %969 = vmatprep.mubr.f32.mxu0 0.0
      %970 = vmatmul.mubr.f32.gmra.mxu0 %v834
      %v971 = vpop.f32.mrf.mxu0
      %v972 = vadd.f32 0.0, %v971
      %v973 = vpop.f32.mrf.mxu0
      %v974 = vadd.f32 0.0, %v973
      %975 = vmatprep.mubr.f32.mxu0 0.0
      %976 = vmatmul.mubr.f32.gmra.mxu0 %v837
      %v977 = vpop.f32.mrf.mxu0
      %v978 = vadd.f32 0.0, %v977
      %v979 = vpop.f32.mrf.mxu0
      %v980 = vadd.f32 0.0, %v979
      %981 = vmatprep.mubr.f32.mxu0 0.0
      %982 = vmatmul.mubr.f32.gmra.mxu0 %v840
      %v983 = vpop.f32.mrf.mxu0
      %v984 = vadd.f32 0.0, %v983
      %v985 = vpop.f32.mrf.mxu0
      %v986 = vadd.f32 0.0, %v985
      %987 = vmatprep.mubr.f32.mxu0 0.0
      %988 = vmatmul.mubr.f32.gmra.mxu0 %v843
      %v989 = vpop.f32.mrf.mxu0
      %v990 = vadd.f32 0.0, %v989
      %v991 = vpop.f32.mrf.mxu0
      %v992 = vadd.f32 0.0, %v991
      %993 = vmatprep.mubr.f32.mxu0 0.0
      %994 = vmatmul.mubr.f32.gmra.mxu0 %v846
      %v995 = vpop.f32.mrf.mxu0
      %v996 = vadd.f32 0.0, %v995
      %v997 = vpop.f32.mrf.mxu0
      %v998 = vadd.f32 0.0, %v997
      %999 = vmatprep.mubr.f32.mxu0 0.0
      %1000 = vmatmul.mubr.f32.gmra.mxu0 %v849
      %v1001 = vpop.f32.mrf.mxu0
      %v1002 = vadd.f32 0.0, %v1001
      %v1003 = vpop.f32.mrf.mxu0
      %v1004 = vadd.f32 0.0, %v1003
      %1005 = vmatprep.mubr.f32.mxu0 0.0
      %1006 = vmatmul.mubr.f32.gmra.mxu0 %v852
      %v1007 = vpop.f32.mrf.mxu0
      %v1008 = vadd.f32 0.0, %v1007
      %v1009 = vpop.f32.mrf.mxu0
      %v1010 = vadd.f32 0.0, %v1009
      %1011 = vmatprep.mubr.f32.mxu0 0.0
      %1012 = vmatmul.mubr.f32.gmra.mxu0 %v855
      %v1013 = vpop.f32.mrf.mxu0
      %v1014 = vadd.f32 0.0, %v1013
      %v1015 = vpop.f32.mrf.mxu0
      %v1016 = vadd.f32 0.0, %v1015
      %1017 = vmatprep.mubr.f32.mxu0 0.0
      %1018 = vmatmul.mubr.f32.gmra.mxu0 %v858
      %v1019 = vpop.f32.mrf.mxu0
      %v1020 = vadd.f32 0.0, %v1019
      %v1021 = vpop.f32.mrf.mxu0
      %v1022 = vadd.f32 0.0, %v1021
      %1023 = vmatprep.mubr.f32.mxu0 0.0
      %1024 = vmatmul.mubr.f32.gmra.mxu0 %v861
      %v1025 = vpop.f32.mrf.mxu0
      %v1026 = vadd.f32 0.0, %v1025
      %v1027 = vpop.f32.mrf.mxu0
      %v1028 = vadd.f32 0.0, %v1027
      %1029 = vmatprep.mubr.f32.mxu0 0.0
      %1030 = vmatmul.mubr.f32.gmra.mxu0 %v864
      %v1031 = vpop.f32.mrf.mxu0
      %v1032 = vadd.f32 0.0, %v1031
      %v1033 = vpop.f32.mrf.mxu0
      %v1034 = vadd.f32 0.0, %v1033
      %1035 = vmatprep.mubr.f32.mxu0 0.0
      %1036 = vmatmul.mubr.f32.gmra.mxu0 %v867
      %v1037 = vpop.f32.mrf.mxu0
      %v1038 = vadd.f32 0.0, %v1037
      %v1039 = vpop.f32.mrf.mxu0
      %v1040 = vadd.f32 0.0, %v1039
      %1041 = vmatprep.mubr.f32.mxu0 0.0
      %1042 = vmatmul.mubr.f32.gmra.mxu0 %v870
      %v1043 = vpop.f32.mrf.mxu0
      %v1044 = vadd.f32 0.0, %v1043
      %v1045 = vpop.f32.mrf.mxu0
      %v1046 = vadd.f32 0.0, %v1045
      %1047 = vmatprep.mubr.f32.mxu0 0.0
      %1048 = vmatmul.mubr.f32.gmra.mxu0 %v873
      %v1049 = vpop.f32.mrf.mxu0
      %v1050 = vadd.f32 0.0, %v1049
      %v1051 = vpop.f32.mrf.mxu0
      %v1052 = vadd.f32 0.0, %v1051
      %1053 = vmatprep.mubr.f32.mxu0 0.0
      %1054 = vmatmul.mubr.f32.gmra.mxu0 %v876
      %v1055 = vpop.f32.mrf.mxu0
      %v1056 = vadd.f32 0.0, %v1055
      %v1057 = vpop.f32.mrf.mxu0
      %v1058 = vadd.f32 0.0, %v1057
      %1059 = vmatprep.mubr.f32.mxu0 0.0
      %1060 = vmatmul.mubr.f32.gmra.mxu0 %v879
      %v1061 = vpop.f32.mrf.mxu0
      %v1062 = vadd.f32 0.0, %v1061
      %v1063 = vpop.f32.mrf.mxu0
      %v1064 = vadd.f32 0.0, %v1063
      %1065 = vmatprep.mubr.f32.mxu0 0.0
      %1066 = vmatmul.mubr.f32.gmra.mxu0 %v882
      %v1067 = vpop.f32.mrf.mxu0
      %v1068 = vadd.f32 0.0, %v1067
      %v1069 = vpop.f32.mrf.mxu0
      %v1070 = vadd.f32 0.0, %v1069
      %1071 = vmatprep.mubr.f32.mxu0 0.0
      %1072 = vmatmul.mubr.f32.gmra.mxu0 %v885
      %v1073 = vpop.f32.mrf.mxu0
      %v1074 = vadd.f32 0.0, %v1073
      %v1075 = vpop.f32.mrf.mxu0
      %v1076 = vadd.f32 0.0, %v1075
      %1077 = vmatprep.mubr.f32.mxu0 0.0
      %1078 = vmatmul.mubr.f32.gmra.mxu0 %v888
      %v1079 = vpop.f32.mrf.mxu0
      %v1080 = vadd.f32 0.0, %v1079
      %v1081 = vpop.f32.mrf.mxu0
      %v1082 = vadd.f32 0.0, %v1081
      %1083 = vmatprep.mubr.f32.mxu0 0.0
      %1084 = vmatmul.mubr.f32.gmra.mxu0 %v891
      %v1085 = vpop.f32.mrf.mxu0
      %v1086 = vadd.f32 0.0, %v1085
      %v1087 = vpop.f32.mrf.mxu0
      %v1088 = vadd.f32 0.0, %v1087
      %1089 = vmatprep.mubr.f32.mxu0 0.0
      %1090 = vmatmul.mubr.f32.gmra.mxu0 %v894
      %v1091 = vpop.f32.mrf.mxu0
      %v1092 = vadd.f32 0.0, %v1091
      %v1093 = vpop.f32.mrf.mxu0
      %v1094 = vadd.f32 0.0, %v1093
      %1095 = vmatprep.mubr.f32.mxu0 0.0
      %1096 = vmatmul.mubr.f32.gmra.mxu0 %v897
      %v1097 = vpop.f32.mrf.mxu0
      %v1098 = vadd.f32 0.0, %v1097
      %v1099 = vpop.f32.mrf.mxu0
      %v1100 = vadd.f32 0.0, %v1099
      %1101 = vmatprep.mubr.f32.mxu0 0.0
      %1102 = vmatmul.mubr.f32.gmra.mxu0 %v900
      %v1103 = vpop.f32.mrf.mxu0
      %v1104 = vadd.f32 0.0, %v1103
      %v1105 = vpop.f32.mrf.mxu0
      %v1106 = vadd.f32 0.0, %v1105
      %1107 = vmatprep.mubr.f32.mxu0 0.0
      %1108 = vmatmul.mubr.f32.gmra.mxu0 %v903
      %v1109 = vpop.f32.mrf.mxu0
      %v1110 = vadd.f32 0.0, %v1109
      %v1111 = vpop.f32.mrf.mxu0
      %v1112 = vadd.f32 0.0, %v1111
      %1113 = vdwg.mxu0
      %1114 = vmatprep.subr.mxu0 0.0
      %1115 = vmatpush1.msra.mxu0 0.0
      %1116 = vmatprep.subr.mxu0 0.0
      %1117 = vmatpush1.msra.mxu0 0.0
      %1118 = vmatprep.subr.mxu0 0.0
      %1119 = vmatpush1.msra.mxu0 0.0
      %1120 = vmatprep.subr.mxu0 0.0
      %1121 = vmatpush1.msra.mxu0 0.0
      %1122 = vmatprep.subr.mxu0 0.0
      %1123 = vmatpush1.msra.mxu0 0.0
      %1124 = vmatprep.subr.mxu0 0.0
      %1125 = vmatpush1.msra.mxu0 0.0
      %1126 = vmatprep.subr.mxu0 0.0
      %1127 = vmatpush1.msra.mxu0 0.0
      %1128 = vmatprep.subr.mxu0 0.0
      %1129 = vmatpush1.msra.mxu0 0.0
      %1130 = vmatprep.subr.mxu0 0.0
      %1131 = vmatpush1.msra.mxu0 0.0
      %1132 = vmatprep.subr.mxu0 0.0
      %1133 = vmatpush1.msra.mxu0 0.0
      %1134 = vmatprep.subr.mxu0 0.0
      %1135 = vmatpush1.msra.mxu0 0.0
      %1136 = vmatprep.subr.mxu0 0.0
      %1137 = vmatpush1.msra.mxu0 0.0
      %1138 = vmatprep.subr.mxu0 %v515
      %1139 = vmatpush1.msra.mxu0 %v514
      %1140 = vmatprep.subr.mxu0 %v507
      %1141 = vmatpush1.msra.mxu0 %v506
      %1142 = vmatprep.subr.mxu0 %v499
      %1143 = vmatpush1.msra.mxu0 %v498
      %1144 = vmatprep.subr.mxu0 %v491
      %1145 = vmatpush1.msra.mxu0 %v490
      %1146 = vmatprep.subr.mxu0 0.0
      %1147 = vmatpush2.msra.mxu0 0.0
      %1148 = vmatprep.subr.mxu0 0.0
      %1149 = vmatpush2.msra.mxu0 0.0
      %1150 = vmatprep.subr.mxu0 0.0
      %1151 = vmatpush2.msra.mxu0 0.0
      %1152 = vmatprep.subr.mxu0 0.0
      %1153 = vmatpush2.msra.mxu0 0.0
      %1154 = vmatprep.subr.mxu0 0.0
      %1155 = vmatpush2.msra.mxu0 0.0
      %1156 = vmatprep.subr.mxu0 0.0
      %1157 = vmatpush2.msra.mxu0 0.0
      %1158 = vmatprep.subr.mxu0 0.0
      %1159 = vmatpush2.msra.mxu0 0.0
      %1160 = vmatprep.subr.mxu0 0.0
      %1161 = vmatpush2.msra.mxu0 0.0
      %1162 = vmatprep.subr.mxu0 0.0
      %1163 = vmatpush2.msra.mxu0 0.0
      %1164 = vmatprep.subr.mxu0 0.0
      %1165 = vmatpush2.msra.mxu0 0.0
      %1166 = vmatprep.subr.mxu0 0.0
      %1167 = vmatpush2.msra.mxu0 0.0
      %1168 = vmatprep.subr.mxu0 0.0
      %1169 = vmatpush2.msra.mxu0 0.0
      %1170 = vmatprep.subr.mxu0 0.0
      %1171 = vmatpush2.msra.mxu0 0.0
      %1172 = vmatprep.subr.mxu0 0.0
      %1173 = vmatpush2.msra.mxu0 0.0
      %1174 = vmatprep.subr.mxu0 0.0
      %1175 = vmatpush2.msra.mxu0 0.0
      %1176 = vmatprep.subr.mxu0 0.0
      %1177 = vmatpush2.msra.mxu0 0.0
      %1178 = vmatprep.mubr.f32.mxu0 0.0
      %1179 = vmatmul.mubr.f32.gmra.mxu0 %v834
      %v1180 = vpop.f32.mrf.mxu0
      %v1181 = vadd.f32 0.0, %v1180
      %v1182 = vpop.f32.mrf.mxu0
      %v1183 = vadd.f32 0.0, %v1182
      %1184 = vmatprep.mubr.f32.mxu0 0.0
      %1185 = vmatmul.mubr.f32.gmra.mxu0 %v837
      %v1186 = vpop.f32.mrf.mxu0
      %v1187 = vadd.f32 0.0, %v1186
      %v1188 = vpop.f32.mrf.mxu0
      %v1189 = vadd.f32 0.0, %v1188
      %1190 = vmatprep.mubr.f32.mxu0 0.0
      %1191 = vmatmul.mubr.f32.gmra.mxu0 %v840
      %v1192 = vpop.f32.mrf.mxu0
      %v1193 = vadd.f32 0.0, %v1192
      %v1194 = vpop.f32.mrf.mxu0
      %v1195 = vadd.f32 0.0, %v1194
      %1196 = vmatprep.mubr.f32.mxu0 0.0
      %1197 = vmatmul.mubr.f32.gmra.mxu0 %v843
      %v1198 = vpop.f32.mrf.mxu0
      %v1199 = vadd.f32 0.0, %v1198
      %v1200 = vpop.f32.mrf.mxu0
      %v1201 = vadd.f32 0.0, %v1200
      %1202 = vmatprep.mubr.f32.mxu0 0.0
      %1203 = vmatmul.mubr.f32.gmra.mxu0 %v846
      %v1204 = vpop.f32.mrf.mxu0
      %v1205 = vadd.f32 0.0, %v1204
      %v1206 = vpop.f32.mrf.mxu0
      %v1207 = vadd.f32 0.0, %v1206
      %1208 = vmatprep.mubr.f32.mxu0 0.0
      %1209 = vmatmul.mubr.f32.gmra.mxu0 %v849
      %v1210 = vpop.f32.mrf.mxu0
      %v1211 = vadd.f32 0.0, %v1210
      %v1212 = vpop.f32.mrf.mxu0
      %v1213 = vadd.f32 0.0, %v1212
      %1214 = vmatprep.mubr.f32.mxu0 0.0
      %1215 = vmatmul.mubr.f32.gmra.mxu0 %v852
      %v1216 = vpop.f32.mrf.mxu0
      %v1217 = vadd.f32 0.0, %v1216
      %v1218 = vpop.f32.mrf.mxu0
      %v1219 = vadd.f32 0.0, %v1218
      %1220 = vmatprep.mubr.f32.mxu0 0.0
      %1221 = vmatmul.mubr.f32.gmra.mxu0 %v855
      %v1222 = vpop.f32.mrf.mxu0
      %v1223 = vadd.f32 0.0, %v1222
      %v1224 = vpop.f32.mrf.mxu0
      %v1225 = vadd.f32 0.0, %v1224
      %1226 = vmatprep.mubr.f32.mxu0 0.0
      %1227 = vmatmul.mubr.f32.gmra.mxu0 %v858
      %v1228 = vpop.f32.mrf.mxu0
      %v1229 = vadd.f32 0.0, %v1228
      %v1230 = vpop.f32.mrf.mxu0
      %v1231 = vadd.f32 0.0, %v1230
      %1232 = vmatprep.mubr.f32.mxu0 0.0
      %1233 = vmatmul.mubr.f32.gmra.mxu0 %v861
      %v1234 = vpop.f32.mrf.mxu0
      %v1235 = vadd.f32 0.0, %v1234
      %v1236 = vpop.f32.mrf.mxu0
      %v1237 = vadd.f32 0.0, %v1236
      %1238 = vmatprep.mubr.f32.mxu0 0.0
      %1239 = vmatmul.mubr.f32.gmra.mxu0 %v864
      %v1240 = vpop.f32.mrf.mxu0
      %v1241 = vadd.f32 0.0, %v1240
      %v1242 = vpop.f32.mrf.mxu0
      %v1243 = vadd.f32 0.0, %v1242
      %1244 = vmatprep.mubr.f32.mxu0 0.0
      %1245 = vmatmul.mubr.f32.gmra.mxu0 %v867
      %v1246 = vpop.f32.mrf.mxu0
      %v1247 = vadd.f32 0.0, %v1246
      %v1248 = vpop.f32.mrf.mxu0
      %v1249 = vadd.f32 0.0, %v1248
      %1250 = vmatprep.mubr.f32.mxu0 0.0
      %1251 = vmatmul.mubr.f32.gmra.mxu0 %v870
      %v1252 = vpop.f32.mrf.mxu0
      %v1253 = vadd.f32 0.0, %v1252
      %v1254 = vpop.f32.mrf.mxu0
      %v1255 = vadd.f32 0.0, %v1254
      %1256 = vmatprep.mubr.f32.mxu0 0.0
      %1257 = vmatmul.mubr.f32.gmra.mxu0 %v873
      %v1258 = vpop.f32.mrf.mxu0
      %v1259 = vadd.f32 0.0, %v1258
      %v1260 = vpop.f32.mrf.mxu0
      %v1261 = vadd.f32 0.0, %v1260
      %1262 = vmatprep.mubr.f32.mxu0 0.0
      %1263 = vmatmul.mubr.f32.gmra.mxu0 %v876
      %v1264 = vpop.f32.mrf.mxu0
      %v1265 = vadd.f32 0.0, %v1264
      %v1266 = vpop.f32.mrf.mxu0
      %v1267 = vadd.f32 0.0, %v1266
      %1268 = vmatprep.mubr.f32.mxu0 0.0
      %1269 = vmatmul.mubr.f32.gmra.mxu0 %v879
      %v1270 = vpop.f32.mrf.mxu0
      %v1271 = vadd.f32 0.0, %v1270
      %v1272 = vpop.f32.mrf.mxu0
      %v1273 = vadd.f32 0.0, %v1272
      %1274 = vmatprep.mubr.f32.mxu0 0.0
      %1275 = vmatmul.mubr.f32.gmra.mxu0 %v882
      %v1276 = vpop.f32.mrf.mxu0
      %v1277 = vadd.f32 0.0, %v1276
      %v1278 = vpop.f32.mrf.mxu0
      %v1279 = vadd.f32 0.0, %v1278
      %1280 = vmatprep.mubr.f32.mxu0 0.0
      %1281 = vmatmul.mubr.f32.gmra.mxu0 %v885
      %v1282 = vpop.f32.mrf.mxu0
      %v1283 = vadd.f32 0.0, %v1282
      %v1284 = vpop.f32.mrf.mxu0
      %v1285 = vadd.f32 0.0, %v1284
      %1286 = vmatprep.mubr.f32.mxu0 0.0
      %1287 = vmatmul.mubr.f32.gmra.mxu0 %v888
      %v1288 = vpop.f32.mrf.mxu0
      %v1289 = vadd.f32 0.0, %v1288
      %v1290 = vpop.f32.mrf.mxu0
      %v1291 = vadd.f32 0.0, %v1290
      %1292 = vmatprep.mubr.f32.mxu0 0.0
      %1293 = vmatmul.mubr.f32.gmra.mxu0 %v891
      %v1294 = vpop.f32.mrf.mxu0
      %v1295 = vadd.f32 0.0, %v1294
      %v1296 = vpop.f32.mrf.mxu0
      %v1297 = vadd.f32 0.0, %v1296
      %1298 = vmatprep.mubr.f32.mxu0 0.0
      %1299 = vmatmul.mubr.f32.gmra.mxu0 %v894
      %v1300 = vpop.f32.mrf.mxu0
      %v1301 = vadd.f32 0.0, %v1300
      %v1302 = vpop.f32.mrf.mxu0
      %v1303 = vadd.f32 0.0, %v1302
      %1304 = vmatprep.mubr.f32.mxu0 0.0
      %1305 = vmatmul.mubr.f32.gmra.mxu0 %v897
      %v1306 = vpop.f32.mrf.mxu0
      %v1307 = vadd.f32 0.0, %v1306
      %v1308 = vpop.f32.mrf.mxu0
      %v1309 = vadd.f32 0.0, %v1308
      %1310 = vmatprep.mubr.f32.mxu0 0.0
      %1311 = vmatmul.mubr.f32.gmra.mxu0 %v900
      %v1312 = vpop.f32.mrf.mxu0
      %v1313 = vadd.f32 0.0, %v1312
      %v1314 = vpop.f32.mrf.mxu0
      %v1315 = vadd.f32 0.0, %v1314
      %1316 = vmatprep.mubr.f32.mxu0 0.0
      %1317 = vmatmul.mubr.f32.gmra.mxu0 %v903
      %v1318 = vpop.f32.mrf.mxu0
      %v1319 = vadd.f32 0.0, %v1318
      %v1320 = vpop.f32.mrf.mxu0
      %v1321 = vadd.f32 0.0, %v1320
      %1322 = vdwg.mxu0
      %1323 = vmatprep.subr.mxu0 0.0
      %1324 = vmatpush1.msra.mxu0 0.0
      %1325 = vmatprep.subr.mxu0 0.0
      %1326 = vmatpush1.msra.mxu0 0.0
      %1327 = vmatprep.subr.mxu0 0.0
      %1328 = vmatpush1.msra.mxu0 0.0
      %1329 = vmatprep.subr.mxu0 0.0
      %1330 = vmatpush1.msra.mxu0 0.0
      %1331 = vmatprep.subr.mxu0 0.0
      %1332 = vmatpush1.msra.mxu0 0.0
      %1333 = vmatprep.subr.mxu0 0.0
      %1334 = vmatpush1.msra.mxu0 0.0
      %1335 = vmatprep.subr.mxu0 0.0
      %1336 = vmatpush1.msra.mxu0 0.0
      %1337 = vmatprep.subr.mxu0 0.0
      %1338 = vmatpush1.msra.mxu0 0.0
      %1339 = vmatprep.subr.mxu0 0.0
      %1340 = vmatpush1.msra.mxu0 0.0
      %1341 = vmatprep.subr.mxu0 0.0
      %1342 = vmatpush1.msra.mxu0 0.0
      %1343 = vmatprep.subr.mxu0 0.0
      %1344 = vmatpush1.msra.mxu0 0.0
      %1345 = vmatprep.subr.mxu0 0.0
      %1346 = vmatpush1.msra.mxu0 0.0
      %1347 = vmatprep.subr.mxu0 %v517
      %1348 = vmatpush1.msra.mxu0 %v516
      %1349 = vmatprep.subr.mxu0 %v509
      %1350 = vmatpush1.msra.mxu0 %v508
      %1351 = vmatprep.subr.mxu0 %v501
      %1352 = vmatpush1.msra.mxu0 %v500
      %1353 = vmatprep.subr.mxu0 %v493
      %1354 = vmatpush1.msra.mxu0 %v492
      %1355 = vmatprep.subr.mxu0 0.0
      %1356 = vmatpush2.msra.mxu0 0.0
      %1357 = vmatprep.subr.mxu0 0.0
      %1358 = vmatpush2.msra.mxu0 0.0
      %1359 = vmatprep.subr.mxu0 0.0
      %1360 = vmatpush2.msra.mxu0 0.0
      %1361 = vmatprep.subr.mxu0 0.0
      %1362 = vmatpush2.msra.mxu0 0.0
      %1363 = vmatprep.subr.mxu0 0.0
      %1364 = vmatpush2.msra.mxu0 0.0
      %1365 = vmatprep.subr.mxu0 0.0
      %1366 = vmatpush2.msra.mxu0 0.0
      %1367 = vmatprep.subr.mxu0 0.0
      %1368 = vmatpush2.msra.mxu0 0.0
      %1369 = vmatprep.subr.mxu0 0.0
      %1370 = vmatpush2.msra.mxu0 0.0
      %1371 = vmatprep.subr.mxu0 0.0
      %1372 = vmatpush2.msra.mxu0 0.0
      %1373 = vmatprep.subr.mxu0 0.0
      %1374 = vmatpush2.msra.mxu0 0.0
      %1375 = vmatprep.subr.mxu0 0.0
      %1376 = vmatpush2.msra.mxu0 0.0
      %1377 = vmatprep.subr.mxu0 0.0
      %1378 = vmatpush2.msra.mxu0 0.0
      %1379 = vmatprep.subr.mxu0 0.0
      %1380 = vmatpush2.msra.mxu0 0.0
      %1381 = vmatprep.subr.mxu0 0.0
      %1382 = vmatpush2.msra.mxu0 0.0
      %1383 = vmatprep.subr.mxu0 0.0
      %1384 = vmatpush2.msra.mxu0 0.0
      %1385 = vmatprep.subr.mxu0 0.0
      %1386 = vmatpush2.msra.mxu0 0.0
      %1387 = vmatprep.mubr.f32.mxu0 0.0
      %1388 = vmatmul.mubr.f32.gmra.mxu0 %v834
      %v1389 = vpop.f32.mrf.mxu0
      %v1390 = vadd.f32 0.0, %v1389
      %v1391 = vpop.f32.mrf.mxu0
      %v1392 = vadd.f32 0.0, %v1391
      %1393 = vmatprep.mubr.f32.mxu0 0.0
      %1394 = vmatmul.mubr.f32.gmra.mxu0 %v837
      %v1395 = vpop.f32.mrf.mxu0
      %v1396 = vadd.f32 0.0, %v1395
      %v1397 = vpop.f32.mrf.mxu0
      %v1398 = vadd.f32 0.0, %v1397
      %1399 = vmatprep.mubr.f32.mxu0 0.0
      %1400 = vmatmul.mubr.f32.gmra.mxu0 %v840
      %v1401 = vpop.f32.mrf.mxu0
      %v1402 = vadd.f32 0.0, %v1401
      %v1403 = vpop.f32.mrf.mxu0
      %v1404 = vadd.f32 0.0, %v1403
      %1405 = vmatprep.mubr.f32.mxu0 0.0
      %1406 = vmatmul.mubr.f32.gmra.mxu0 %v843
      %v1407 = vpop.f32.mrf.mxu0
      %v1408 = vadd.f32 0.0, %v1407
      %v1409 = vpop.f32.mrf.mxu0
      %v1410 = vadd.f32 0.0, %v1409
      %1411 = vmatprep.mubr.f32.mxu0 0.0
      %1412 = vmatmul.mubr.f32.gmra.mxu0 %v846
      %v1413 = vpop.f32.mrf.mxu0
      %v1414 = vadd.f32 0.0, %v1413
      %v1415 = vpop.f32.mrf.mxu0
      %v1416 = vadd.f32 0.0, %v1415
      %1417 = vmatprep.mubr.f32.mxu0 0.0
      %1418 = vmatmul.mubr.f32.gmra.mxu0 %v849
      %v1419 = vpop.f32.mrf.mxu0
      %v1420 = vadd.f32 0.0, %v1419
      %v1421 = vpop.f32.mrf.mxu0
      %v1422 = vadd.f32 0.0, %v1421
      %1423 = vmatprep.mubr.f32.mxu0 0.0
      %1424 = vmatmul.mubr.f32.gmra.mxu0 %v852
      %v1425 = vpop.f32.mrf.mxu0
      %v1426 = vadd.f32 0.0, %v1425
      %v1427 = vpop.f32.mrf.mxu0
      %v1428 = vadd.f32 0.0, %v1427
      %1429 = vmatprep.mubr.f32.mxu0 0.0
      %1430 = vmatmul.mubr.f32.gmra.mxu0 %v855
      %v1431 = vpop.f32.mrf.mxu0
      %v1432 = vadd.f32 0.0, %v1431
      %v1433 = vpop.f32.mrf.mxu0
      %v1434 = vadd.f32 0.0, %v1433
      %1435 = vmatprep.mubr.f32.mxu0 0.0
      %1436 = vmatmul.mubr.f32.gmra.mxu0 %v858
      %v1437 = vpop.f32.mrf.mxu0
      %v1438 = vadd.f32 0.0, %v1437
      %v1439 = vpop.f32.mrf.mxu0
      %v1440 = vadd.f32 0.0, %v1439
      %1441 = vmatprep.mubr.f32.mxu0 0.0
      %1442 = vmatmul.mubr.f32.gmra.mxu0 %v861
      %v1443 = vpop.f32.mrf.mxu0
      %v1444 = vadd.f32 0.0, %v1443
      %v1445 = vpop.f32.mrf.mxu0
      %v1446 = vadd.f32 0.0, %v1445
      %1447 = vmatprep.mubr.f32.mxu0 0.0
      %1448 = vmatmul.mubr.f32.gmra.mxu0 %v864
      %v1449 = vpop.f32.mrf.mxu0
      %v1450 = vadd.f32 0.0, %v1449
      %v1451 = vpop.f32.mrf.mxu0
      %v1452 = vadd.f32 0.0, %v1451
      %1453 = vmatprep.mubr.f32.mxu0 0.0
      %1454 = vmatmul.mubr.f32.gmra.mxu0 %v867
      %v1455 = vpop.f32.mrf.mxu0
      %v1456 = vadd.f32 0.0, %v1455
      %v1457 = vpop.f32.mrf.mxu0
      %v1458 = vadd.f32 0.0, %v1457
      %1459 = vmatprep.mubr.f32.mxu0 0.0
      %1460 = vmatmul.mubr.f32.gmra.mxu0 %v870
      %v1461 = vpop.f32.mrf.mxu0
      %v1462 = vadd.f32 0.0, %v1461
      %v1463 = vpop.f32.mrf.mxu0
      %v1464 = vadd.f32 0.0, %v1463
      %1465 = vmatprep.mubr.f32.mxu0 0.0
      %1466 = vmatmul.mubr.f32.gmra.mxu0 %v873
      %v1467 = vpop.f32.mrf.mxu0
      %v1468 = vadd.f32 0.0, %v1467
      %v1469 = vpop.f32.mrf.mxu0
      %v1470 = vadd.f32 0.0, %v1469
      %1471 = vmatprep.mubr.f32.mxu0 0.0
      %1472 = vmatmul.mubr.f32.gmra.mxu0 %v876
      %v1473 = vpop.f32.mrf.mxu0
      %v1474 = vadd.f32 0.0, %v1473
      %v1475 = vpop.f32.mrf.mxu0
      %v1476 = vadd.f32 0.0, %v1475
      %1477 = vmatprep.mubr.f32.mxu0 0.0
      %1478 = vmatmul.mubr.f32.gmra.mxu0 %v879
      %v1479 = vpop.f32.mrf.mxu0
      %v1480 = vadd.f32 0.0, %v1479
      %v1481 = vpop.f32.mrf.mxu0
      %v1482 = vadd.f32 0.0, %v1481
      %1483 = vmatprep.mubr.f32.mxu0 0.0
      %1484 = vmatmul.mubr.f32.gmra.mxu0 %v882
      %v1485 = vpop.f32.mrf.mxu0
      %v1486 = vadd.f32 0.0, %v1485
      %v1487 = vpop.f32.mrf.mxu0
      %v1488 = vadd.f32 0.0, %v1487
      %1489 = vmatprep.mubr.f32.mxu0 0.0
      %1490 = vmatmul.mubr.f32.gmra.mxu0 %v885
      %v1491 = vpop.f32.mrf.mxu0
      %v1492 = vadd.f32 0.0, %v1491
      %v1493 = vpop.f32.mrf.mxu0
      %v1494 = vadd.f32 0.0, %v1493
      %1495 = vmatprep.mubr.f32.mxu0 0.0
      %1496 = vmatmul.mubr.f32.gmra.mxu0 %v888
      %v1497 = vpop.f32.mrf.mxu0
      %v1498 = vadd.f32 0.0, %v1497
      %v1499 = vpop.f32.mrf.mxu0
      %v1500 = vadd.f32 0.0, %v1499
      %1501 = vmatprep.mubr.f32.mxu0 0.0
      %1502 = vmatmul.mubr.f32.gmra.mxu0 %v891
      %v1503 = vpop.f32.mrf.mxu0
      %v1504 = vadd.f32 0.0, %v1503
      %v1505 = vpop.f32.mrf.mxu0
      %v1506 = vadd.f32 0.0, %v1505
      %1507 = vmatprep.mubr.f32.mxu0 0.0
      %1508 = vmatmul.mubr.f32.gmra.mxu0 %v894
      %v1509 = vpop.f32.mrf.mxu0
      %v1510 = vadd.f32 0.0, %v1509
      %v1511 = vpop.f32.mrf.mxu0
      %v1512 = vadd.f32 0.0, %v1511
      %1513 = vmatprep.mubr.f32.mxu0 0.0
      %1514 = vmatmul.mubr.f32.gmra.mxu0 %v897
      %v1515 = vpop.f32.mrf.mxu0
      %v1516 = vadd.f32 0.0, %v1515
      %v1517 = vpop.f32.mrf.mxu0
      %v1518 = vadd.f32 0.0, %v1517
      %1519 = vmatprep.mubr.f32.mxu0 0.0
      %1520 = vmatmul.mubr.f32.gmra.mxu0 %v900
      %v1521 = vpop.f32.mrf.mxu0
      %v1522 = vadd.f32 0.0, %v1521
      %v1523 = vpop.f32.mrf.mxu0
      %v1524 = vadd.f32 0.0, %v1523
      %1525 = vmatprep.mubr.f32.mxu0 0.0
      %1526 = vmatmul.mubr.f32.gmra.mxu0 %v903
      %v1527 = vpop.f32.mrf.mxu0
      %v1528 = vadd.f32 0.0, %v1527
      %v1529 = vpop.f32.mrf.mxu0
      %v1530 = vadd.f32 0.0, %v1529
      %1531 = vdwg.mxu0
      %1532 = vmatprep.subr.mxu0 0.0
      %1533 = vmatpush1.msra.mxu0 0.0
      %1534 = vmatprep.subr.mxu0 0.0
      %1535 = vmatpush1.msra.mxu0 0.0
      %1536 = vmatprep.subr.mxu0 0.0
      %1537 = vmatpush1.msra.mxu0 0.0
      %1538 = vmatprep.subr.mxu0 0.0
      %1539 = vmatpush1.msra.mxu0 0.0
      %1540 = vmatprep.subr.mxu0 0.0
      %1541 = vmatpush1.msra.mxu0 0.0
      %1542 = vmatprep.subr.mxu0 0.0
      %1543 = vmatpush1.msra.mxu0 0.0
      %1544 = vmatprep.subr.mxu0 0.0
      %1545 = vmatpush1.msra.mxu0 0.0
      %1546 = vmatprep.subr.mxu0 0.0
      %1547 = vmatpush1.msra.mxu0 0.0
      %1548 = vmatprep.subr.mxu0 0.0
      %1549 = vmatpush1.msra.mxu0 0.0
      %1550 = vmatprep.subr.mxu0 0.0
      %1551 = vmatpush1.msra.mxu0 0.0
      %1552 = vmatprep.subr.mxu0 0.0
      %1553 = vmatpush1.msra.mxu0 0.0
      %1554 = vmatprep.subr.mxu0 0.0
      %1555 = vmatpush1.msra.mxu0 0.0
      %1556 = vmatprep.subr.mxu0 %v519
      %1557 = vmatpush1.msra.mxu0 %v518
      %1558 = vmatprep.subr.mxu0 %v511
      %1559 = vmatpush1.msra.mxu0 %v510
      %1560 = vmatprep.subr.mxu0 %v503
      %1561 = vmatpush1.msra.mxu0 %v502
      %1562 = vmatprep.subr.mxu0 %v495
      %1563 = vmatpush1.msra.mxu0 %v494
      %1564 = vmatprep.subr.mxu0 0.0
      %1565 = vmatpush2.msra.mxu0 0.0
      %1566 = vmatprep.subr.mxu0 0.0
      %1567 = vmatpush2.msra.mxu0 0.0
      %1568 = vmatprep.subr.mxu0 0.0
      %1569 = vmatpush2.msra.mxu0 0.0
      %1570 = vmatprep.subr.mxu0 0.0
      %1571 = vmatpush2.msra.mxu0 0.0
      %1572 = vmatprep.subr.mxu0 0.0
      %1573 = vmatpush2.msra.mxu0 0.0
      %1574 = vmatprep.subr.mxu0 0.0
      %1575 = vmatpush2.msra.mxu0 0.0
      %1576 = vmatprep.subr.mxu0 0.0
      %1577 = vmatpush2.msra.mxu0 0.0
      %1578 = vmatprep.subr.mxu0 0.0
      %1579 = vmatpush2.msra.mxu0 0.0
      %1580 = vmatprep.subr.mxu0 0.0
      %1581 = vmatpush2.msra.mxu0 0.0
      %1582 = vmatprep.subr.mxu0 0.0
      %1583 = vmatpush2.msra.mxu0 0.0
      %1584 = vmatprep.subr.mxu0 0.0
      %1585 = vmatpush2.msra.mxu0 0.0
      %1586 = vmatprep.subr.mxu0 0.0
      %1587 = vmatpush2.msra.mxu0 0.0
      %1588 = vmatprep.subr.mxu0 0.0
      %1589 = vmatpush2.msra.mxu0 0.0
      %1590 = vmatprep.subr.mxu0 0.0
      %1591 = vmatpush2.msra.mxu0 0.0
      %1592 = vmatprep.subr.mxu0 0.0
      %1593 = vmatpush2.msra.mxu0 0.0
      %1594 = vmatprep.subr.mxu0 0.0
      %1595 = vmatpush2.msra.mxu0 0.0
      %1596 = vmatprep.mubr.f32.mxu0 0.0
      %1597 = vmatmul.mubr.f32.gmra.mxu0 %v834
      %v1598 = vpop.f32.mrf.mxu0
      %v1599 = vadd.f32 0.0, %v1598
      %v1600 = vpop.f32.mrf.mxu0
      %v1601 = vadd.f32 0.0, %v1600
      %1602 = vmatprep.mubr.f32.mxu0 0.0
      %1603 = vmatmul.mubr.f32.gmra.mxu0 %v837
      %v1604 = vpop.f32.mrf.mxu0
      %v1605 = vadd.f32 0.0, %v1604
      %v1606 = vpop.f32.mrf.mxu0
      %v1607 = vadd.f32 0.0, %v1606
      %1608 = vmatprep.mubr.f32.mxu0 0.0
      %1609 = vmatmul.mubr.f32.gmra.mxu0 %v840
      %v1610 = vpop.f32.mrf.mxu0
      %v1611 = vadd.f32 0.0, %v1610
      %v1612 = vpop.f32.mrf.mxu0
      %v1613 = vadd.f32 0.0, %v1612
      %1614 = vmatprep.mubr.f32.mxu0 0.0
      %1615 = vmatmul.mubr.f32.gmra.mxu0 %v843
      %v1616 = vpop.f32.mrf.mxu0
      %v1617 = vadd.f32 0.0, %v1616
      %v1618 = vpop.f32.mrf.mxu0
      %v1619 = vadd.f32 0.0, %v1618
      %1620 = vmatprep.mubr.f32.mxu0 0.0
      %1621 = vmatmul.mubr.f32.gmra.mxu0 %v846
      %v1622 = vpop.f32.mrf.mxu0
      %v1623 = vadd.f32 0.0, %v1622
      %v1624 = vpop.f32.mrf.mxu0
      %v1625 = vadd.f32 0.0, %v1624
      %1626 = vmatprep.mubr.f32.mxu0 0.0
      %1627 = vmatmul.mubr.f32.gmra.mxu0 %v849
      %v1628 = vpop.f32.mrf.mxu0
      %v1629 = vadd.f32 0.0, %v1628
      %v1630 = vpop.f32.mrf.mxu0
      %v1631 = vadd.f32 0.0, %v1630
      %1632 = vmatprep.mubr.f32.mxu0 0.0
      %1633 = vmatmul.mubr.f32.gmra.mxu0 %v852
      %v1634 = vpop.f32.mrf.mxu0
      %v1635 = vadd.f32 0.0, %v1634
      %v1636 = vpop.f32.mrf.mxu0
      %v1637 = vadd.f32 0.0, %v1636
      %1638 = vmatprep.mubr.f32.mxu0 0.0
      %1639 = vmatmul.mubr.f32.gmra.mxu0 %v855
      %v1640 = vpop.f32.mrf.mxu0
      %v1641 = vadd.f32 0.0, %v1640
      %v1642 = vpop.f32.mrf.mxu0
      %v1643 = vadd.f32 0.0, %v1642
      %1644 = vmatprep.mubr.f32.mxu0 0.0
      %1645 = vmatmul.mubr.f32.gmra.mxu0 %v858
      %v1646 = vpop.f32.mrf.mxu0
      %v1647 = vadd.f32 0.0, %v1646
      %v1648 = vpop.f32.mrf.mxu0
      %v1649 = vadd.f32 0.0, %v1648
      %1650 = vmatprep.mubr.f32.mxu0 0.0
      %1651 = vmatmul.mubr.f32.gmra.mxu0 %v861
      %v1652 = vpop.f32.mrf.mxu0
      %v1653 = vadd.f32 0.0, %v1652
      %v1654 = vpop.f32.mrf.mxu0
      %v1655 = vadd.f32 0.0, %v1654
      %1656 = vmatprep.mubr.f32.mxu0 0.0
      %1657 = vmatmul.mubr.f32.gmra.mxu0 %v864
      %v1658 = vpop.f32.mrf.mxu0
      %v1659 = vadd.f32 0.0, %v1658
      %v1660 = vpop.f32.mrf.mxu0
      %v1661 = vadd.f32 0.0, %v1660
      %1662 = vmatprep.mubr.f32.mxu0 0.0
      %1663 = vmatmul.mubr.f32.gmra.mxu0 %v867
      %v1664 = vpop.f32.mrf.mxu0
      %v1665 = vadd.f32 0.0, %v1664
      %v1666 = vpop.f32.mrf.mxu0
      %v1667 = vadd.f32 0.0, %v1666
      %1668 = vmatprep.mubr.f32.mxu0 0.0
      %1669 = vmatmul.mubr.f32.gmra.mxu0 %v870
      %v1670 = vpop.f32.mrf.mxu0
      %v1671 = vadd.f32 0.0, %v1670
      %v1672 = vpop.f32.mrf.mxu0
      %v1673 = vadd.f32 0.0, %v1672
      %1674 = vmatprep.mubr.f32.mxu0 0.0
      %1675 = vmatmul.mubr.f32.gmra.mxu0 %v873
      %v1676 = vpop.f32.mrf.mxu0
      %v1677 = vadd.f32 0.0, %v1676
      %v1678 = vpop.f32.mrf.mxu0
      %v1679 = vadd.f32 0.0, %v1678
      %1680 = vmatprep.mubr.f32.mxu0 0.0
      %1681 = vmatmul.mubr.f32.gmra.mxu0 %v876
      %v1682 = vpop.f32.mrf.mxu0
      %v1683 = vadd.f32 0.0, %v1682
      %v1684 = vpop.f32.mrf.mxu0
      %v1685 = vadd.f32 0.0, %v1684
      %1686 = vmatprep.mubr.f32.mxu0 0.0
      %1687 = vmatmul.mubr.f32.gmra.mxu0 %v879
      %v1688 = vpop.f32.mrf.mxu0
      %v1689 = vadd.f32 0.0, %v1688
      %v1690 = vpop.f32.mrf.mxu0
      %v1691 = vadd.f32 0.0, %v1690
      %1692 = vmatprep.mubr.f32.mxu0 0.0
      %1693 = vmatmul.mubr.f32.gmra.mxu0 %v882
      %v1694 = vpop.f32.mrf.mxu0
      %v1695 = vadd.f32 0.0, %v1694
      %v1696 = vpop.f32.mrf.mxu0
      %v1697 = vadd.f32 0.0, %v1696
      %1698 = vmatprep.mubr.f32.mxu0 0.0
      %1699 = vmatmul.mubr.f32.gmra.mxu0 %v885
      %v1700 = vpop.f32.mrf.mxu0
      %v1701 = vadd.f32 0.0, %v1700
      %v1702 = vpop.f32.mrf.mxu0
      %v1703 = vadd.f32 0.0, %v1702
      %1704 = vmatprep.mubr.f32.mxu0 0.0
      %1705 = vmatmul.mubr.f32.gmra.mxu0 %v888
      %v1706 = vpop.f32.mrf.mxu0
      %v1707 = vadd.f32 0.0, %v1706
      %v1708 = vpop.f32.mrf.mxu0
      %v1709 = vadd.f32 0.0, %v1708
      %1710 = vmatprep.mubr.f32.mxu0 0.0
      %1711 = vmatmul.mubr.f32.gmra.mxu0 %v891
      %v1712 = vpop.f32.mrf.mxu0
      %v1713 = vadd.f32 0.0, %v1712
      %v1714 = vpop.f32.mrf.mxu0
      %v1715 = vadd.f32 0.0, %v1714
      %1716 = vmatprep.mubr.f32.mxu0 0.0
      %1717 = vmatmul.mubr.f32.gmra.mxu0 %v894
      %v1718 = vpop.f32.mrf.mxu0
      %v1719 = vadd.f32 0.0, %v1718
      %v1720 = vpop.f32.mrf.mxu0
      %v1721 = vadd.f32 0.0, %v1720
      %1722 = vmatprep.mubr.f32.mxu0 0.0
      %1723 = vmatmul.mubr.f32.gmra.mxu0 %v897
      %v1724 = vpop.f32.mrf.mxu0
      %v1725 = vadd.f32 0.0, %v1724
      %v1726 = vpop.f32.mrf.mxu0
      %v1727 = vadd.f32 0.0, %v1726
      %1728 = vmatprep.mubr.f32.mxu0 0.0
      %1729 = vmatmul.mubr.f32.gmra.mxu0 %v900
      %v1730 = vpop.f32.mrf.mxu0
      %v1731 = vadd.f32 0.0, %v1730
      %v1732 = vpop.f32.mrf.mxu0
      %v1733 = vadd.f32 0.0, %v1732
      %1734 = vmatprep.mubr.f32.mxu0 0.0
      %1735 = vmatmul.mubr.f32.gmra.mxu0 %v903
      %v1736 = vpop.f32.mrf.mxu0
      %v1737 = vadd.f32 0.0, %v1736
      %v1738 = vpop.f32.mrf.mxu0
      %v1739 = vadd.f32 0.0, %v1738
      %1740 = vdwg.mxu0
      %v1741 = vmul.f32 %v972, %v776
      %v1742 = vmul.f32 %v974, %v777
      %v1743 = vmul.f32 %v1181, %v778
      %v1744 = vmul.f32 %v1183, %v779
      %v1745 = vmul.f32 %v1390, %v780
      %v1746 = vmul.f32 %v1392, %v781
      %v1747 = vmul.f32 %v1599, %v782
      %v1748 = vmul.f32 %v1601, %v783
      %v1749 = vmul.f32 %v978, %v784
      %v1750 = vmul.f32 %v980, %v785
      %v1751 = vmul.f32 %v1187, %v786
      %v1752 = vmul.f32 %v1189, %v787
      %v1753 = vmul.f32 %v1396, %v788
      %v1754 = vmul.f32 %v1398, %v789
      %v1755 = vmul.f32 %v1605, %v790
      %v1756 = vmul.f32 %v1607, %v791
      %v1757 = vmul.f32 %v984, %v792
      %v1758 = vmul.f32 %v986, %v793
      %v1759 = vmul.f32 %v1193, %v794
      %v1760 = vmul.f32 %v1195, %v795
      %v1761 = vmul.f32 %v1402, %v796
      %v1762 = vmul.f32 %v1404, %v797
      %v1763 = vmul.f32 %v1611, %v798
      %v1764 = vmul.f32 %v1613, %v799
      %v1765 = vmul.f32 %v990, %v800
      %v1766 = vmul.f32 %v992, %v801
      %v1767 = vmul.f32 %v1199, %v802
      %v1768 = vmul.f32 %v1201, %v803
      %v1769 = vmul.f32 %v1408, %v804
      %v1770 = vmul.f32 %v1410, %v805
      %v1771 = vmul.f32 %v1617, %v806
      %v1772 = vmul.f32 %v1619, %v807
      %v1773 = vmul.f32 %v996, %v776
      %v1774 = vmul.f32 %v998, %v777
      %v1775 = vmul.f32 %v1205, %v778
      %v1776 = vmul.f32 %v1207, %v779
      %v1777 = vmul.f32 %v1414, %v780
      %v1778 = vmul.f32 %v1416, %v781
      %v1779 = vmul.f32 %v1623, %v782
      %v1780 = vmul.f32 %v1625, %v783
      %v1781 = vmul.f32 %v1002, %v784
      %v1782 = vmul.f32 %v1004, %v785
      %v1783 = vmul.f32 %v1211, %v786
      %v1784 = vmul.f32 %v1213, %v787
      %v1785 = vmul.f32 %v1420, %v788
      %v1786 = vmul.f32 %v1422, %v789
      %v1787 = vmul.f32 %v1629, %v790
      %v1788 = vmul.f32 %v1631, %v791
      %v1789 = vmul.f32 %v1008, %v792
      %v1790 = vmul.f32 %v1010, %v793
      %v1791 = vmul.f32 %v1217, %v794
      %v1792 = vmul.f32 %v1219, %v795
      %v1793 = vmul.f32 %v1426, %v796
      %v1794 = vmul.f32 %v1428, %v797
      %v1795 = vmul.f32 %v1635, %v798
      %v1796 = vmul.f32 %v1637, %v799
      %v1797 = vmul.f32 %v1014, %v800
      %v1798 = vmul.f32 %v1016, %v801
      %v1799 = vmul.f32 %v1223, %v802
      %v1800 = vmul.f32 %v1225, %v803
      %v1801 = vmul.f32 %v1432, %v804
      %v1802 = vmul.f32 %v1434, %v805
      %v1803 = vmul.f32 %v1641, %v806
      %v1804 = vmul.f32 %v1643, %v807
      %v1805 = vmul.f32 %v1020, %v776
      %v1806 = vmul.f32 %v1022, %v777
      %v1807 = vmul.f32 %v1229, %v778
      %v1808 = vmul.f32 %v1231, %v779
      %v1809 = vmul.f32 %v1438, %v780
      %v1810 = vmul.f32 %v1440, %v781
      %v1811 = vmul.f32 %v1647, %v782
      %v1812 = vmul.f32 %v1649, %v783
      %v1813 = vmul.f32 %v1026, %v784
      %v1814 = vmul.f32 %v1028, %v785
      %v1815 = vmul.f32 %v1235, %v786
      %v1816 = vmul.f32 %v1237, %v787
      %v1817 = vmul.f32 %v1444, %v788
      %v1818 = vmul.f32 %v1446, %v789
      %v1819 = vmul.f32 %v1653, %v790
      %v1820 = vmul.f32 %v1655, %v791
      %v1821 = vmul.f32 %v1032, %v792
      %v1822 = vmul.f32 %v1034, %v793
      %v1823 = vmul.f32 %v1241, %v794
      %v1824 = vmul.f32 %v1243, %v795
      %v1825 = vmul.f32 %v1450, %v796
      %v1826 = vmul.f32 %v1452, %v797
      %v1827 = vmul.f32 %v1659, %v798
      %v1828 = vmul.f32 %v1661, %v799
      %v1829 = vmul.f32 %v1038, %v800
      %v1830 = vmul.f32 %v1040, %v801
      %v1831 = vmul.f32 %v1247, %v802
      %v1832 = vmul.f32 %v1249, %v803
      %v1833 = vmul.f32 %v1456, %v804
      %v1834 = vmul.f32 %v1458, %v805
      %v1835 = vmul.f32 %v1665, %v806
      %v1836 = vmul.f32 %v1667, %v807
      %v1837 = vmul.f32 %v1044, %v776
      %v1838 = vmul.f32 %v1046, %v777
      %v1839 = vmul.f32 %v1253, %v778
      %v1840 = vmul.f32 %v1255, %v779
      %v1841 = vmul.f32 %v1462, %v780
      %v1842 = vmul.f32 %v1464, %v781
      %v1843 = vmul.f32 %v1671, %v782
      %v1844 = vmul.f32 %v1673, %v783
      %v1845 = vmul.f32 %v1050, %v784
      %v1846 = vmul.f32 %v1052, %v785
      %v1847 = vmul.f32 %v1259, %v786
      %v1848 = vmul.f32 %v1261, %v787
      %v1849 = vmul.f32 %v1468, %v788
      %v1850 = vmul.f32 %v1470, %v789
      %v1851 = vmul.f32 %v1677, %v790
      %v1852 = vmul.f32 %v1679, %v791
      %v1853 = vmul.f32 %v1056, %v792
      %v1854 = vmul.f32 %v1058, %v793
      %v1855 = vmul.f32 %v1265, %v794
      %v1856 = vmul.f32 %v1267, %v795
      %v1857 = vmul.f32 %v1474, %v796
      %v1858 = vmul.f32 %v1476, %v797
      %v1859 = vmul.f32 %v1683, %v798
      %v1860 = vmul.f32 %v1685, %v799
      %v1861 = vmul.f32 %v1062, %v800
      %v1862 = vmul.f32 %v1064, %v801
      %v1863 = vmul.f32 %v1271, %v802
      %v1864 = vmul.f32 %v1273, %v803
      %v1865 = vmul.f32 %v1480, %v804
      %v1866 = vmul.f32 %v1482, %v805
      %v1867 = vmul.f32 %v1689, %v806
      %v1868 = vmul.f32 %v1691, %v807
      %v1869 = vmul.f32 %v1068, %v776
      %v1870 = vmul.f32 %v1070, %v777
      %v1871 = vmul.f32 %v1277, %v778
      %v1872 = vmul.f32 %v1279, %v779
      %v1873 = vmul.f32 %v1486, %v780
      %v1874 = vmul.f32 %v1488, %v781
      %v1875 = vmul.f32 %v1695, %v782
      %v1876 = vmul.f32 %v1697, %v783
      %v1877 = vmul.f32 %v1074, %v784
      %v1878 = vmul.f32 %v1076, %v785
      %v1879 = vmul.f32 %v1283, %v786
      %v1880 = vmul.f32 %v1285, %v787
      %v1881 = vmul.f32 %v1492, %v788
      %v1882 = vmul.f32 %v1494, %v789
      %v1883 = vmul.f32 %v1701, %v790
      %v1884 = vmul.f32 %v1703, %v791
      %v1885 = vmul.f32 %v1080, %v792
      %v1886 = vmul.f32 %v1082, %v793
      %v1887 = vmul.f32 %v1289, %v794
      %v1888 = vmul.f32 %v1291, %v795
      %v1889 = vmul.f32 %v1498, %v796
      %v1890 = vmul.f32 %v1500, %v797
      %v1891 = vmul.f32 %v1707, %v798
      %v1892 = vmul.f32 %v1709, %v799
      %v1893 = vmul.f32 %v1086, %v800
      %v1894 = vmul.f32 %v1088, %v801
      %v1895 = vmul.f32 %v1295, %v802
      %v1896 = vmul.f32 %v1297, %v803
      %v1897 = vmul.f32 %v1504, %v804
      %v1898 = vmul.f32 %v1506, %v805
      %v1899 = vmul.f32 %v1713, %v806
      %v1900 = vmul.f32 %v1715, %v807
      %v1901 = vmul.f32 %v1092, %v776
      %v1902 = vmul.f32 %v1094, %v777
      %v1903 = vmul.f32 %v1301, %v778
      %v1904 = vmul.f32 %v1303, %v779
      %v1905 = vmul.f32 %v1510, %v780
      %v1906 = vmul.f32 %v1512, %v781
      %v1907 = vmul.f32 %v1719, %v782
      %v1908 = vmul.f32 %v1721, %v783
      %v1909 = vmul.f32 %v1098, %v784
      %v1910 = vmul.f32 %v1100, %v785
      %v1911 = vmul.f32 %v1307, %v786
      %v1912 = vmul.f32 %v1309, %v787
      %v1913 = vmul.f32 %v1516, %v788
      %v1914 = vmul.f32 %v1518, %v789
      %v1915 = vmul.f32 %v1725, %v790
      %v1916 = vmul.f32 %v1727, %v791
      %v1917 = vmul.f32 %v1104, %v792
      %v1918 = vmul.f32 %v1106, %v793
      %v1919 = vmul.f32 %v1313, %v794
      %v1920 = vmul.f32 %v1315, %v795
      %v1921 = vmul.f32 %v1522, %v796
      %v1922 = vmul.f32 %v1524, %v797
      %v1923 = vmul.f32 %v1731, %v798
      %v1924 = vmul.f32 %v1733, %v799
      %v1925 = vmul.f32 %v1110, %v800
      %v1926 = vmul.f32 %v1112, %v801
      %v1927 = vmul.f32 %v1319, %v802
      %v1928 = vmul.f32 %v1321, %v803
      %v1929 = vmul.f32 %v1528, %v804
      %v1930 = vmul.f32 %v1530, %v805
      %v1931 = vmul.f32 %v1737, %v806
      %v1932 = vmul.f32 %v1739, %v807
      %v1933 = vadd.f32 %v1741, %v1749
      %v1934 = vadd.f32 %v1933, %v1757
      %v1935 = vadd.f32 %v1934, %v1765
      %v1936 = vrot.slane %v1935, 4
      %v1937 = vadd.f32 %v1935, %v1936
      %v1938 = vrot.slane %v1937, 2
      %v1939 = vadd.f32 %v1937, %v1938
      %v1940 = vrot.slane %v1939, 1
      %v1941 = vadd.f32 %v1939, %v1940
      %v1942 = vadd.f32 %v1742, %v1750
      %v1943 = vadd.f32 %v1942, %v1758
      %v1944 = vadd.f32 %v1943, %v1766
      %v1945 = vrot.slane %v1944, 4
      %v1946 = vadd.f32 %v1944, %v1945
      %v1947 = vrot.slane %v1946, 2
      %v1948 = vadd.f32 %v1946, %v1947
      %v1949 = vrot.slane %v1948, 1
      %v1950 = vadd.f32 %v1948, %v1949
      %v1951 = vadd.f32 %v1743, %v1751
      %v1952 = vadd.f32 %v1951, %v1759
      %v1953 = vadd.f32 %v1952, %v1767
      %v1954 = vrot.slane %v1953, 4
      %v1955 = vadd.f32 %v1953, %v1954
      %v1956 = vrot.slane %v1955, 2
      %v1957 = vadd.f32 %v1955, %v1956
      %v1958 = vrot.slane %v1957, 1
      %v1959 = vadd.f32 %v1957, %v1958
      %v1960 = vadd.f32 %v1744, %v1752
      %v1961 = vadd.f32 %v1960, %v1760
      %v1962 = vadd.f32 %v1961, %v1768
      %v1963 = vrot.slane %v1962, 4
      %v1964 = vadd.f32 %v1962, %v1963
      %v1965 = vrot.slane %v1964, 2
      %v1966 = vadd.f32 %v1964, %v1965
      %v1967 = vrot.slane %v1966, 1
      %v1968 = vadd.f32 %v1966, %v1967
      %v1969 = vadd.f32 %v1745, %v1753
      %v1970 = vadd.f32 %v1969, %v1761
      %v1971 = vadd.f32 %v1970, %v1769
      %v1972 = vrot.slane %v1971, 4
      %v1973 = vadd.f32 %v1971, %v1972
      %v1974 = vrot.slane %v1973, 2
      %v1975 = vadd.f32 %v1973, %v1974
      %v1976 = vrot.slane %v1975, 1
      %v1977 = vadd.f32 %v1975, %v1976
      %v1978 = vadd.f32 %v1746, %v1754
      %v1979 = vadd.f32 %v1978, %v1762
      %v1980 = vadd.f32 %v1979, %v1770
      %v1981 = vrot.slane %v1980, 4
      %v1982 = vadd.f32 %v1980, %v1981
      %v1983 = vrot.slane %v1982, 2
      %v1984 = vadd.f32 %v1982, %v1983
      %v1985 = vrot.slane %v1984, 1
      %v1986 = vadd.f32 %v1984, %v1985
      %v1987 = vadd.f32 %v1747, %v1755
      %v1988 = vadd.f32 %v1987, %v1763
      %v1989 = vadd.f32 %v1988, %v1771
      %v1990 = vrot.slane %v1989, 4
      %v1991 = vadd.f32 %v1989, %v1990
      %v1992 = vrot.slane %v1991, 2
      %v1993 = vadd.f32 %v1991, %v1992
      %v1994 = vrot.slane %v1993, 1
      %v1995 = vadd.f32 %v1993, %v1994
      %v1996 = vadd.f32 %v1748, %v1756
      %v1997 = vadd.f32 %v1996, %v1764
      %v1998 = vadd.f32 %v1997, %v1772
      %v1999 = vrot.slane %v1998, 4
      %v2000 = vadd.f32 %v1998, %v1999
      %v2001 = vrot.slane %v2000, 2
      %v2002 = vadd.f32 %v2000, %v2001
      %v2003 = vrot.slane %v2002, 1
      %v2004 = vadd.f32 %v2002, %v2003
      %v2005 = vadd.f32 %v1773, %v1781
      %v2006 = vadd.f32 %v2005, %v1789
      %v2007 = vadd.f32 %v2006, %v1797
      %v2008 = vrot.slane %v2007, 4
      %v2009 = vadd.f32 %v2007, %v2008
      %v2010 = vrot.slane %v2009, 2
      %v2011 = vadd.f32 %v2009, %v2010
      %v2012 = vrot.slane %v2011, 1
      %v2013 = vadd.f32 %v2011, %v2012
      %v2014 = vadd.f32 %v1774, %v1782
      %v2015 = vadd.f32 %v2014, %v1790
      %v2016 = vadd.f32 %v2015, %v1798
      %v2017 = vrot.slane %v2016, 4
      %v2018 = vadd.f32 %v2016, %v2017
      %v2019 = vrot.slane %v2018, 2
      %v2020 = vadd.f32 %v2018, %v2019
      %v2021 = vrot.slane %v2020, 1
      %v2022 = vadd.f32 %v2020, %v2021
      %v2023 = vadd.f32 %v1775, %v1783
      %v2024 = vadd.f32 %v2023, %v1791
      %v2025 = vadd.f32 %v2024, %v1799
      %v2026 = vrot.slane %v2025, 4
      %v2027 = vadd.f32 %v2025, %v2026
      %v2028 = vrot.slane %v2027, 2
      %v2029 = vadd.f32 %v2027, %v2028
      %v2030 = vrot.slane %v2029, 1
      %v2031 = vadd.f32 %v2029, %v2030
      %v2032 = vadd.f32 %v1776, %v1784
      %v2033 = vadd.f32 %v2032, %v1792
      %v2034 = vadd.f32 %v2033, %v1800
      %v2035 = vrot.slane %v2034, 4
      %v2036 = vadd.f32 %v2034, %v2035
      %v2037 = vrot.slane %v2036, 2
      %v2038 = vadd.f32 %v2036, %v2037
      %v2039 = vrot.slane %v2038, 1
      %v2040 = vadd.f32 %v2038, %v2039
      %v2041 = vadd.f32 %v1777, %v1785
      %v2042 = vadd.f32 %v2041, %v1793
      %v2043 = vadd.f32 %v2042, %v1801
      %v2044 = vrot.slane %v2043, 4
      %v2045 = vadd.f32 %v2043, %v2044
      %v2046 = vrot.slane %v2045, 2
      %v2047 = vadd.f32 %v2045, %v2046
      %v2048 = vrot.slane %v2047, 1
      %v2049 = vadd.f32 %v2047, %v2048
      %v2050 = vadd.f32 %v1778, %v1786
      %v2051 = vadd.f32 %v2050, %v1794
      %v2052 = vadd.f32 %v2051, %v1802
      %v2053 = vrot.slane %v2052, 4
      %v2054 = vadd.f32 %v2052, %v2053
      %v2055 = vrot.slane %v2054, 2
      %v2056 = vadd.f32 %v2054, %v2055
      %v2057 = vrot.slane %v2056, 1
      %v2058 = vadd.f32 %v2056, %v2057
      %v2059 = vadd.f32 %v1779, %v1787
      %v2060 = vadd.f32 %v2059, %v1795
      %v2061 = vadd.f32 %v2060, %v1803
      %v2062 = vrot.slane %v2061, 4
      %v2063 = vadd.f32 %v2061, %v2062
      %v2064 = vrot.slane %v2063, 2
      %v2065 = vadd.f32 %v2063, %v2064
      %v2066 = vrot.slane %v2065, 1
      %v2067 = vadd.f32 %v2065, %v2066
      %v2068 = vadd.f32 %v1780, %v1788
      %v2069 = vadd.f32 %v2068, %v1796
      %v2070 = vadd.f32 %v2069, %v1804
      %v2071 = vrot.slane %v2070, 4
      %v2072 = vadd.f32 %v2070, %v2071
      %v2073 = vrot.slane %v2072, 2
      %v2074 = vadd.f32 %v2072, %v2073
      %v2075 = vrot.slane %v2074, 1
      %v2076 = vadd.f32 %v2074, %v2075
      %v2077 = vadd.f32 %v1805, %v1813
      %v2078 = vadd.f32 %v2077, %v1821
      %v2079 = vadd.f32 %v2078, %v1829
      %v2080 = vrot.slane %v2079, 4
      %v2081 = vadd.f32 %v2079, %v2080
      %v2082 = vrot.slane %v2081, 2
      %v2083 = vadd.f32 %v2081, %v2082
      %v2084 = vrot.slane %v2083, 1
      %v2085 = vadd.f32 %v2083, %v2084
      %v2086 = vadd.f32 %v1806, %v1814
      %v2087 = vadd.f32 %v2086, %v1822
      %v2088 = vadd.f32 %v2087, %v1830
      %v2089 = vrot.slane %v2088, 4
      %v2090 = vadd.f32 %v2088, %v2089
      %v2091 = vrot.slane %v2090, 2
      %v2092 = vadd.f32 %v2090, %v2091
      %v2093 = vrot.slane %v2092, 1
      %v2094 = vadd.f32 %v2092, %v2093
      %v2095 = vadd.f32 %v1807, %v1815
      %v2096 = vadd.f32 %v2095, %v1823
      %v2097 = vadd.f32 %v2096, %v1831
      %v2098 = vrot.slane %v2097, 4
      %v2099 = vadd.f32 %v2097, %v2098
      %v2100 = vrot.slane %v2099, 2
      %v2101 = vadd.f32 %v2099, %v2100
      %v2102 = vrot.slane %v2101, 1
      %v2103 = vadd.f32 %v2101, %v2102
      %v2104 = vadd.f32 %v1808, %v1816
      %v2105 = vadd.f32 %v2104, %v1824
      %v2106 = vadd.f32 %v2105, %v1832
      %v2107 = vrot.slane %v2106, 4
      %v2108 = vadd.f32 %v2106, %v2107
      %v2109 = vrot.slane %v2108, 2
      %v2110 = vadd.f32 %v2108, %v2109
      %v2111 = vrot.slane %v2110, 1
      %v2112 = vadd.f32 %v2110, %v2111
      %v2113 = vadd.f32 %v1809, %v1817
      %v2114 = vadd.f32 %v2113, %v1825
      %v2115 = vadd.f32 %v2114, %v1833
      %v2116 = vrot.slane %v2115, 4
      %v2117 = vadd.f32 %v2115, %v2116
      %v2118 = vrot.slane %v2117, 2
      %v2119 = vadd.f32 %v2117, %v2118
      %v2120 = vrot.slane %v2119, 1
      %v2121 = vadd.f32 %v2119, %v2120
      %v2122 = vadd.f32 %v1810, %v1818
      %v2123 = vadd.f32 %v2122, %v1826
      %v2124 = vadd.f32 %v2123, %v1834
      %v2125 = vrot.slane %v2124, 4
      %v2126 = vadd.f32 %v2124, %v2125
      %v2127 = vrot.slane %v2126, 2
      %v2128 = vadd.f32 %v2126, %v2127
      %v2129 = vrot.slane %v2128, 1
      %v2130 = vadd.f32 %v2128, %v2129
      %v2131 = vadd.f32 %v1811, %v1819
      %v2132 = vadd.f32 %v2131, %v1827
      %v2133 = vadd.f32 %v2132, %v1835
      %v2134 = vrot.slane %v2133, 4
      %v2135 = vadd.f32 %v2133, %v2134
      %v2136 = vrot.slane %v2135, 2
      %v2137 = vadd.f32 %v2135, %v2136
      %v2138 = vrot.slane %v2137, 1
      %v2139 = vadd.f32 %v2137, %v2138
      %v2140 = vadd.f32 %v1812, %v1820
      %v2141 = vadd.f32 %v2140, %v1828
      %v2142 = vadd.f32 %v2141, %v1836
      %v2143 = vrot.slane %v2142, 4
      %v2144 = vadd.f32 %v2142, %v2143
      %v2145 = vrot.slane %v2144, 2
      %v2146 = vadd.f32 %v2144, %v2145
      %v2147 = vrot.slane %v2146, 1
      %v2148 = vadd.f32 %v2146, %v2147
      %v2149 = vadd.f32 %v1837, %v1845
      %v2150 = vadd.f32 %v2149, %v1853
      %v2151 = vadd.f32 %v2150, %v1861
      %v2152 = vrot.slane %v2151, 4
      %v2153 = vadd.f32 %v2151, %v2152
      %v2154 = vrot.slane %v2153, 2
      %v2155 = vadd.f32 %v2153, %v2154
      %v2156 = vrot.slane %v2155, 1
      %v2157 = vadd.f32 %v2155, %v2156
      %v2158 = vadd.f32 %v1838, %v1846
      %v2159 = vadd.f32 %v2158, %v1854
      %v2160 = vadd.f32 %v2159, %v1862
      %v2161 = vrot.slane %v2160, 4
      %v2162 = vadd.f32 %v2160, %v2161
      %v2163 = vrot.slane %v2162, 2
      %v2164 = vadd.f32 %v2162, %v2163
      %v2165 = vrot.slane %v2164, 1
      %v2166 = vadd.f32 %v2164, %v2165
      %v2167 = vadd.f32 %v1839, %v1847
      %v2168 = vadd.f32 %v2167, %v1855
      %v2169 = vadd.f32 %v2168, %v1863
      %v2170 = vrot.slane %v2169, 4
      %v2171 = vadd.f32 %v2169, %v2170
      %v2172 = vrot.slane %v2171, 2
      %v2173 = vadd.f32 %v2171, %v2172
      %v2174 = vrot.slane %v2173, 1
      %v2175 = vadd.f32 %v2173, %v2174
      %v2176 = vadd.f32 %v1840, %v1848
      %v2177 = vadd.f32 %v2176, %v1856
      %v2178 = vadd.f32 %v2177, %v1864
      %v2179 = vrot.slane %v2178, 4
      %v2180 = vadd.f32 %v2178, %v2179
      %v2181 = vrot.slane %v2180, 2
      %v2182 = vadd.f32 %v2180, %v2181
      %v2183 = vrot.slane %v2182, 1
      %v2184 = vadd.f32 %v2182, %v2183
      %v2185 = vadd.f32 %v1841, %v1849
      %v2186 = vadd.f32 %v2185, %v1857
      %v2187 = vadd.f32 %v2186, %v1865
      %v2188 = vrot.slane %v2187, 4
      %v2189 = vadd.f32 %v2187, %v2188
      %v2190 = vrot.slane %v2189, 2
      %v2191 = vadd.f32 %v2189, %v2190
      %v2192 = vrot.slane %v2191, 1
      %v2193 = vadd.f32 %v2191, %v2192
      %v2194 = vadd.f32 %v1842, %v1850
      %v2195 = vadd.f32 %v2194, %v1858
      %v2196 = vadd.f32 %v2195, %v1866
      %v2197 = vrot.slane %v2196, 4
      %v2198 = vadd.f32 %v2196, %v2197
      %v2199 = vrot.slane %v2198, 2
      %v2200 = vadd.f32 %v2198, %v2199
      %v2201 = vrot.slane %v2200, 1
      %v2202 = vadd.f32 %v2200, %v2201
      %v2203 = vadd.f32 %v1843, %v1851
      %v2204 = vadd.f32 %v2203, %v1859
      %v2205 = vadd.f32 %v2204, %v1867
      %v2206 = vrot.slane %v2205, 4
      %v2207 = vadd.f32 %v2205, %v2206
      %v2208 = vrot.slane %v2207, 2
      %v2209 = vadd.f32 %v2207, %v2208
      %v2210 = vrot.slane %v2209, 1
      %v2211 = vadd.f32 %v2209, %v2210
      %v2212 = vadd.f32 %v1844, %v1852
      %v2213 = vadd.f32 %v2212, %v1860
      %v2214 = vadd.f32 %v2213, %v1868
      %v2215 = vrot.slane %v2214, 4
      %v2216 = vadd.f32 %v2214, %v2215
      %v2217 = vrot.slane %v2216, 2
      %v2218 = vadd.f32 %v2216, %v2217
      %v2219 = vrot.slane %v2218, 1
      %v2220 = vadd.f32 %v2218, %v2219
      %v2221 = vadd.f32 %v1869, %v1877
      %v2222 = vadd.f32 %v2221, %v1885
      %v2223 = vadd.f32 %v2222, %v1893
      %v2224 = vrot.slane %v2223, 4
      %v2225 = vadd.f32 %v2223, %v2224
      %v2226 = vrot.slane %v2225, 2
      %v2227 = vadd.f32 %v2225, %v2226
      %v2228 = vrot.slane %v2227, 1
      %v2229 = vadd.f32 %v2227, %v2228
      %v2230 = vadd.f32 %v1870, %v1878
      %v2231 = vadd.f32 %v2230, %v1886
      %v2232 = vadd.f32 %v2231, %v1894
      %v2233 = vrot.slane %v2232, 4
      %v2234 = vadd.f32 %v2232, %v2233
      %v2235 = vrot.slane %v2234, 2
      %v2236 = vadd.f32 %v2234, %v2235
      %v2237 = vrot.slane %v2236, 1
      %v2238 = vadd.f32 %v2236, %v2237
      %v2239 = vadd.f32 %v1871, %v1879
      %v2240 = vadd.f32 %v2239, %v1887
      %v2241 = vadd.f32 %v2240, %v1895
      %v2242 = vrot.slane %v2241, 4
      %v2243 = vadd.f32 %v2241, %v2242
      %v2244 = vrot.slane %v2243, 2
      %v2245 = vadd.f32 %v2243, %v2244
      %v2246 = vrot.slane %v2245, 1
      %v2247 = vadd.f32 %v2245, %v2246
      %v2248 = vadd.f32 %v1872, %v1880
      %v2249 = vadd.f32 %v2248, %v1888
      %v2250 = vadd.f32 %v2249, %v1896
      %v2251 = vrot.slane %v2250, 4
      %v2252 = vadd.f32 %v2250, %v2251
      %v2253 = vrot.slane %v2252, 2
      %v2254 = vadd.f32 %v2252, %v2253
      %v2255 = vrot.slane %v2254, 1
      %v2256 = vadd.f32 %v2254, %v2255
      %v2257 = vadd.f32 %v1873, %v1881
      %v2258 = vadd.f32 %v2257, %v1889
      %v2259 = vadd.f32 %v2258, %v1897
      %v2260 = vrot.slane %v2259, 4
      %v2261 = vadd.f32 %v2259, %v2260
      %v2262 = vrot.slane %v2261, 2
      %v2263 = vadd.f32 %v2261, %v2262
      %v2264 = vrot.slane %v2263, 1
      %v2265 = vadd.f32 %v2263, %v2264
      %v2266 = vadd.f32 %v1874, %v1882
      %v2267 = vadd.f32 %v2266, %v1890
      %v2268 = vadd.f32 %v2267, %v1898
      %v2269 = vrot.slane %v2268, 4
      %v2270 = vadd.f32 %v2268, %v2269
      %v2271 = vrot.slane %v2270, 2
      %v2272 = vadd.f32 %v2270, %v2271
      %v2273 = vrot.slane %v2272, 1
      %v2274 = vadd.f32 %v2272, %v2273
      %v2275 = vadd.f32 %v1875, %v1883
      %v2276 = vadd.f32 %v2275, %v1891
      %v2277 = vadd.f32 %v2276, %v1899
      %v2278 = vrot.slane %v2277, 4
      %v2279 = vadd.f32 %v2277, %v2278
      %v2280 = vrot.slane %v2279, 2
      %v2281 = vadd.f32 %v2279, %v2280
      %v2282 = vrot.slane %v2281, 1
      %v2283 = vadd.f32 %v2281, %v2282
      %v2284 = vadd.f32 %v1876, %v1884
      %v2285 = vadd.f32 %v2284, %v1892
      %v2286 = vadd.f32 %v2285, %v1900
      %v2287 = vrot.slane %v2286, 4
      %v2288 = vadd.f32 %v2286, %v2287
      %v2289 = vrot.slane %v2288, 2
      %v2290 = vadd.f32 %v2288, %v2289
      %v2291 = vrot.slane %v2290, 1
      %v2292 = vadd.f32 %v2290, %v2291
      %v2293 = vadd.f32 %v1901, %v1909
      %v2294 = vadd.f32 %v2293, %v1917
      %v2295 = vadd.f32 %v2294, %v1925
      %v2296 = vrot.slane %v2295, 4
      %v2297 = vadd.f32 %v2295, %v2296
      %v2298 = vrot.slane %v2297, 2
      %v2299 = vadd.f32 %v2297, %v2298
      %v2300 = vrot.slane %v2299, 1
      %v2301 = vadd.f32 %v2299, %v2300
      %v2302 = vadd.f32 %v1902, %v1910
      %v2303 = vadd.f32 %v2302, %v1918
      %v2304 = vadd.f32 %v2303, %v1926
      %v2305 = vrot.slane %v2304, 4
      %v2306 = vadd.f32 %v2304, %v2305
      %v2307 = vrot.slane %v2306, 2
      %v2308 = vadd.f32 %v2306, %v2307
      %v2309 = vrot.slane %v2308, 1
      %v2310 = vadd.f32 %v2308, %v2309
      %v2311 = vadd.f32 %v1903, %v1911
      %v2312 = vadd.f32 %v2311, %v1919
      %v2313 = vadd.f32 %v2312, %v1927
      %v2314 = vrot.slane %v2313, 4
      %v2315 = vadd.f32 %v2313, %v2314
      %v2316 = vrot.slane %v2315, 2
      %v2317 = vadd.f32 %v2315, %v2316
      %v2318 = vrot.slane %v2317, 1
      %v2319 = vadd.f32 %v2317, %v2318
      %v2320 = vadd.f32 %v1904, %v1912
      %v2321 = vadd.f32 %v2320, %v1920
      %v2322 = vadd.f32 %v2321, %v1928
      %v2323 = vrot.slane %v2322, 4
      %v2324 = vadd.f32 %v2322, %v2323
      %v2325 = vrot.slane %v2324, 2
      %v2326 = vadd.f32 %v2324, %v2325
      %v2327 = vrot.slane %v2326, 1
      %v2328 = vadd.f32 %v2326, %v2327
      %v2329 = vadd.f32 %v1905, %v1913
      %v2330 = vadd.f32 %v2329, %v1921
      %v2331 = vadd.f32 %v2330, %v1929
      %v2332 = vrot.slane %v2331, 4
      %v2333 = vadd.f32 %v2331, %v2332
      %v2334 = vrot.slane %v2333, 2
      %v2335 = vadd.f32 %v2333, %v2334
      %v2336 = vrot.slane %v2335, 1
      %v2337 = vadd.f32 %v2335, %v2336
      %v2338 = vadd.f32 %v1906, %v1914
      %v2339 = vadd.f32 %v2338, %v1922
      %v2340 = vadd.f32 %v2339, %v1930
      %v2341 = vrot.slane %v2340, 4
      %v2342 = vadd.f32 %v2340, %v2341
      %v2343 = vrot.slane %v2342, 2
      %v2344 = vadd.f32 %v2342, %v2343
      %v2345 = vrot.slane %v2344, 1
      %v2346 = vadd.f32 %v2344, %v2345
      %v2347 = vadd.f32 %v1907, %v1915
      %v2348 = vadd.f32 %v2347, %v1923
      %v2349 = vadd.f32 %v2348, %v1931
      %v2350 = vrot.slane %v2349, 4
      %v2351 = vadd.f32 %v2349, %v2350
      %v2352 = vrot.slane %v2351, 2
      %v2353 = vadd.f32 %v2351, %v2352
      %v2354 = vrot.slane %v2353, 1
      %v2355 = vadd.f32 %v2353, %v2354
      %v2356 = vadd.f32 %v1908, %v1916
      %v2357 = vadd.f32 %v2356, %v1924
      %v2358 = vadd.f32 %v2357, %v1932
      %v2359 = vrot.slane %v2358, 4
      %v2360 = vadd.f32 %v2358, %v2359
      %v2361 = vrot.slane %v2360, 2
      %v2362 = vadd.f32 %v2360, %v2361
      %v2363 = vrot.slane %v2362, 1
      %v2364 = vadd.f32 %v2362, %v2363
      %vm2413 = vcmask 1041409
      %v2414 = vsel %vm2413, %v2013, %v1941
      %vm2415 = vcmask 1042434
      %v2416 = vsel %vm2415, %v2085, %v2414
      %vm2417 = vcmask 1043459
      %v2418 = vsel %vm2417, %v2157, %v2416
      %vm2419 = vcmask 1044484
      %v2420 = vsel %vm2419, %v2229, %v2418
      %vm2421 = vcmask 1045509
      %v2422 = vsel %vm2421, %v2301, %v2420
      %v2423 = vsel %vm2413, %v2022, %v1950
      %v2424 = vsel %vm2415, %v2094, %v2423
      %v2425 = vsel %vm2417, %v2166, %v2424
      %v2426 = vsel %vm2419, %v2238, %v2425
      %v2427 = vsel %vm2421, %v2310, %v2426
      %v2428 = vsel %vm2413, %v2031, %v1959
      %v2429 = vsel %vm2415, %v2103, %v2428
      %v2430 = vsel %vm2417, %v2175, %v2429
      %v2431 = vsel %vm2419, %v2247, %v2430
      %v2432 = vsel %vm2421, %v2319, %v2431
      %v2433 = vsel %vm2413, %v2040, %v1968
      %v2434 = vsel %vm2415, %v2112, %v2433
      %v2435 = vsel %vm2417, %v2184, %v2434
      %v2436 = vsel %vm2419, %v2256, %v2435
      %v2437 = vsel %vm2421, %v2328, %v2436
      %v2438 = vsel %vm2413, %v2049, %v1977
      %v2439 = vsel %vm2415, %v2121, %v2438
      %v2440 = vsel %vm2417, %v2193, %v2439
      %v2441 = vsel %vm2419, %v2265, %v2440
      %v2442 = vsel %vm2421, %v2337, %v2441
      %v2443 = vsel %vm2413, %v2058, %v1986
      %v2444 = vsel %vm2415, %v2130, %v2443
      %v2445 = vsel %vm2417, %v2202, %v2444
      %v2446 = vsel %vm2419, %v2274, %v2445
      %v2447 = vsel %vm2421, %v2346, %v2446
      %v2448 = vsel %vm2413, %v2067, %v1995
      %v2449 = vsel %vm2415, %v2139, %v2448
      %v2450 = vsel %vm2417, %v2211, %v2449
      %v2451 = vsel %vm2419, %v2283, %v2450
      %v2452 = vsel %vm2421, %v2355, %v2451
      %v2453 = vsel %vm2413, %v2076, %v2004
      %v2454 = vsel %vm2415, %v2148, %v2453
      %v2455 = vsel %vm2417, %v2220, %v2454
      %v2456 = vsel %vm2419, %v2292, %v2455
      %v2457 = vsel %vm2421, %v2364, %v2456
      %2466 = vst [vmem:[%s201] sm:$0x3f] %v2422
      %2467 = vst [vmem:[%s201 + $0x8] sm:$0x3f] %v2427
      %2468 = vst [vmem:[%s201 + $0x10] sm:$0x3f] %v2432
      %2469 = vst [vmem:[%s201 + $0x18] sm:$0x3f] %v2437
      %2470 = vst [vmem:[%s201 + $0x20] sm:$0x3f] %v2442
      %2471 = vst [vmem:[%s201 + $0x28] sm:$0x3f] %v2447
      %2472 = vst [vmem:[%s201 + $0x30] sm:$0x3f] %v2452
      %2473 = vst [vmem:[%s201 + $0x38] sm:$0x3f] %v2457
      %s2474 = smul.u32 8, %s18
      %p2475 = scmp.lt.s32.totalorder %s17, 1
      %s2476 = scalar_select %p2475, %s17, 1
      %p2477 = scmp.lt.s32.totalorder %s2474, 7
      %s2478 = scalar_select %p2477, %s2474, 7
      %s2479 = smul.addr %s2476, 8
      %s2480 = sadd.s32 %s2478, %s2479
      %s2481 = smul.addr %s2480, 8
      %s2482 = scalar_lea.vmem %s2, %s2481
      // Predicated region
      $region29: #{moco_cycle_forward.12} parent=27 // pred_check
        %p2483 = pneg %p99
      $region30: #{moco_cycle_forward.12} parent=27 // pred_check_branch
        %2485 = sbr.rel (%p2483) target = $region32
      $region31: #{moco_cycle_forward.12} parent=27 // pred_region
        %s2486 = smul.u32 8, %s18
      $region32: #{moco_cycle_forward.12} parent=27 // pred_fallthru
        _
    $region28: #{moco_cycle_forward.12} parent=5 // pred_fallthru
      _
    %p2487 = scmp.le.s32.totalorder 2, %s8
    // Predicated region
    $region33: #{moco_cycle_forward.12} parent=5 // pred_check
      %p2488 = pneg %p2487
    $region34: #{moco_cycle_forward.12} parent=5 // pred_check_branch
      %2490 = sbr.rel (%p2488) target = $region36
    $region35: #{moco_cycle_forward.12} parent=5 // pred_region
      %s2491 = ssub.s32 %s8, 2
      // Predicated region
      $region37: #{moco_cycle_forward.12} parent=35 // pred_check
        %p2492 = pneg %p105
      $region38: #{moco_cycle_forward.12} parent=35 // pred_check_branch
        %2494 = sbr.rel (%p2492) target = $region40
      $region39: #{moco_cycle_forward.12} parent=35 // pred_region
        %s2495 = smul.u32 8, %s20
        %p2496 = scmp.lt.s32.totalorder %s19, 1
        %s2497 = scalar_select %p2496, %s19, 1
        %p2498 = scmp.lt.s32.totalorder %s2495, 7
        %s2499 = scalar_select %p2498, %s2495, 7
        %s2500 = smul.addr %s2497, 8
        %s2501 = sadd.s32 %s2499, %s2500
        %s2502 = smul.addr %s2501, 8
        %s2503 = scalar_lea.vmem %s2, %s2502
      $region40: #{moco_cycle_forward.12} parent=35 // pred_fallthru
        _
    $region36: #{moco_cycle_forward.12} parent=5 // pred_fallthru
      _
  $region6: #{moco_cycle_forward.12} parent=0 // loop_footer
    %s12 = sadd.s32 1, %s8
  $region7: #{moco_cycle_forward.12} parent=0 // loop_footer_branch
    %7 = sbr.rel target = $region3
  $region8: #{moco_cycle_forward.12} parent=0 // loop_exit
    _

// kernel: moco_cycle_forward.13
$region0: #{moco_cycle_forward.13}
  #allocation0 [shape = 'u32[]', space=smem, size = 0x4, offset = 0x4, fixed_abs, tag = 'smem constant byte address 0x4 - core index']
  #allocation1 [shape = 'u32[144,128]{1,0:T(1,128)}', space=vmem, size = 0x12000, scoped, tag = 'internal scratch']
  %s0 = inlined_call_operand.vmem [shape: f32[2,8,256], index: 0, kind: input, shape index: {}]
  %s1 = inlined_call_operand.vmem [shape: f32[2,160,32], index: 1, kind: input, shape index: {}]
  %s2 = inlined_call_operand.vmem [shape: f32[2,5,256], index: 2, kind: output, shape index: {}]
  %s3 = sld [smem:[#allocation0]]
  $region41: #{moco_cycle_forward.13} parent=0
    _
  %s5 = ssub.s32 1, %s3
  %s6 = scalar_select 0, %s5, %s3
  loop: start=0, step=1, limit=4
  $region2: #{moco_cycle_forward.13} parent=0 // loop_pre_header
    _
  $region3: #{moco_cycle_forward.13} parent=0 // loop_header
    %s8 = sphi 0, %s12
    %p9 = scmp.ge.s32.totalorder %s8, 4
    %s15 = sphi 0, %s27
    %s16 = sphi 0, %s23
    %s17 = sphi 0, %s15
    %s18 = sphi 0, %s16
    %s19 = sphi 0, %s17
    %s20 = sphi 0, %s18
    %s32 = sphi 0, %s34
    %s35 = sphi 0, %s32
    %s36 = sphi 0, %s35
    %s52 = sphi 0, %s36
    %s58 = sphi 0, %s60
    %s61 = sphi 0, %s58
    %s62 = sphi 0, %s61
    %s78 = sphi 0, %s62
    %s86 = sphi 0, %s88
    %s89 = sphi 0, %s86
    %s90 = sphi 0, %s89
    %s106 = sphi 0, %s90
  $region4: #{moco_cycle_forward.13} parent=0 // loop_header_branch
    %11 = sbr.rel (%p9) target = $region8
  $region5: #{moco_cycle_forward.13} parent=0 // loop_body
    %s13 = ssub.s32 %s8, 1
    %s14 = ssub.s32 %s8, 2
    %s21 = sadd.s32 1, %s16
    %p22 = scmp.ge.s32.totalorder %s21, 1
    %s23 = scalar_select %p22, 0, %s21
    %s24 = sadd.s32 1, %s15
    %s25 = scalar_select %p22, %s24, %s15
    %p26 = scmp.ge.s32.totalorder %s25, 2
    %s27 = scalar_select %p26, 0, %s25
    %s28 = ssub.s32 %s15, %s27
    %s29 = ssub.s32 %s16, %s23
    %s30 = sor.u32 %s28, %s29
    %p31 = scmp.eq.s32.totalorder %s30, 0
    %s33 = sadd.s32 %s32, 1
    %s34 = scalar_select %p31, %s32, %s33
    %p37 = pneg %p31
    %p38 = scmp.eq.s32.totalorder %s8, 1
    %p39 = por %p37, %p38
    %p40 = scmp.ne.s32.totalorder %s32, %s35
    %p41 = scmp.eq.s32.totalorder %s8, 0
    %p42 = por %p40, %p41
    %p43 = scmp.ne.s32.totalorder %s32, %s35
    %p44 = scmp.eq.s32.totalorder %s13, 1
    %p45 = por %p43, %p44
    %p46 = scmp.ne.s32.totalorder %s35, %s36
    %p47 = scmp.eq.s32.totalorder %s13, 0
    %p48 = por %p46, %p47
    %p49 = scmp.ne.s32.totalorder %s35, %s36
    %p50 = scmp.eq.s32.totalorder %s14, 1
    %p51 = por %p49, %p50
    %p53 = scmp.ne.s32.totalorder %s36, %s52
    %p54 = scmp.eq.s32.totalorder %s14, 0
    %p55 = por %p53, %p54
    %s56 = ssub.s32 %s15, %s27
    %p57 = scmp.eq.s32.totalorder %s56, 0
    %s59 = sadd.s32 %s58, 1
    %s60 = scalar_select %p57, %s58, %s59
    %p63 = pneg %p57
    %p64 = scmp.eq.s32.totalorder %s8, 1
    %p65 = por %p63, %p64
    %p66 = scmp.ne.s32.totalorder %s58, %s61
    %p67 = scmp.eq.s32.totalorder %s8, 0
    %p68 = por %p66, %p67
    %p69 = scmp.ne.s32.totalorder %s58, %s61
    %p70 = scmp.eq.s32.totalorder %s13, 1
    %p71 = por %p69, %p70
    %p72 = scmp.ne.s32.totalorder %s61, %s62
    %p73 = scmp.eq.s32.totalorder %s13, 0
    %p74 = por %p72, %p73
    %p75 = scmp.ne.s32.totalorder %s61, %s62
    %p76 = scmp.eq.s32.totalorder %s14, 1
    %p77 = por %p75, %p76
    %p79 = scmp.ne.s32.totalorder %s62, %s78
    %p80 = scmp.eq.s32.totalorder %s14, 0
    %p81 = por %p79, %p80
    %s82 = ssub.s32 %s15, %s27
    %s83 = ssub.s32 %s16, %s23
    %s84 = sor.u32 %s82, %s83
    %p85 = scmp.eq.s32.totalorder %s84, 0
    %s87 = sadd.s32 %s86, 1
    %s88 = scalar_select %p85, %s86, %s87
    %p91 = pneg %p85
    %p92 = scmp.eq.s32.totalorder %s8, 1
    %p93 = por %p91, %p92
    %p94 = scmp.ne.s32.totalorder %s86, %s89
    %p95 = scmp.eq.s32.totalorder %s8, 0
    %p96 = por %p94, %p95
    %p97 = scmp.ne.s32.totalorder %s86, %s89
    %p98 = scmp.eq.s32.totalorder %s13, 1
    %p99 = por %p97, %p98
    %p100 = scmp.ne.s32.totalorder %s89, %s90
    %p101 = scmp.eq.s32.totalorder %s13, 0
    %p102 = por %p100, %p101
    %p103 = scmp.ne.s32.totalorder %s89, %s90
    %p104 = scmp.eq.s32.totalorder %s14, 1
    %p105 = por %p103, %p104
    %p107 = scmp.ne.s32.totalorder %s90, %s106
    %p108 = scmp.eq.s32.totalorder %s14, 0
    %p109 = por %p107, %p108
    %p110 = scmp.le.s32.totalorder 1, %s8
    %p111 = scmp.lt.s32.totalorder %s8, 3
    %p112 = pnand %p110, %p111
    %p113 = pneg %p112
    // Predicated region
    $region9: #{moco_cycle_forward.13} parent=5 // pred_check
      _
    $region10: #{moco_cycle_forward.13} parent=5 // pred_check_branch
      %115 = sbr.rel (%p112) target = $region12
    $region11: #{moco_cycle_forward.13} parent=5 // pred_region
      %s116 = ssub.s32 %s8, 1
    $region12: #{moco_cycle_forward.13} parent=5 // pred_fallthru
      _
    %p117 = scmp.lt.s32.totalorder %s8, 2
    // Predicated region
    $region13: #{moco_cycle_forward.13} parent=5 // pred_check
      %p118 = pneg %p117
    $region14: #{moco_cycle_forward.13} parent=5 // pred_check_branch
      %120 = sbr.rel (%p118) target = $region16
    $region15: #{moco_cycle_forward.13} parent=5 // pred_region
      // Predicated region
      $region17: #{moco_cycle_forward.13} parent=15 // pred_check
        %p121 = pneg %p42
      $region18: #{moco_cycle_forward.13} parent=15 // pred_check_branch
        %123 = sbr.rel (%p121) target = $region20
      $region19: #{moco_cycle_forward.13} parent=15 // pred_region
        %s124 = smul.u32 2, %s16
        %p125 = scmp.lt.s32.totalorder %s15, 1
        %s126 = scalar_select %p125, %s15, 1
        %p127 = scmp.lt.s32.totalorder %s124, 1
        %s128 = scalar_select %p127, %s124, 1
        %s129 = smul.addr %s126, 2
        %s130 = sadd.s32 %s128, %s129
        %s131 = smul.addr %s130, 8
        %s132 = scalar_lea.vmem %s0, %s131
        %s133 = smul.u32 2, %s16
      $region20: #{moco_cycle_forward.13} parent=15 // pred_fallthru
        _
      // Predicated region
      $region21: #{moco_cycle_forward.13} parent=15 // pred_check
        %p134 = pneg %p68
      $region22: #{moco_cycle_forward.13} parent=15 // pred_check_branch
        %136 = sbr.rel (%p134) target = $region24
      $region23: #{moco_cycle_forward.13} parent=15 // pred_region
        %p137 = scmp.lt.s32.totalorder %s15, 1
        %s138 = scalar_select %p137, %s15, 1
        %s139 = smul.addr %s138, 20
        %s140 = smul.addr %s139, 8
        %s141 = scalar_lea.vmem %s1, %s140
      $region24: #{moco_cycle_forward.13} parent=15 // pred_fallthru
        _
    $region16: #{moco_cycle_forward.13} parent=5 // pred_fallthru
      _
    %p142 = scmp.le.s32.totalorder 1, %s8
    %p143 = scmp.lt.s32.totalorder %s8, 3
    %p144 = pnand %p142, %p143
    %p145 = pneg %p144
    // Predicated region
    $region25: #{moco_cycle_forward.13} parent=5 // pred_check
      _
    $region26: #{moco_cycle_forward.13} parent=5 // pred_check_branch
      %147 = sbr.rel (%p144) target = $region28
    $region27: #{moco_cycle_forward.13} parent=5 // pred_region
      %s148 = ssub.s32 %s8, 1
      %s149 = smul.u32 2, %s18
      %p150 = scmp.lt.s32.totalorder %s17, 1
      %s151 = scalar_select %p150, %s17, 1
      %p152 = scmp.lt.s32.totalorder %s149, 1
      %s153 = scalar_select %p152, %s149, 1
      %s154 = smul.addr %s151, 2
      %s155 = sadd.s32 %s153, %s154
      %s156 = smul.addr %s155, 8
      %s157 = scalar_lea.vmem %s0, %s156
      %p158 = pneg %p48
      %p159 = pneg %p45
      %p160 = scmp.lt.s32.totalorder %s17, 1
      %s161 = scalar_select %p160, %s17, 1
      %s162 = smul.addr %s161, 20
      %s163 = smul.addr %s162, 8
      %s164 = scalar_lea.vmem %s1, %s163
      %p165 = pneg %p74
      %p166 = pneg %p71
      %p167 = pneg %p102
      %p168 = pneg %p99
      %s169 = smul.u32 2, %s18
      %p170 = scmp.lt.s32.totalorder %s17, 1
      %s171 = scalar_select %p170, %s17, 1
      %p172 = scmp.lt.s32.totalorder %s169, 1
      %s173 = scalar_select %p172, %s169, 1
      %s174 = smul.addr %s171, 2
      %s175 = sadd.s32 %s173, %s174
      %s176 = smul.addr %s175, 8
      %s177 = scalar_lea.vmem %s2, %s176
      %s178 = smul.u32 2, %s18
      %p179 = scmp.lt.s32.totalorder %s17, 1
      %s180 = scalar_select %p179, %s17, 1
      %p181 = scmp.lt.s32.totalorder %s178, 1
      %s182 = scalar_select %p181, %s178, 1
      %s183 = smul.addr %s180, 2
      %s184 = sadd.s32 %s182, %s183
      %s185 = smul.addr %s184, 8
      %s186 = scalar_lea.vmem %s0, %s185
      %s187 = smul.u32 2, %s18
      %p188 = scmp.lt.s32.totalorder %s17, 1
      %s189 = scalar_select %p188, %s17, 1
      %s190 = smul.addr %s189, 20
      %s191 = smul.addr %s190, 8
      %s192 = scalar_lea.vmem %s1, %s191
      %s193 = smul.u32 2, %s18
      %p194 = scmp.lt.s32.totalorder %s17, 1
      %s195 = scalar_select %p194, %s17, 1
      %p196 = scmp.lt.s32.totalorder %s193, 1
      %s197 = scalar_select %p196, %s193, 1
      %s198 = smul.addr %s195, 2
      %s199 = sadd.s32 %s197, %s198
      %s200 = smul.addr %s199, 8
      %s201 = scalar_lea.vmem %s2, %s200
      %s202 = smul.u32 2, %s18
      %v203 = vld [vmem:[%s186] sm:$0xff]
      %v204 = vld [vmem:[%s186 + $0x8] sm:$0xff]
      %v205 = vcvt.f32.s32.to.zero.pseudo %v203
      %v206 = vcvt.f32.s32.to.zero.pseudo %v204
      %v207 = vlaneseq
      %v208 = vshrl.u32 %v207, 7
      %v209 = vadd.s32 %v208, 8
      %v210 = vadd.s32 %v208, 16
      %v211 = vadd.s32 %v208, 24
      %v212 = vlaneseq
      %v213 = vshrl.u32 %v212, 7
      %v214 = vsub.s32 3, %v213
      %v215 = vrot.slane %v205, %v214
      %v216 = vlaneseq
      %v217 = vshrl.u32 %v216, 7
      %v218 = vsub.s32 3, %v217
      %v219 = vrot.slane %v206, %v218
      %vm220 = vcmp.eq.s32.totalorder %v208, %v215
      %vm221 = vcmp.eq.s32.totalorder %v208, %v219
      %vm222 = vcmp.eq.s32.totalorder %v209, %v215
      %vm223 = vcmp.eq.s32.totalorder %v209, %v219
      %vm224 = vcmp.eq.s32.totalorder %v210, %v215
      %vm225 = vcmp.eq.s32.totalorder %v210, %v219
      %vm226 = vcmp.eq.s32.totalorder %v211, %v215
      %vm227 = vcmp.eq.s32.totalorder %v211, %v219
      %v228 = vlaneseq
      %v229 = vshrl.u32 %v228, 7
      %v230 = vsub.s32 4, %v229
      %v231 = vrot.slane %v203, %v230
      %v232 = vlaneseq
      %v233 = vshrl.u32 %v232, 7
      %v234 = vsub.s32 4, %v233
      %v235 = vrot.slane %v204, %v234
      %v236 = vsel %vm220, %v231, 0.0
      %v237 = vsel %vm221, %v235, 0.0
      %v238 = vsel %vm222, %v231, 0.0
      %v239 = vsel %vm223, %v235, 0.0
      %v240 = vsel %vm224, %v231, 0.0
      %v241 = vsel %vm225, %v235, 0.0
      %v242 = vsel %vm226, %v231, 0.0
      %v243 = vsel %vm227, %v235, 0.0
      %v244 = vadd.s32 %v205, 1
      %v245 = vadd.s32 %v206, 1
      %v246 = vlaneseq
      %v247 = vshrl.u32 %v246, 7
      %v248 = vsub.s32 3, %v247
      %v249 = vrot.slane %v244, %v248
      %v250 = vlaneseq
      %v251 = vshrl.u32 %v250, 7
      %v252 = vsub.s32 3, %v251
      %v253 = vrot.slane %v245, %v252
      %vm254 = vcmp.eq.s32.totalorder %v208, %v249
      %vm255 = vcmp.eq.s32.totalorder %v208, %v253
      %vm256 = vcmp.eq.s32.totalorder %v209, %v249
      %vm257 = vcmp.eq.s32.totalorder %v209, %v253
      %vm258 = vcmp.eq.s32.totalorder %v210, %v249
      %vm259 = vcmp.eq.s32.totalorder %v210, %v253
      %vm260 = vcmp.eq.s32.totalorder %v211, %v249
      %vm261 = vcmp.eq.s32.totalorder %v211, %v253
      %v262 = vlaneseq
      %v263 = vshrl.u32 %v262, 7
      %v264 = vsub.s32 5, %v263
      %v265 = vrot.slane %v203, %v264
      %v266 = vlaneseq
      %v267 = vshrl.u32 %v266, 7
      %v268 = vsub.s32 5, %v267
      %v269 = vrot.slane %v204, %v268
      %v270 = vsel %vm254, %v265, 0.0
      %v271 = vsel %vm255, %v269, 0.0
      %v272 = vsel %vm256, %v265, 0.0
      %v273 = vsel %vm257, %v269, 0.0
      %v274 = vsel %vm258, %v265, 0.0
      %v275 = vsel %vm259, %v269, 0.0
      %v276 = vsel %vm260, %v265, 0.0
      %v277 = vsel %vm261, %v269, 0.0
      %v278 = vadd.f32 %v236, %v270
      %v279 = vadd.f32 %v237, %v271
      %v280 = vadd.f32 %v238, %v272
      %v281 = vadd.f32 %v239, %v273
      %v282 = vadd.f32 %v240, %v274
      %v283 = vadd.f32 %v241, %v275
      %v284 = vadd.f32 %v242, %v276
      %v285 = vadd.f32 %v243, %v277
      %v286 = vlaneseq
      %v287 = vshrl.u32 %v286, 7
      %v288 = vsub.s32 0, %v287
      %v289 = vrot.slane %v205, %v288
      %v290 = vlaneseq
      %v291 = vshrl.u32 %v290, 7
      %v292 = vsub.s32 0, %v291
      %v293 = vrot.slane %v206, %v292
      %vm294 = vcmp.eq.s32.totalorder %v208, %v289
      %vm295 = vcmp.eq.s32.totalorder %v208, %v293
      %vm296 = vcmp.eq.s32.totalorder %v209, %v289
      %vm297 = vcmp.eq.s32.totalorder %v209, %v293
      %vm298 = vcmp.eq.s32.totalorder %v210, %v289
      %vm299 = vcmp.eq.s32.totalorder %v210, %v293
      %vm300 = vcmp.eq.s32.totalorder %v211, %v289
      %vm301 = vcmp.eq.s32.totalorder %v211, %v293
      %v302 = vlaneseq
      %v303 = vshrl.u32 %v302, 7
      %v304 = vsub.s32 1, %v303
      %v305 = vrot.slane %v203, %v304
      %v306 = vlaneseq
      %v307 = vshrl.u32 %v306, 7
      %v308 = vsub.s32 1, %v307
      %v309 = vrot.slane %v204, %v308
      %v310 = vsel %vm294, %v305, 0.0
      %v311 = vsel %vm295, %v309, 0.0
      %v312 = vsel %vm296, %v305, 0.0
      %v313 = vsel %vm297, %v309, 0.0
      %v314 = vsel %vm298, %v305, 0.0
      %v315 = vsel %vm299, %v309, 0.0
      %v316 = vsel %vm300, %v305, 0.0
      %v317 = vsel %vm301, %v309, 0.0
      %v318 = vlaneseq
      %v319 = vshrl.u32 %v318, 7
      %v320 = vsub.s32 0, %v319
      %v321 = vrot.slane %v244, %v320
      %v322 = vlaneseq
      %v323 = vshrl.u32 %v322, 7
      %v324 = vsub.s32 0, %v323
      %v325 = vrot.slane %v245, %v324
      %vm326 = vcmp.eq.s32.totalorder %v208, %v321
      %vm327 = vcmp.eq.s32.totalorder %v208, %v325
      %vm328 = vcmp.eq.s32.totalorder %v209, %v321
      %vm329 = vcmp.eq.s32.totalorder %v209, %v325
      %vm330 = vcmp.eq.s32.totalorder %v210, %v321
      %vm331 = vcmp.eq.s32.totalorder %v210, %v325
      %vm332 = vcmp.eq.s32.totalorder %v211, %v321
      %vm333 = vcmp.eq.s32.totalorder %v211, %v325
      %v334 = vlaneseq
      %v335 = vshrl.u32 %v334, 7
      %v336 = vsub.s32 2, %v335
      %v337 = vrot.slane %v203, %v336
      %v338 = vlaneseq
      %v339 = vshrl.u32 %v338, 7
      %v340 = vsub.s32 2, %v339
      %v341 = vrot.slane %v204, %v340
      %v342 = vsel %vm326, %v337, 0.0
      %v343 = vsel %vm327, %v341, 0.0
      %v344 = vsel %vm328, %v337, 0.0
      %v345 = vsel %vm329, %v341, 0.0
      %v346 = vsel %vm330, %v337, 0.0
      %v347 = vsel %vm331, %v341, 0.0
      %v348 = vsel %vm332, %v337, 0.0
      %v349 = vsel %vm333, %v341, 0.0
      %v350 = vadd.f32 %v310, %v342
      %v351 = vadd.f32 %v311, %v343
      %v352 = vadd.f32 %v312, %v344
      %v353 = vadd.f32 %v313, %v345
      %v354 = vadd.f32 %v314, %v346
      %v355 = vadd.f32 %v315, %v347
      %v356 = vadd.f32 %v316, %v348
      %v357 = vadd.f32 %v317, %v349
      %v358 = vld [vmem:[%s192] sm:$0xff]
      %v359 = vld [vmem:[%s192 + $0x8] sm:$0xff]
      %v360 = vld [vmem:[%s192 + $0x10] sm:$0xff]
      %v361 = vld [vmem:[%s192 + $0x18] sm:$0xff]
      %v362 = vld [vmem:[%s192 + $0x20] sm:$0xff]
      %v363 = vld [vmem:[%s192 + $0x28] sm:$0xff]
      %v364 = vld [vmem:[%s192 + $0x30] sm:$0xff]
      %v365 = vld [vmem:[%s192 + $0x38] sm:$0xff]
      %v366 = vld [vmem:[%s192 + $0x40] sm:$0xff]
      %v367 = vld [vmem:[%s192 + $0x48] sm:$0xff]
      %v368 = vld [vmem:[%s192 + $0x50] sm:$0xff]
      %v369 = vld [vmem:[%s192 + $0x58] sm:$0xff]
      %v370 = vld [vmem:[%s192 + $0x60] sm:$0xff]
      %v371 = vld [vmem:[%s192 + $0x68] sm:$0xff]
      %v372 = vld [vmem:[%s192 + $0x70] sm:$0xff]
      %v373 = vld [vmem:[%s192 + $0x78] sm:$0xff]
      %v374 = vld [vmem:[%s192 + $0x80] sm:$0xff]
      %v375 = vld [vmem:[%s192 + $0x88] sm:$0xff]
      %v376 = vld [vmem:[%s192 + $0x90] sm:$0xff]
      %v377 = vld [vmem:[%s192 + $0x98] sm:$0xff]
      %vm378 = vcmask 261120
      %v380 = vsel %vm378, %v358, 0
      %v383 = vsel %vm378, %v359, 0
      %v386 = vsel %vm378, %v360, 0
      %v389 = vsel %vm378, %v361, 0
      %v392 = vsel %vm378, %v362, 0
      %v395 = vsel %vm378, %v363, 0
      %v398 = vsel %vm378, %v364, 0
      %v401 = vsel %vm378, %v365, 0
      %v404 = vsel %vm378, %v366, 0
      %v407 = vsel %vm378, %v367, 0
      %v410 = vsel %vm378, %v368, 0
      %v413 = vsel %vm378, %v369, 0
      %v416 = vsel %vm378, %v370, 0
      %v419 = vsel %vm378, %v371, 0
      %v422 = vsel %vm378, %v372, 0
      %v425 = vsel %vm378, %v373, 0
      %v428 = vsel %vm378, %v374, 0
      %v431 = vsel %vm378, %v375, 0
      %v434 = vsel %vm378, %v376, 0
      %v437 = vsel %vm378, %v377, 0
      %439 = vmatprep.subr.mxu0 0.0
      %440 = vmatpush1.msra.mxu0 0.0
      %441 = vmatprep.subr.mxu0 0.0
      %442 = vmatpush1.msra.mxu0 0.0
      %443 = vmatprep.subr.mxu0 0.0
      %444 = vmatpush1.msra.mxu0 0.0
      %445 = vmatprep.subr.mxu0 0.0
      %446 = vmatpush1.msra.mxu0 0.0
      %447 = vmatprep.subr.mxu0 0.0
      %448 = vmatpush1.msra.mxu0 0.0
      %449 = vmatprep.subr.mxu0 0.0
      %450 = vmatpush1.msra.mxu0 0.0
      %451 = vmatprep.subr.mxu0 0.0
      %452 = vmatpush1.msra.mxu0 0.0
      %453 = vmatprep.subr.mxu0 0.0
      %454 = vmatpush1.msra.mxu0 0.0
      %455 = vmatprep.subr.mxu0 0.0
      %456 = vmatpush1.msra.mxu0 0.0
      %457 = vmatprep.subr.mxu0 0.0
      %458 = vmatpush1.msra.mxu0 0.0
      %459 = vmatprep.subr.mxu0 0.0
      %460 = vmatpush1.msra.mxu0 0.0
      %461 = vmatprep.subr.mxu0 0.0
      %462 = vmatpush1.msra.mxu0 0.0
      %463 = vmatprep.subr.mxu0 %v285
      %464 = vmatpush1.msra.mxu0 %v284
      %465 = vmatprep.subr.mxu0 %v283
      %466 = vmatpush1.msra.mxu0 %v282
      %467 = vmatprep.subr.mxu0 %v281
      %468 = vmatpush1.msra.mxu0 %v280
      %469 = vmatprep.subr.mxu0 %v279
      %470 = vmatpush1.msra.mxu0 %v278
      %471 = vmatprep.subr.mxu0 0.0
      %472 = vmatpush2.msra.mxu0 0.0
      %473 = vmatprep.subr.mxu0 0.0
      %474 = vmatpush2.msra.mxu0 0.0
      %475 = vmatprep.subr.mxu0 0.0
      %476 = vmatpush2.msra.mxu0 0.0
      %477 = vmatprep.subr.mxu0 0.0
      %478 = vmatpush2.msra.mxu0 0.0
      %479 = vmatprep.subr.mxu0 0.0
      %480 = vmatpush2.msra.mxu0 0.0
      %481 = vmatprep.subr.mxu0 0.0
      %482 = vmatpush2.msra.mxu0 0.0
      %483 = vmatprep.subr.mxu0 0.0
      %484 = vmatpush2.msra.mxu0 0.0
      %485 = vmatprep.subr.mxu0 0.0
      %486 = vmatpush2.msra.mxu0 0.0
      %487 = vmatprep.subr.mxu0 0.0
      %488 = vmatpush2.msra.mxu0 0.0
      %489 = vmatprep.subr.mxu0 0.0
      %490 = vmatpush2.msra.mxu0 0.0
      %491 = vmatprep.subr.mxu0 0.0
      %492 = vmatpush2.msra.mxu0 0.0
      %493 = vmatprep.subr.mxu0 0.0
      %494 = vmatpush2.msra.mxu0 0.0
      %495 = vmatprep.subr.mxu0 0.0
      %496 = vmatpush2.msra.mxu0 0.0
      %497 = vmatprep.subr.mxu0 0.0
      %498 = vmatpush2.msra.mxu0 0.0
      %499 = vmatprep.subr.mxu0 0.0
      %500 = vmatpush2.msra.mxu0 0.0
      %501 = vmatprep.subr.mxu0 0.0
      %502 = vmatpush2.msra.mxu0 0.0
      %503 = vmatprep.mubr.f32.mxu0 0.0
      %504 = vmatmul.mubr.f32.gmra.mxu0 %v380
      %v505 = vpop.f32.mrf.mxu0
      %v506 = vadd.f32 0.0, %v505
      %v507 = vpop.f32.mrf.mxu0
      %v508 = vadd.f32 0.0, %v507
      %509 = vmatprep.mubr.f32.mxu0 0.0
      %510 = vmatmul.mubr.f32.gmra.mxu0 %v383
      %v511 = vpop.f32.mrf.mxu0
      %v512 = vadd.f32 0.0, %v511
      %v513 = vpop.f32.mrf.mxu0
      %v514 = vadd.f32 0.0, %v513
      %515 = vmatprep.mubr.f32.mxu0 0.0
      %516 = vmatmul.mubr.f32.gmra.mxu0 %v386
      %v517 = vpop.f32.mrf.mxu0
      %v518 = vadd.f32 0.0, %v517
      %v519 = vpop.f32.mrf.mxu0
      %v520 = vadd.f32 0.0, %v519
      %521 = vmatprep.mubr.f32.mxu0 0.0
      %522 = vmatmul.mubr.f32.gmra.mxu0 %v389
      %v523 = vpop.f32.mrf.mxu0
      %v524 = vadd.f32 0.0, %v523
      %v525 = vpop.f32.mrf.mxu0
      %v526 = vadd.f32 0.0, %v525
      %527 = vmatprep.mubr.f32.mxu0 0.0
      %528 = vmatmul.mubr.f32.gmra.mxu0 %v392
      %v529 = vpop.f32.mrf.mxu0
      %v530 = vadd.f32 0.0, %v529
      %v531 = vpop.f32.mrf.mxu0
      %v532 = vadd.f32 0.0, %v531
      %533 = vmatprep.mubr.f32.mxu0 0.0
      %534 = vmatmul.mubr.f32.gmra.mxu0 %v395
      %v535 = vpop.f32.mrf.mxu0
      %v536 = vadd.f32 0.0, %v535
      %v537 = vpop.f32.mrf.mxu0
      %v538 = vadd.f32 0.0, %v537
      %539 = vmatprep.mubr.f32.mxu0 0.0
      %540 = vmatmul.mubr.f32.gmra.mxu0 %v398
      %v541 = vpop.f32.mrf.mxu0
      %v542 = vadd.f32 0.0, %v541
      %v543 = vpop.f32.mrf.mxu0
      %v544 = vadd.f32 0.0, %v543
      %545 = vmatprep.mubr.f32.mxu0 0.0
      %546 = vmatmul.mubr.f32.gmra.mxu0 %v401
      %v547 = vpop.f32.mrf.mxu0
      %v548 = vadd.f32 0.0, %v547
      %v549 = vpop.f32.mrf.mxu0
      %v550 = vadd.f32 0.0, %v549
      %551 = vmatprep.mubr.f32.mxu0 0.0
      %552 = vmatmul.mubr.f32.gmra.mxu0 %v404
      %v553 = vpop.f32.mrf.mxu0
      %v554 = vadd.f32 0.0, %v553
      %v555 = vpop.f32.mrf.mxu0
      %v556 = vadd.f32 0.0, %v555
      %557 = vmatprep.mubr.f32.mxu0 0.0
      %558 = vmatmul.mubr.f32.gmra.mxu0 %v407
      %v559 = vpop.f32.mrf.mxu0
      %v560 = vadd.f32 0.0, %v559
      %v561 = vpop.f32.mrf.mxu0
      %v562 = vadd.f32 0.0, %v561
      %563 = vmatprep.mubr.f32.mxu0 0.0
      %564 = vmatmul.mubr.f32.gmra.mxu0 %v410
      %v565 = vpop.f32.mrf.mxu0
      %v566 = vadd.f32 0.0, %v565
      %v567 = vpop.f32.mrf.mxu0
      %v568 = vadd.f32 0.0, %v567
      %569 = vmatprep.mubr.f32.mxu0 0.0
      %570 = vmatmul.mubr.f32.gmra.mxu0 %v413
      %v571 = vpop.f32.mrf.mxu0
      %v572 = vadd.f32 0.0, %v571
      %v573 = vpop.f32.mrf.mxu0
      %v574 = vadd.f32 0.0, %v573
      %575 = vmatprep.mubr.f32.mxu0 0.0
      %576 = vmatmul.mubr.f32.gmra.mxu0 %v416
      %v577 = vpop.f32.mrf.mxu0
      %v578 = vadd.f32 0.0, %v577
      %v579 = vpop.f32.mrf.mxu0
      %v580 = vadd.f32 0.0, %v579
      %581 = vmatprep.mubr.f32.mxu0 0.0
      %582 = vmatmul.mubr.f32.gmra.mxu0 %v419
      %v583 = vpop.f32.mrf.mxu0
      %v584 = vadd.f32 0.0, %v583
      %v585 = vpop.f32.mrf.mxu0
      %v586 = vadd.f32 0.0, %v585
      %587 = vmatprep.mubr.f32.mxu0 0.0
      %588 = vmatmul.mubr.f32.gmra.mxu0 %v422
      %v589 = vpop.f32.mrf.mxu0
      %v590 = vadd.f32 0.0, %v589
      %v591 = vpop.f32.mrf.mxu0
      %v592 = vadd.f32 0.0, %v591
      %593 = vmatprep.mubr.f32.mxu0 0.0
      %594 = vmatmul.mubr.f32.gmra.mxu0 %v425
      %v595 = vpop.f32.mrf.mxu0
      %v596 = vadd.f32 0.0, %v595
      %v597 = vpop.f32.mrf.mxu0
      %v598 = vadd.f32 0.0, %v597
      %599 = vmatprep.mubr.f32.mxu0 0.0
      %600 = vmatmul.mubr.f32.gmra.mxu0 %v428
      %v601 = vpop.f32.mrf.mxu0
      %v602 = vadd.f32 0.0, %v601
      %v603 = vpop.f32.mrf.mxu0
      %v604 = vadd.f32 0.0, %v603
      %605 = vmatprep.mubr.f32.mxu0 0.0
      %606 = vmatmul.mubr.f32.gmra.mxu0 %v431
      %v607 = vpop.f32.mrf.mxu0
      %v608 = vadd.f32 0.0, %v607
      %v609 = vpop.f32.mrf.mxu0
      %v610 = vadd.f32 0.0, %v609
      %611 = vmatprep.mubr.f32.mxu0 0.0
      %612 = vmatmul.mubr.f32.gmra.mxu0 %v434
      %v613 = vpop.f32.mrf.mxu0
      %v614 = vadd.f32 0.0, %v613
      %v615 = vpop.f32.mrf.mxu0
      %v616 = vadd.f32 0.0, %v615
      %617 = vmatprep.mubr.f32.mxu0 0.0
      %618 = vmatmul.mubr.f32.gmra.mxu0 %v437
      %v619 = vpop.f32.mrf.mxu0
      %v620 = vadd.f32 0.0, %v619
      %v621 = vpop.f32.mrf.mxu0
      %v622 = vadd.f32 0.0, %v621
      %623 = vdwg.mxu0
      %v624 = vmul.f32 %v506, %v350
      %v625 = vmul.f32 %v508, %v351
      %v626 = vmul.f32 %v512, %v352
      %v627 = vmul.f32 %v514, %v353
      %v628 = vmul.f32 %v518, %v354
      %v629 = vmul.f32 %v520, %v355
      %v630 = vmul.f32 %v524, %v356
      %v631 = vmul.f32 %v526, %v357
      %v632 = vmul.f32 %v530, %v350
      %v633 = vmul.f32 %v532, %v351
      %v634 = vmul.f32 %v536, %v352
      %v635 = vmul.f32 %v538, %v353
      %v636 = vmul.f32 %v542, %v354
      %v637 = vmul.f32 %v544, %v355
      %v638 = vmul.f32 %v548, %v356
      %v639 = vmul.f32 %v550, %v357
      %v640 = vmul.f32 %v554, %v350
      %v641 = vmul.f32 %v556, %v351
      %v642 = vmul.f32 %v560, %v352
      %v643 = vmul.f32 %v562, %v353
      %v644 = vmul.f32 %v566, %v354
      %v645 = vmul.f32 %v568, %v355
      %v646 = vmul.f32 %v572, %v356
      %v647 = vmul.f32 %v574, %v357
      %v648 = vmul.f32 %v578, %v350
      %v649 = vmul.f32 %v580, %v351
      %v650 = vmul.f32 %v584, %v352
      %v651 = vmul.f32 %v586, %v353
      %v652 = vmul.f32 %v590, %v354
      %v653 = vmul.f32 %v592, %v355
      %v654 = vmul.f32 %v596, %v356
      %v655 = vmul.f32 %v598, %v357
      %v656 = vmul.f32 %v602, %v350
      %v657 = vmul.f32 %v604, %v351
      %v658 = vmul.f32 %v608, %v352
      %v659 = vmul.f32 %v610, %v353
      %v660 = vmul.f32 %v614, %v354
      %v661 = vmul.f32 %v616, %v355
      %v662 = vmul.f32 %v620, %v356
      %v663 = vmul.f32 %v622, %v357
      %v664 = vadd.f32 %v624, %v626
      %v665 = vadd.f32 %v664, %v628
      %v666 = vadd.f32 %v665, %v630
      %v667 = vrot.slane %v666, 4
      %v668 = vadd.f32 %v666, %v667
      %v669 = vrot.slane %v668, 2
      %v670 = vadd.f32 %v668, %v669
      %v671 = vrot.slane %v670, 1
      %v672 = vadd.f32 %v670, %v671
      %v673 = vadd.f32 %v625, %v627
      %v674 = vadd.f32 %v673, %v629
      %v675 = vadd.f32 %v674, %v631
      %v676 = vrot.slane %v675, 4
      %v677 = vadd.f32 %v675, %v676
      %v678 = vrot.slane %v677, 2
      %v679 = vadd.f32 %v677, %v678
      %v680 = vrot.slane %v679, 1
      %v681 = vadd.f32 %v679, %v680
      %v682 = vadd.f32 %v632, %v634
      %v683 = vadd.f32 %v682, %v636
      %v684 = vadd.f32 %v683, %v638
      %v685 = vrot.slane %v684, 4
      %v686 = vadd.f32 %v684, %v685
      %v687 = vrot.slane %v686, 2
      %v688 = vadd.f32 %v686, %v687
      %v689 = vrot.slane %v688, 1
      %v690 = vadd.f32 %v688, %v689
      %v691 = vadd.f32 %v633, %v635
      %v692 = vadd.f32 %v691, %v637
      %v693 = vadd.f32 %v692, %v639
      %v694 = vrot.slane %v693, 4
      %v695 = vadd.f32 %v693, %v694
      %v696 = vrot.slane %v695, 2
      %v697 = vadd.f32 %v695, %v696
      %v698 = vrot.slane %v697, 1
      %v699 = vadd.f32 %v697, %v698
      %v700 = vadd.f32 %v640, %v642
      %v701 = vadd.f32 %v700, %v644
      %v702 = vadd.f32 %v701, %v646
      %v703 = vrot.slane %v702, 4
      %v704 = vadd.f32 %v702, %v703
      %v705 = vrot.slane %v704, 2
      %v706 = vadd.f32 %v704, %v705
      %v707 = vrot.slane %v706, 1
      %v708 = vadd.f32 %v706, %v707
      %v709 = vadd.f32 %v641, %v643
      %v710 = vadd.f32 %v709, %v645
      %v711 = vadd.f32 %v710, %v647
      %v712 = vrot.slane %v711, 4
      %v713 = vadd.f32 %v711, %v712
      %v714 = vrot.slane %v713, 2
      %v715 = vadd.f32 %v713, %v714
      %v716 = vrot.slane %v715, 1
      %v717 = vadd.f32 %v715, %v716
      %v718 = vadd.f32 %v648, %v650
      %v719 = vadd.f32 %v718, %v652
      %v720 = vadd.f32 %v719, %v654
      %v721 = vrot.slane %v720, 4
      %v722 = vadd.f32 %v720, %v721
      %v723 = vrot.slane %v722, 2
      %v724 = vadd.f32 %v722, %v723
      %v725 = vrot.slane %v724, 1
      %v726 = vadd.f32 %v724, %v725
      %v727 = vadd.f32 %v649, %v651
      %v728 = vadd.f32 %v727, %v653
      %v729 = vadd.f32 %v728, %v655
      %v730 = vrot.slane %v729, 4
      %v731 = vadd.f32 %v729, %v730
      %v732 = vrot.slane %v731, 2
      %v733 = vadd.f32 %v731, %v732
      %v734 = vrot.slane %v733, 1
      %v735 = vadd.f32 %v733, %v734
      %v736 = vadd.f32 %v656, %v658
      %v737 = vadd.f32 %v736, %v660
      %v738 = vadd.f32 %v737, %v662
      %v739 = vrot.slane %v738, 4
      %v740 = vadd.f32 %v738, %v739
      %v741 = vrot.slane %v740, 2
      %v742 = vadd.f32 %v740, %v741
      %v743 = vrot.slane %v742, 1
      %v744 = vadd.f32 %v742, %v743
      %v745 = vadd.f32 %v657, %v659
      %v746 = vadd.f32 %v745, %v661
      %v747 = vadd.f32 %v746, %v663
      %v748 = vrot.slane %v747, 4
      %v749 = vadd.f32 %v747, %v748
      %v750 = vrot.slane %v749, 2
      %v751 = vadd.f32 %v749, %v750
      %v752 = vrot.slane %v751, 1
      %v753 = vadd.f32 %v751, %v752
      %vm764 = vcmask 1041409
      %v765 = vsel %vm764, %v690, %v672
      %vm766 = vcmask 1042434
      %v767 = vsel %vm766, %v708, %v765
      %vm768 = vcmask 1043459
      %v769 = vsel %vm768, %v726, %v767
      %vm770 = vcmask 1044484
      %v771 = vsel %vm770, %v744, %v769
      %v772 = vsel %vm764, %v699, %v681
      %v773 = vsel %vm766, %v717, %v772
      %v774 = vsel %vm768, %v735, %v773
      %v775 = vsel %vm770, %v753, %v774
      %778 = vst [vmem:[%s201] sm:$0x1f] %v771
      %779 = vst [vmem:[%s201 + $0x8] sm:$0x1f] %v775
      %s780 = smul.u32 2, %s18
      %p781 = scmp.lt.s32.totalorder %s17, 1
      %s782 = scalar_select %p781, %s17, 1
      %p783 = scmp.lt.s32.totalorder %s780, 1
      %s784 = scalar_select %p783, %s780, 1
      %s785 = smul.addr %s782, 2
      %s786 = sadd.s32 %s784, %s785
      %s787 = smul.addr %s786, 8
      %s788 = scalar_lea.vmem %s2, %s787
      // Predicated region
      $region29: #{moco_cycle_forward.13} parent=27 // pred_check
        %p789 = pneg %p99
      $region30: #{moco_cycle_forward.13} parent=27 // pred_check_branch
        %791 = sbr.rel (%p789) target = $region32
      $region31: #{moco_cycle_forward.13} parent=27 // pred_region
        %s792 = smul.u32 2, %s18
      $region32: #{moco_cycle_forward.13} parent=27 // pred_fallthru
        _
    $region28: #{moco_cycle_forward.13} parent=5 // pred_fallthru
      _
    %p793 = scmp.le.s32.totalorder 2, %s8
    // Predicated region
    $region33: #{moco_cycle_forward.13} parent=5 // pred_check
      %p794 = pneg %p793
    $region34: #{moco_cycle_forward.13} parent=5 // pred_check_branch
      %796 = sbr.rel (%p794) target = $region36
    $region35: #{moco_cycle_forward.13} parent=5 // pred_region
      %s797 = ssub.s32 %s8, 2
      // Predicated region
      $region37: #{moco_cycle_forward.13} parent=35 // pred_check
        %p798 = pneg %p105
      $region38: #{moco_cycle_forward.13} parent=35 // pred_check_branch
        %800 = sbr.rel (%p798) target = $region40
      $region39: #{moco_cycle_forward.13} parent=35 // pred_region
        %s801 = smul.u32 2, %s20
        %p802 = scmp.lt.s32.totalorder %s19, 1
        %s803 = scalar_select %p802, %s19, 1
        %p804 = scmp.lt.s32.totalorder %s801, 1
        %s805 = scalar_select %p804, %s801, 1
        %s806 = smul.addr %s803, 2
        %s807 = sadd.s32 %s805, %s806
        %s808 = smul.addr %s807, 8
        %s809 = scalar_lea.vmem %s2, %s808
      $region40: #{moco_cycle_forward.13} parent=35 // pred_fallthru
        _
    $region36: #{moco_cycle_forward.13} parent=5 // pred_fallthru
      _
  $region6: #{moco_cycle_forward.13} parent=0 // loop_footer
    %s12 = sadd.s32 1, %s8
  $region7: #{moco_cycle_forward.13} parent=0 // loop_footer_branch
    %7 = sbr.rel target = $region3
  $region8: #{moco_cycle_forward.13} parent=0 // loop_exit
    _

</llo_original>
